<compile_context>
chip_gen: v6e
topology: v6e:2x2x1
jax: 0.10.0
libtpu: 0.0.40
codegen_flags: <defaults>
</compile_context>

<pallas_src>
import functools

import jax
import jax.numpy as jnp
from jax import lax
from jax.experimental import pallas as pl
from jax.experimental.pallas import tpu as pltpu


def _swish(x):
    return x * jax.nn.sigmoid(x)


def _fold_bn(gamma, beta, mean, var, eps):
    scale = gamma / jnp.sqrt(var + eps)
    return scale, beta - mean * scale


def _pick_pixel_tile(hw, max_tile=2048):
    """Largest multiple of 128 dividing hw (<= max_tile); hw itself if none."""
    if hw % 128 != 0:
        return hw
    best = 128
    t = 128
    while t <= min(hw, max_tile):
        if hw % t == 0:
            best = t
        t += 128
    return best


# -------- kernel 1: expand 1x1 conv (BN scale folded into W) + bias + swish ----
def expand_kernel(x_ref, w_ref, b_ref, o_ref):
    # x: (1, Cin, T) f32 NCHW pixel tile, w: (Cin, Cexp) bf16, b: (1, Cexp) f32
    xt = x_ref[0].astype(jnp.bfloat16)                        # (Cin, T)
    y = lax.dot_general(xt, w_ref[...],
                        dimension_numbers=(((0,), (0,)), ((), ())),
                        preferred_element_type=jnp.float32)    # (T, Cexp)
    y = y + b_ref[...]
    o_ref[0] = _swish(y).astype(o_ref.dtype)                  # bf16 out


# -------- kernel 2: depthwise KxK conv + BN bias + swish + fused avg-pool ------
def dwconv_kernel(x_ref, w_ref, b_ref, o_ref, pool_ref, *, K, H, W, pad):
    # x: (1, H, W, C) bf16, w: (K, K, C) f32 (BN scale folded), b: (1, C) f32
    x = x_ref[0].astype(jnp.float32)                          # (H, W, C)
    C = x.shape[-1]
    if pad > 0:   # pad in VMEM (no HBM round trip for the padded tensor)
        zr = jnp.zeros((pad, W, C), jnp.float32)
        xpv = jnp.concatenate([zr, x, zr], axis=0)            # (H+2p, W, C)
        zc = jnp.zeros((H + 2 * pad, pad, C), jnp.float32)
        xp = jnp.concatenate([zc, xpv, zc], axis=1)           # (H+2p, W+2p, C)
    else:
        xp = x
    acc = jnp.zeros((H, W, C), jnp.float32)
    for dy in range(K):                                       # unrolled at trace time
        for dx in range(K):
            acc = acc + xp[dy:dy + H, dx:dx + W, :] * w_ref[dy, dx, :]
    h = _swish(acc + b_ref[...])                              # f32 epilogue
    o_ref[0] = h.astype(o_ref.dtype)                          # bf16 activation out
    # fused global average pool for the SE path
    s = jnp.sum(h, axis=0)                                    # (W, C)
    s = jnp.sum(s, axis=0, keepdims=True)                     # (1, C)
    pool_ref[0] = s * (1.0 / (H * W))


# -------- kernel 3: SE-scaled project 1x1 conv + BN bias + residual ------------
def project_kernel(h_ref, se_ref, w_ref, b_ref, *rest, add_residual):
    # h: (1, T, Cexp) bf16, se: (1, 1, Cexp) f32, w: (Cout, Cexp) bf16 (BN folded),
    # b: (Cout, 1) f32, [res: (1, Cout, T) f32], out: (1, Cout, T) f32 (lane-dense)
    if add_residual:
        res_ref, o_ref = rest
    else:
        (o_ref,) = rest
    # Fold the per-channel SE scale into the (small) projection weight instead
    # of rescaling the (large) activation tile:  (W*se) @ h^T == W @ (h*se)^T.
    w_se = (w_ref[...].astype(jnp.float32) * se_ref[0]).astype(jnp.bfloat16)  # (Cout, Cexp)
    y = lax.dot_general(w_se, h_ref[0],
                        dimension_numbers=(((1,), (1,)), ((), ())),
                        preferred_element_type=jnp.float32)    # (Cout, T)
    y = y + b_ref[...]
    if add_residual:
        y = y + res_ref[0]
    o_ref[0] = y


# ------------------------------------ wrapper ----------------------------------
def mbconv_block(x_nchw, params, *, expansion, kernel_size, stride, bn_eps=1e-3):
    assert stride == 1, "TODO(synk): stride=2 depthwise not implemented"
    N, Cin, H, W = x_nchw.shape
    K = kernel_size
    pad = (K - 1) // 2
    ch = expansion * Cin
    Cout = params["w_proj"].shape[1]
    HW = H * W
    id_skip = (stride == 1 and Cin == Cout)

    x = x_nchw.astype(jnp.float32).reshape(N, Cin, HW)        # NCHW view (free)
    T = _pick_pixel_tile(HW)
    n_t = HW // T

    # fold eval-mode BN scales into the conv weights (bias kept separate)
    s1, b1 = _fold_bn(*params["bn1"], eps=bn_eps)
    w_dw = (params["w_dw"] * s1).astype(jnp.float32)          # (K, K, ch)
    s2, b2 = _fold_bn(*params["bn2"], eps=bn_eps)
    w_proj_t = (params["w_proj"] * s2).T.astype(jnp.bfloat16)  # (Cout, ch)
    b2_col = b2.reshape(Cout, 1).astype(jnp.float32)

    # ---- expand 1x1 conv + bn0 + swish (reads NCHW tiles, writes NHWC bf16) ----
    if expansion != 1:
        s0, b0 = _fold_bn(*params["bn0"], eps=bn_eps)
        w_exp = (params["w_expand"] * s0).astype(jnp.bfloat16)   # (Cin, ch)
        xe = pl.pallas_call(
            expand_kernel,
            grid=(N, n_t),
            in_specs=[
                pl.BlockSpec((1, Cin, T), lambda n, t: (n, 0, t)),
                pl.BlockSpec((Cin, ch), lambda n, t: (0, 0)),
                pl.BlockSpec((1, ch), lambda n, t: (0, 0)),
            ],
            out_specs=pl.BlockSpec((1, T, ch), lambda n, t: (n, t, 0)),
            out_shape=jax.ShapeDtypeStruct((N, HW, ch), jnp.bfloat16),
            compiler_params=pltpu.CompilerParams(
                dimension_semantics=("parallel", "parallel")),
        )(x, w_exp, b0.reshape(1, ch).astype(jnp.float32))
        xe4 = xe.reshape(N, H, W, ch)                          # HBM reshape: metadata only
    else:
        # expansion==1: no expand conv; one-time layout change in XLA
        xe4 = jnp.transpose(x_nchw.astype(jnp.float32), (0, 2, 3, 1)).astype(jnp.bfloat16)

    # ---- depthwise conv + bn1 + swish, with fused per-image average pool -------
    h, pooled = pl.pallas_call(
        functools.partial(dwconv_kernel, K=K, H=H, W=W, pad=pad),
        grid=(N,),
        in_specs=[
            pl.BlockSpec((1, H, W, ch), lambda n: (n, 0, 0, 0)),
            pl.BlockSpec((K, K, ch), lambda n: (0, 0, 0)),
            pl.BlockSpec((1, ch), lambda n: (0, 0)),
        ],
        out_specs=[
            pl.BlockSpec((1, H, W, ch), lambda n: (n, 0, 0, 0)),
            pl.BlockSpec((1, 1, ch), lambda n: (n, 0, 0)),
        ],
        out_shape=(
            jax.ShapeDtypeStruct((N, H, W, ch), jnp.bfloat16),
            jax.ShapeDtypeStruct((N, 1, ch), jnp.float32),
        ),
        compiler_params=pltpu.CompilerParams(dimension_semantics=("parallel",)),
    )(xe4, w_dw, b1.reshape(1, ch).astype(jnp.float32))

    # ---- squeeze-excite MLP: tiny, batched over N in plain JAX -----------------
    p2 = pooled.reshape(N, ch)
    se = _swish(p2 @ params["w_se_red"] + params["b_se_red"])       # (N, Cr)
    se = jax.nn.sigmoid(se @ params["w_se_exp"] + params["b_se_exp"])  # (N, ch)
    se = se.reshape(N, 1, ch).astype(jnp.float32)

    # ---- SE-scaled project 1x1 conv + bn2 + residual (writes NCHW) -------------
    h2 = h.reshape(N, HW, ch)                                  # metadata only
    proj_in_specs = [
        pl.BlockSpec((1, T, ch), lambda n, t: (n, t, 0)),
        pl.BlockSpec((1, 1, ch), lambda n, t: (n, 0, 0)),
        pl.BlockSpec((Cout, ch), lambda n, t: (0, 0)),
        pl.BlockSpec((Cout, 1), lambda n, t: (0, 0)),
    ]
    proj_args = [h2, se, w_proj_t, b2_col]
    if id_skip:
        proj_in_specs.append(pl.BlockSpec((1, Cout, T), lambda n, t: (n, 0, t)))
        proj_args.append(x)       # residual in NCHW layout (Cin == Cout)
    y = pl.pallas_call(
        functools.partial(project_kernel, add_residual=id_skip),
        grid=(N, n_t),
        in_specs=proj_in_specs,
        out_specs=pl.BlockSpec((1, Cout, T), lambda n, t: (n, 0, t)),
        out_shape=jax.ShapeDtypeStruct((N, Cout, HW), jnp.float32),
        compiler_params=pltpu.CompilerParams(
            dimension_semantics=("parallel", "parallel")),
    )(*proj_args)
    return y.reshape(N, Cout, H, W)                            # already NCHW


# ------------------------------- plain-JAX reference ---------------------------
def mbconv_reference(x_nchw, params, *, expansion, kernel_size, stride, bn_eps=1e-3):
    N, Cin, H, W = x_nchw.shape
    x = jnp.transpose(x_nchw, (0, 2, 3, 1)).astype(jnp.float32)
    ch = expansion * Cin
    K = kernel_size
    if expansion != 1:
        s0, b0 = _fold_bn(*params["bn0"], eps=bn_eps)
        xe = _swish(jnp.einsum("nhwc,cd->nhwd", x, params["w_expand"]) * s0 + b0)
    else:
        xe = x
    dw = params["w_dw"].reshape(K, K, 1, ch)
    conv = lax.conv_general_dilated(
        xe, dw, window_strides=(1, 1), padding="SAME",
        dimension_numbers=("NHWC", "HWIO", "NHWC"), feature_group_count=ch)
    s1, b1 = _fold_bn(*params["bn1"], eps=bn_eps)
    h = _swish(conv * s1 + b1)
    pooled = jnp.mean(h, axis=(1, 2))
    se = _swish(pooled @ params["w_se_red"] + params["b_se_red"])
    se = jax.nn.sigmoid(se @ params["w_se_exp"] + params["b_se_exp"])
    h = h * se[:, None, None, :]
    s2, b2 = _fold_bn(*params["bn2"], eps=bn_eps)
    y = jnp.einsum("nhwc,cd->nhwd", h, params["w_proj"]) * s2 + b2
    if stride == 1 and Cin == params["w_proj"].shape[1]:
        y = y + x
    return jnp.transpose(y, (0, 3, 1, 2))


if __name__ == "__main__":
    # id_skip configuration: in_ch == out_ch, stride 1
    N, Cin, H, W = 2, 8, 16, 16
    expansion, K, stride = 4, 3, 1
    Cout = Cin
    ch = expansion * Cin
    Cr = Cin // 4

    key = jax.random.PRNGKey(0)
    ks = jax.random.split(key, 12)
    nrm = lambda k, shape, s=0.1: s * jax.random.normal(k, shape, jnp.float32)

    def make_bn(k, c):
        k1, k2, k3, k4 = jax.random.split(k, 4)
        gamma = 1.0 + nrm(k1, (c,))
        beta = nrm(k2, (c,))
        mean = nrm(k3, (c,))
        var = jnp.abs(nrm(k4, (c,))) + 1.0
        return (gamma, beta, mean, var)

    params = {
        "w_expand": nrm(ks[0], (Cin, ch)),
        "bn0": make_bn(ks[1], ch),
        "w_dw": nrm(ks[2], (K, K, ch)),
        "bn1": make_bn(ks[3], ch),
        "w_se_red": nrm(ks[4], (ch, Cr)),
        "b_se_red": nrm(ks[5], (1, Cr)),
        "w_se_exp": nrm(ks[6], (Cr, ch)),
        "b_se_exp": nrm(ks[7], (1, ch)),
        "w_proj": nrm(ks[8], (ch, Cout)),
        "bn2": make_bn(ks[9], Cout),
    }

    x = jax.random.normal(ks[10], (N, Cin, H, W), jnp.float32)

    run = jax.jit(functools.partial(
        mbconv_block, expansion=expansion, kernel_size=K, stride=stride))
    out = jax.block_until_ready(run(x, params))

    ref = mbconv_reference(x, params, expansion=expansion, kernel_size=K, stride=stride)
    assert out.shape == (N, Cout, H, W)
    # bf16 matmul operands / bf16 intermediates -> slightly looser tolerance
    assert jnp.allclose(out, ref, atol=3e-2, rtol=3e-2), \
        float(jnp.max(jnp.abs(out - ref)))

    print("KERNEL_OK")
</pallas_src>

<mosaic_0001>
module attributes {stable_mosaic.version = 11 : i64} {
  func.func @project_kernel(%arg0: i32, %arg1: i32, %arg2: memref<1x256x32xbf16, #tpu.memory_space<vmem>>, %arg3: memref<1x1x32xf32, #tpu.memory_space<vmem>>, %arg4: memref<8x32xbf16, #tpu.memory_space<vmem>>, %arg5: memref<8x1xf32, #tpu.memory_space<vmem>>, %arg6: memref<1x8x256xf32, #tpu.memory_space<vmem>>, %arg7: memref<1x8x256xf32, #tpu.memory_space<vmem>>) attributes {dimension_semantics = [#tpu.dimension_semantics<parallel>, #tpu.dimension_semantics<parallel>], iteration_bounds = array<i64: 2, 1>, scalar_prefetch = 0 : i64, scratch_operands = 0 : i64, tpu.core_type = #tpu.core_type<tc>, window_params = [{transform_indices = @transform_0, window_bounds = array<i64: 1, 256, 32>}, {transform_indices = @transform_1, window_bounds = array<i64: 1, 1, 32>}, {pipeline_mode = #tpu.pipeline_mode<synchronous>, transform_indices = @transform_2, window_bounds = array<i64: 8, 32>}, {pipeline_mode = #tpu.pipeline_mode<synchronous>, transform_indices = @transform_3, window_bounds = array<i64: 8, 1>}, {transform_indices = @transform_4, window_bounds = array<i64: 1, 8, 256>}, {transform_indices = @transform_5, window_bounds = array<i64: 1, 8, 256>}]} {
    %c0 = arith.constant 0 : index
    %c0_0 = arith.constant 0 : index
    %0 = vector.load %arg4[%c0, %c0_0] : memref<8x32xbf16, #tpu.memory_space<vmem>>, vector<8x32xbf16>
    %1 = arith.extf %0 : vector<8x32xbf16> to vector<8x32xf32>
    %c0_1 = arith.constant 0 : index
    %c0_2 = arith.constant 0 : index
    %c0_3 = arith.constant 0 : index
    %2 = vector.load %arg3[%c0_1, %c0_2, %c0_3] : memref<1x1x32xf32, #tpu.memory_space<vmem>>, vector<1x1x32xf32>
    %3 = vector.shape_cast %2 : vector<1x1x32xf32> to vector<1x32xf32>
    %4 = vector.broadcast %3 : vector<1x32xf32> to vector<8x32xf32>
    %5 = arith.mulf %1, %4 : vector<8x32xf32>
    %6 = arith.truncf %5 : vector<8x32xf32> to vector<8x32xbf16>
    %c0_4 = arith.constant 0 : index
    %c0_5 = arith.constant 0 : index
    %c0_6 = arith.constant 0 : index
    %7 = vector.load %arg2[%c0_4, %c0_5, %c0_6] : memref<1x256x32xbf16, #tpu.memory_space<vmem>>, vector<1x256x32xbf16>
    %8 = vector.shape_cast %7 : vector<1x256x32xbf16> to vector<256x32xbf16>
    %cst = arith.constant dense<0.000000e+00> : vector<8x256xf32>
    %9 = tpu.matmul %6, %8, %cst {dimension_numbers = #tpu.dot_dimension_numbers<[1], [1], [0], [0], [0, 0, 1, 0], [], []>} : vector<8x32xbf16>, vector<256x32xbf16>, vector<8x256xf32> -> vector<8x256xf32>
    %c0_7 = arith.constant 0 : index
    %c0_8 = arith.constant 0 : index
    %10 = vector.load %arg5[%c0_7, %c0_8] : memref<8x1xf32, #tpu.memory_space<vmem>>, vector<8x1xf32>
    %11 = vector.broadcast %10 : vector<8x1xf32> to vector<8x256xf32>
    %12 = arith.addf %9, %11 : vector<8x256xf32>
    %c0_9 = arith.constant 0 : index
    %c0_10 = arith.constant 0 : index
    %c0_11 = arith.constant 0 : index
    %13 = vector.load %arg6[%c0_9, %c0_10, %c0_11] : memref<1x8x256xf32, #tpu.memory_space<vmem>>, vector<1x8x256xf32>
    %14 = vector.shape_cast %13 : vector<1x8x256xf32> to vector<8x256xf32>
    %15 = arith.addf %12, %14 : vector<8x256xf32>
    %c0_12 = arith.constant 0 : index
    %c0_13 = arith.constant 0 : index
    %c0_14 = arith.constant 0 : index
    %16 = vector.load %arg7[%c0_12, %c0_13, %c0_14] : memref<1x8x256xf32, #tpu.memory_space<vmem>>, vector<1x8x256xf32>
    %17 = vector.shape_cast %16 : vector<1x8x256xf32> to vector<8x256xf32>
    %18 = vector.shape_cast %15 : vector<8x256xf32> to vector<1x8x256xf32>
    tpu.vector_store %arg7[%c0_12, %c0_13, %c0_14], %18 {strides = array<i32>} : memref<1x8x256xf32, #tpu.memory_space<vmem>>, vector<1x8x256xf32>,
    return
  }
  func.func @transform_0(%arg0: i32, %arg1: i32) -> (i32, i32, i32) {
    %c0_i32 = arith.constant 0 : i32
    %c0_i32_0 = arith.constant 0 : i32
    return %arg0, %arg1, %c0_i32 : i32, i32, i32
  }
  func.func @transform_1(%arg0: i32, %arg1: i32) -> (i32, i32, i32) {
    %c0_i32 = arith.constant 0 : i32
    %c0_i32_0 = arith.constant 0 : i32
    %c0_i32_1 = arith.constant 0 : i32
    return %arg0, %c0_i32, %c0_i32_0 : i32, i32, i32
  }
  func.func @transform_2(%arg0: i32, %arg1: i32) -> (i32, i32) {
    %c0_i32 = arith.constant 0 : i32
    %c0_i32_0 = arith.constant 0 : i32
    %c0_i32_1 = arith.constant 0 : i32
    return %c0_i32, %c0_i32_0 : i32, i32
  }
  func.func @transform_3(%arg0: i32, %arg1: i32) -> (i32, i32) {
    %c0_i32 = arith.constant 0 : i32
    %c0_i32_0 = arith.constant 0 : i32
    %c0_i32_1 = arith.constant 0 : i32
    return %c0_i32, %c0_i32_0 : i32, i32
  }
  func.func @transform_4(%arg0: i32, %arg1: i32) -> (i32, i32, i32) {
    %c0_i32 = arith.constant 0 : i32
    %c0_i32_0 = arith.constant 0 : i32
    return %arg0, %c0_i32, %arg1 : i32, i32, i32
  }
  func.func @transform_5(%arg0: i32, %arg1: i32) -> (i32, i32, i32) {
    %c0_i32 = arith.constant 0 : i32
    %c0_i32_0 = arith.constant 0 : i32
    return %arg0, %c0_i32, %arg1 : i32, i32, i32
  }
}

module attributes {stable_mosaic.version = 11 : i64} {
  func.func @expand_kernel(%arg0: i32, %arg1: i32, %arg2: memref<1x8x256xf32, #tpu.memory_space<vmem>>, %arg3: memref<8x32xbf16, #tpu.memory_space<vmem>>, %arg4: memref<1x32xf32, #tpu.memory_space<vmem>>, %arg5: memref<1x256x32xbf16, #tpu.memory_space<vmem>>) attributes {dimension_semantics = [#tpu.dimension_semantics<parallel>, #tpu.dimension_semantics<parallel>], iteration_bounds = array<i64: 2, 1>, scalar_prefetch = 0 : i64, scratch_operands = 0 : i64, tpu.core_type = #tpu.core_type<tc>, window_params = [{transform_indices = @transform_0, window_bounds = array<i64: 1, 8, 256>}, {pipeline_mode = #tpu.pipeline_mode<synchronous>, transform_indices = @transform_1, window_bounds = array<i64: 8, 32>}, {pipeline_mode = #tpu.pipeline_mode<synchronous>, transform_indices = @transform_2, window_bounds = array<i64: 1, 32>}, {transform_indices = @transform_3, window_bounds = array<i64: 1, 256, 32>}]} {
    %c0 = arith.constant 0 : index
    %c0_0 = arith.constant 0 : index
    %c0_1 = arith.constant 0 : index
    %0 = vector.load %arg2[%c0, %c0_0, %c0_1] : memref<1x8x256xf32, #tpu.memory_space<vmem>>, vector<1x8x256xf32>
    %1 = vector.shape_cast %0 : vector<1x8x256xf32> to vector<8x256xf32>
    %2 = arith.truncf %1 : vector<8x256xf32> to vector<8x256xbf16>
    %c0_2 = arith.constant 0 : index
    %c0_3 = arith.constant 0 : index
    %3 = vector.load %arg3[%c0_2, %c0_3] : memref<8x32xbf16, #tpu.memory_space<vmem>>, vector<8x32xbf16>
    %cst = arith.constant dense<0.000000e+00> : vector<256x32xf32>
    %4 = tpu.matmul %2, %3, %cst {dimension_numbers = #tpu.dot_dimension_numbers<[0], [0], [1], [1], [0, 1, 1, 1], [], []>} : vector<8x256xbf16>, vector<8x32xbf16>, vector<256x32xf32> -> vector<256x32xf32>
    %c0_4 = arith.constant 0 : index
    %c0_5 = arith.constant 0 : index
    %5 = vector.load %arg4[%c0_4, %c0_5] : memref<1x32xf32, #tpu.memory_space<vmem>>, vector<1x32xf32>
    %6 = vector.broadcast %5 : vector<1x32xf32> to vector<256x32xf32>
    %7 = arith.addf %4, %6 : vector<256x32xf32>
    %8 = arith.negf %7 : vector<256x32xf32>
    %9 = math.exp %8 : vector<256x32xf32>
    %cst_6 = arith.constant 1.000000e+00 : f32
    %10 = vector.broadcast %cst_6 : f32 to vector<256x32xf32>
    %11 = arith.addf %10, %9 : vector<256x32xf32>
    %12 = arith.divf %10, %11 : vector<256x32xf32>
    %13 = arith.mulf %7, %12 : vector<256x32xf32>
    %14 = arith.truncf %13 : vector<256x32xf32> to vector<256x32xbf16>
    %c0_7 = arith.constant 0 : index
    %c0_8 = arith.constant 0 : index
    %c0_9 = arith.constant 0 : index
    %15 = vector.load %arg5[%c0_7, %c0_8, %c0_9] : memref<1x256x32xbf16, #tpu.memory_space<vmem>>, vector<1x256x32xbf16>
    %16 = vector.shape_cast %15 : vector<1x256x32xbf16> to vector<256x32xbf16>
    %17 = vector.shape_cast %14 : vector<256x32xbf16> to vector<1x256x32xbf16>
    tpu.vector_store %arg5[%c0_7, %c0_8, %c0_9], %17 {strides = array<i32>} : memref<1x256x32xbf16, #tpu.memory_space<vmem>>, vector<1x256x32xbf16>,
    return
  }
  func.func @transform_0(%arg0: i32, %arg1: i32) -> (i32, i32, i32) {
    %c0_i32 = arith.constant 0 : i32
    %c0_i32_0 = arith.constant 0 : i32
    return %arg0, %c0_i32, %arg1 : i32, i32, i32
  }
  func.func @transform_1(%arg0: i32, %arg1: i32) -> (i32, i32) {
    %c0_i32 = arith.constant 0 : i32
    %c0_i32_0 = arith.constant 0 : i32
    %c0_i32_1 = arith.constant 0 : i32
    return %c0_i32, %c0_i32_0 : i32, i32
  }
  func.func @transform_2(%arg0: i32, %arg1: i32) -> (i32, i32) {
    %c0_i32 = arith.constant 0 : i32
    %c0_i32_0 = arith.constant 0 : i32
    %c0_i32_1 = arith.constant 0 : i32
    return %c0_i32, %c0_i32_0 : i32, i32
  }
  func.func @transform_3(%arg0: i32, %arg1: i32) -> (i32, i32, i32) {
    %c0_i32 = arith.constant 0 : i32
    %c0_i32_0 = arith.constant 0 : i32
    return %arg0, %arg1, %c0_i32 : i32, i32, i32
  }
}

module attributes {stable_mosaic.version = 11 : i64} {
  func.func @dwconv_kernel(%arg0: i32, %arg1: memref<1x16x16x32xbf16, #tpu.memory_space<vmem>>, %arg2: memref<3x3x32xf32, #tpu.memory_space<vmem>>, %arg3: memref<1x32xf32, #tpu.memory_space<vmem>>, %arg4: memref<1x16x16x32xbf16, #tpu.memory_space<vmem>>, %arg5: memref<1x1x32xf32, #tpu.memory_space<vmem>>) attributes {dimension_semantics = [#tpu.dimension_semantics<parallel>], iteration_bounds = array<i64: 2>, scalar_prefetch = 0 : i64, scratch_operands = 0 : i64, tpu.core_type = #tpu.core_type<tc>, window_params = [{transform_indices = @transform_0, window_bounds = array<i64: 1, 16, 16, 32>}, {pipeline_mode = #tpu.pipeline_mode<synchronous>, transform_indices = @transform_1, window_bounds = array<i64: 3, 3, 32>}, {pipeline_mode = #tpu.pipeline_mode<synchronous>, transform_indices = @transform_2, window_bounds = array<i64: 1, 32>}, {transform_indices = @transform_3, window_bounds = array<i64: 1, 16, 16, 32>}, {transform_indices = @transform_4, window_bounds = array<i64: 1, 1, 32>}]} {
    %c0 = arith.constant 0 : index
    %c0_0 = arith.constant 0 : index
    %c0_1 = arith.constant 0 : index
    %c0_2 = arith.constant 0 : index
    %0 = vector.load %arg1[%c0, %c0_0, %c0_1, %c0_2] : memref<1x16x16x32xbf16, #tpu.memory_space<vmem>>, vector<1x16x16x32xbf16>
    %1 = vector.shape_cast %0 : vector<1x16x16x32xbf16> to vector<16x16x32xbf16>
    %2 = arith.extf %1 : vector<16x16x32xbf16> to vector<16x16x32xf32>
    %cst = arith.constant 0.000000e+00 : f32
    %3 = vector.broadcast %cst : f32 to vector<1x16x32xf32>
    %4 = tpu.concatenate %3, %2, %3 in 0 : vector<1x16x32xf32>, vector<16x16x32xf32>, vector<1x16x32xf32> -> vector<18x16x32xf32>
    %cst_3 = arith.constant 0.000000e+00 : f32
    %5 = vector.broadcast %cst_3 : f32 to vector<18x1x32xf32>
    %6 = tpu.concatenate %5, %4, %5 in 1 : vector<18x1x32xf32>, vector<18x16x32xf32>, vector<18x1x32xf32> -> vector<18x18x32xf32>
    %cst_4 = arith.constant 0.000000e+00 : f32
    %7 = vector.broadcast %cst_4 : f32 to vector<16x16x32xf32>
    %8 = vector.extract_strided_slice %6 {offsets = [0, 0, 0], sizes = [16, 16, 32], strides = [1, 1, 1]} : vector<18x18x32xf32> to vector<16x16x32xf32>
    %c0_5 = arith.constant 0 : index
    %c0_6 = arith.constant 0 : index
    %c0_7 = arith.constant 0 : index
    %9 = vector.load %arg2[%c0_5, %c0_6, %c0_7] : memref<3x3x32xf32, #tpu.memory_space<vmem>>, vector<1x1x32xf32>
    %10 = vector.shape_cast %9 : vector<1x1x32xf32> to vector<32xf32>
    %11 = vector.shape_cast %10 : vector<32xf32> to vector<1x1x32xf32>
    %12 = vector.broadcast %11 : vector<1x1x32xf32> to vector<16x16x32xf32>
    %13 = arith.mulf %8, %12 : vector<16x16x32xf32>
    %14 = arith.addf %7, %13 : vector<16x16x32xf32>
    %15 = vector.extract_strided_slice %6 {offsets = [0, 1, 0], sizes = [16, 16, 32], strides = [1, 1, 1]} : vector<18x18x32xf32> to vector<16x16x32xf32>
    %c0_8 = arith.constant 0 : index
    %c1 = arith.constant 1 : index
    %c0_9 = arith.constant 0 : index
    %16 = vector.load %arg2[%c0_8, %c1, %c0_9] : memref<3x3x32xf32, #tpu.memory_space<vmem>>, vector<1x1x32xf32>
    %17 = vector.shape_cast %16 : vector<1x1x32xf32> to vector<32xf32>
    %18 = vector.shape_cast %17 : vector<32xf32> to vector<1x1x32xf32>
    %19 = vector.broadcast %18 : vector<1x1x32xf32> to vector<16x16x32xf32>
    %20 = arith.mulf %15, %19 : vector<16x16x32xf32>
    %21 = arith.addf %14, %20 : vector<16x16x32xf32>
    %22 = vector.extract_strided_slice %6 {offsets = [0, 2, 0], sizes = [16, 16, 32], strides = [1, 1, 1]} : vector<18x18x32xf32> to vector<16x16x32xf32>
    %c0_10 = arith.constant 0 : index
    %c2 = arith.constant 2 : index
    %c0_11 = arith.constant 0 : index
    %23 = vector.load %arg2[%c0_10, %c2, %c0_11] : memref<3x3x32xf32, #tpu.memory_space<vmem>>, vector<1x1x32xf32>
    %24 = vector.shape_cast %23 : vector<1x1x32xf32> to vector<32xf32>
    %25 = vector.shape_cast %24 : vector<32xf32> to vector<1x1x32xf32>
    %26 = vector.broadcast %25 : vector<1x1x32xf32> to vector<16x16x32xf32>
    %27 = arith.mulf %22, %26 : vector<16x16x32xf32>
    %28 = arith.addf %21, %27 : vector<16x16x32xf32>
    %29 = vector.extract_strided_slice %6 {offsets = [1, 0, 0], sizes = [16, 16, 32], strides = [1, 1, 1]} : vector<18x18x32xf32> to vector<16x16x32xf32>
    %c1_12 = arith.constant 1 : index
    %c0_13 = arith.constant 0 : index
    %c0_14 = arith.constant 0 : index
    %30 = vector.load %arg2[%c1_12, %c0_13, %c0_14] : memref<3x3x32xf32, #tpu.memory_space<vmem>>, vector<1x1x32xf32>
    %31 = vector.shape_cast %30 : vector<1x1x32xf32> to vector<32xf32>
    %32 = vector.shape_cast %31 : vector<32xf32> to vector<1x1x32xf32>
    %33 = vector.broadcast %32 : vector<1x1x32xf32> to vector<16x16x32xf32>
    %34 = arith.mulf %29, %33 : vector<16x16x32xf32>
    %35 = arith.addf %28, %34 : vector<16x16x32xf32>
    %36 = vector.extract_strided_slice %6 {offsets = [1, 1, 0], sizes = [16, 16, 32], strides = [1, 1, 1]} : vector<18x18x32xf32> to vector<16x16x32xf32>
    %c1_15 = arith.constant 1 : index
    %c1_16 = arith.constant 1 : index
    %c0_17 = arith.constant 0 : index
    %37 = vector.load %arg2[%c1_15, %c1_16, %c0_17] : memref<3x3x32xf32, #tpu.memory_space<vmem>>, vector<1x1x32xf32>
    %38 = vector.shape_cast %37 : vector<1x1x32xf32> to vector<32xf32>
    %39 = vector.shape_cast %38 : vector<32xf32> to vector<1x1x32xf32>
    %40 = vector.broadcast %39 : vector<1x1x32xf32> to vector<16x16x32xf32>
    %41 = arith.mulf %36, %40 : vector<16x16x32xf32>
    %42 = arith.addf %35, %41 : vector<16x16x32xf32>
    %43 = vector.extract_strided_slice %6 {offsets = [1, 2, 0], sizes = [16, 16, 32], strides = [1, 1, 1]} : vector<18x18x32xf32> to vector<16x16x32xf32>
    %c1_18 = arith.constant 1 : index
    %c2_19 = arith.constant 2 : index
    %c0_20 = arith.constant 0 : index
    %44 = vector.load %arg2[%c1_18, %c2_19, %c0_20] : memref<3x3x32xf32, #tpu.memory_space<vmem>>, vector<1x1x32xf32>
    %45 = vector.shape_cast %44 : vector<1x1x32xf32> to vector<32xf32>
    %46 = vector.shape_cast %45 : vector<32xf32> to vector<1x1x32xf32>
    %47 = vector.broadcast %46 : vector<1x1x32xf32> to vector<16x16x32xf32>
    %48 = arith.mulf %43, %47 : vector<16x16x32xf32>
    %49 = arith.addf %42, %48 : vector<16x16x32xf32>
    %50 = vector.extract_strided_slice %6 {offsets = [2, 0, 0], sizes = [16, 16, 32], strides = [1, 1, 1]} : vector<18x18x32xf32> to vector<16x16x32xf32>
    %c2_21 = arith.constant 2 : index
    %c0_22 = arith.constant 0 : index
    %c0_23 = arith.constant 0 : index
    %51 = vector.load %arg2[%c2_21, %c0_22, %c0_23] : memref<3x3x32xf32, #tpu.memory_space<vmem>>, vector<1x1x32xf32>
    %52 = vector.shape_cast %51 : vector<1x1x32xf32> to vector<32xf32>
    %53 = vector.shape_cast %52 : vector<32xf32> to vector<1x1x32xf32>
    %54 = vector.broadcast %53 : vector<1x1x32xf32> to vector<16x16x32xf32>
    %55 = arith.mulf %50, %54 : vector<16x16x32xf32>
    %56 = arith.addf %49, %55 : vector<16x16x32xf32>
    %57 = vector.extract_strided_slice %6 {offsets = [2, 1, 0], sizes = [16, 16, 32], strides = [1, 1, 1]} : vector<18x18x32xf32> to vector<16x16x32xf32>
    %c2_24 = arith.constant 2 : index
    %c1_25 = arith.constant 1 : index
    %c0_26 = arith.constant 0 : index
    %58 = vector.load %arg2[%c2_24, %c1_25, %c0_26] : memref<3x3x32xf32, #tpu.memory_space<vmem>>, vector<1x1x32xf32>
    %59 = vector.shape_cast %58 : vector<1x1x32xf32> to vector<32xf32>
    %60 = vector.shape_cast %59 : vector<32xf32> to vector<1x1x32xf32>
    %61 = vector.broadcast %60 : vector<1x1x32xf32> to vector<16x16x32xf32>
    %62 = arith.mulf %57, %61 : vector<16x16x32xf32>
    %63 = arith.addf %56, %62 : vector<16x16x32xf32>
    %64 = vector.extract_strided_slice %6 {offsets = [2, 2, 0], sizes = [16, 16, 32], strides = [1, 1, 1]} : vector<18x18x32xf32> to vector<16x16x32xf32>
    %c2_27 = arith.constant 2 : index
    %c2_28 = arith.constant 2 : index
    %c0_29 = arith.constant 0 : index
    %65 = vector.load %arg2[%c2_27, %c2_28, %c0_29] : memref<3x3x32xf32, #tpu.memory_space<vmem>>, vector<1x1x32xf32>
    %66 = vector.shape_cast %65 : vector<1x1x32xf32> to vector<32xf32>
    %67 = vector.shape_cast %66 : vector<32xf32> to vector<1x1x32xf32>
    %68 = vector.broadcast %67 : vector<1x1x32xf32> to vector<16x16x32xf32>
    %69 = arith.mulf %64, %68 : vector<16x16x32xf32>
    %70 = arith.addf %63, %69 : vector<16x16x32xf32>
    %c0_30 = arith.constant 0 : index
    %c0_31 = arith.constant 0 : index
    %71 = vector.load %arg3[%c0_30, %c0_31] : memref<1x32xf32, #tpu.memory_space<vmem>>, vector<1x32xf32>
    %72 = vector.shape_cast %71 : vector<1x32xf32> to vector<1x1x32xf32>
    %73 = vector.broadcast %72 : vector<1x1x32xf32> to vector<16x16x32xf32>
    %74 = arith.addf %70, %73 : vector<16x16x32xf32>
    %75 = arith.negf %74 : vector<16x16x32xf32>
    %76 = math.exp %75 : vector<16x16x32xf32>
    %cst_32 = arith.constant 1.000000e+00 : f32
    %77 = vector.broadcast %cst_32 : f32 to vector<16x16x32xf32>
    %78 = arith.addf %77, %76 : vector<16x16x32xf32>
    %79 = arith.divf %77, %78 : vector<16x16x32xf32>
    %80 = arith.mulf %74, %79 : vector<16x16x32xf32>
    %81 = arith.truncf %80 : vector<16x16x32xf32> to vector<16x16x32xbf16>
    %c0_33 = arith.constant 0 : index
    %c0_34 = arith.constant 0 : index
    %c0_35 = arith.constant 0 : index
    %c0_36 = arith.constant 0 : index
    %82 = vector.load %arg4[%c0_33, %c0_34, %c0_35, %c0_36] : memref<1x16x16x32xbf16, #tpu.memory_space<vmem>>, vector<1x16x16x32xbf16>
    %83 = vector.shape_cast %82 : vector<1x16x16x32xbf16> to vector<16x16x32xbf16>
    %84 = vector.shape_cast %81 : vector<16x16x32xbf16> to vector<1x16x16x32xbf16>
    tpu.vector_store %arg4[%c0_33, %c0_34, %c0_35, %c0_36], %84 {strides = array<i32>} : memref<1x16x16x32xbf16, #tpu.memory_space<vmem>>, vector<1x16x16x32xbf16>,
    %cst_37 = arith.constant dense<0.000000e+00> : vector<16x32xf32>
    %85 = vector.multi_reduction <add>, %80, %cst_37 [0] : vector<16x16x32xf32> to vector<16x32xf32>
    %cst_38 = arith.constant dense<0.000000e+00> : vector<32xf32>
    %86 = vector.multi_reduction <add>, %85, %cst_38 [0] : vector<16x32xf32> to vector<32xf32>
    %87 = vector.shape_cast %86 : vector<32xf32> to vector<1x32xf32>
    %cst_39 = arith.constant 3.906250e-03 : f32
    %88 = vector.broadcast %cst_39 : f32 to vector<1x32xf32>
    %89 = arith.mulf %87, %88 : vector<1x32xf32>
    %c0_40 = arith.constant 0 : index
    %c0_41 = arith.constant 0 : index
    %c0_42 = arith.constant 0 : index
    %90 = vector.load %arg5[%c0_40, %c0_41, %c0_42] : memref<1x1x32xf32, #tpu.memory_space<vmem>>, vector<1x1x32xf32>
    %91 = vector.shape_cast %90 : vector<1x1x32xf32> to vector<1x32xf32>
    %92 = vector.shape_cast %89 : vector<1x32xf32> to vector<1x1x32xf32>
    tpu.vector_store %arg5[%c0_40, %c0_41, %c0_42], %92 {strides = array<i32>} : memref<1x1x32xf32, #tpu.memory_space<vmem>>, vector<1x1x32xf32>,
    return
  }
  func.func @transform_0(%arg0: i32) -> (i32, i32, i32, i32) {
    %c0_i32 = arith.constant 0 : i32
    %c0_i32_0 = arith.constant 0 : i32
    %c0_i32_1 = arith.constant 0 : i32
    %c0_i32_2 = arith.constant 0 : i32
    return %arg0, %c0_i32, %c0_i32_0, %c0_i32_1 : i32, i32, i32, i32
  }
  func.func @transform_1(%arg0: i32) -> (i32, i32, i32) {
    %c0_i32 = arith.constant 0 : i32
    %c0_i32_0 = arith.constant 0 : i32
    %c0_i32_1 = arith.constant 0 : i32
    %c0_i32_2 = arith.constant 0 : i32
    return %c0_i32, %c0_i32_0, %c0_i32_1 : i32, i32, i32
  }
  func.func @transform_2(%arg0: i32) -> (i32, i32) {
    %c0_i32 = arith.constant 0 : i32
    %c0_i32_0 = arith.constant 0 : i32
    %c0_i32_1 = arith.constant 0 : i32
    return %c0_i32, %c0_i32_0 : i32, i32
  }
  func.func @transform_3(%arg0: i32) -> (i32, i32, i32, i32) {
    %c0_i32 = arith.constant 0 : i32
    %c0_i32_0 = arith.constant 0 : i32
    %c0_i32_1 = arith.constant 0 : i32
    %c0_i32_2 = arith.constant 0 : i32
    return %arg0, %c0_i32, %c0_i32_0, %c0_i32_1 : i32, i32, i32, i32
  }
  func.func @transform_4(%arg0: i32) -> (i32, i32, i32) {
    %c0_i32 = arith.constant 0 : i32
    %c0_i32_0 = arith.constant 0 : i32
    %c0_i32_1 = arith.constant 0 : i32
    return %arg0, %c0_i32, %c0_i32_0 : i32, i32, i32
  }
}

</mosaic_0001>

<llo_original>
// kernel: mbconv_block.5
$region0: #{mbconv_block.5}
  #allocation0 [shape = 'u32[]', space=smem, size = 0x4, offset = 0x4, fixed_abs, tag = 'smem constant byte address 0x4 - core index']
  #allocation1 [shape = 'u32[144,128]{1,0:T(1,128)}', space=vmem, size = 0x12000, scoped, tag = 'internal scratch']
  %s0 = inlined_call_operand.vmem [shape: bf16[2,256,32], index: 0, kind: input, shape index: {}]
  %s1 = inlined_call_operand.vmem [shape: f32[2,1,32], index: 1, kind: input, shape index: {}]
  %s2 = inlined_call_operand.vmem [shape: bf16[8,32], index: 2, kind: input, shape index: {}]
  %s3 = inlined_call_operand.vmem [shape: f32[8,1], index: 3, kind: input, shape index: {}]
  %s4 = inlined_call_operand.vmem [shape: f32[2,8,256], index: 4, kind: input, shape index: {}]
  %s5 = inlined_call_operand.vmem [shape: f32[2,8,256], index: 5, kind: output, shape index: {}]
  %s6 = sld [smem:[#allocation0]]
  $region53: #{mbconv_block.5} parent=0
    _
  %s8 = ssub.s32 1, %s6
  %s9 = scalar_select 0, %s8, %s6
  loop: start=0, step=1, limit=4
  $region2: #{mbconv_block.5} parent=0 // loop_pre_header
    _
  $region3: #{mbconv_block.5} parent=0 // loop_header
    %s11 = sphi 0, %s15
    %p12 = scmp.ge.s32.totalorder %s11, 4
    %s18 = sphi 0, %s30
    %s19 = sphi 0, %s26
    %s20 = sphi 0, %s18
    %s21 = sphi 0, %s19
    %s22 = sphi 0, %s20
    %s23 = sphi 0, %s21
    %s35 = sphi 0, %s37
    %s38 = sphi 0, %s35
    %s39 = sphi 0, %s38
    %s55 = sphi 0, %s39
    %s61 = sphi 0, %s63
    %s64 = sphi 0, %s61
    %s65 = sphi 0, %s64
    %s81 = sphi 0, %s65
    %s85 = sphi 0, %s85
    %s87 = sphi 0, %s85
    %s88 = sphi 0, %s87
    %s102 = sphi 0, %s88
    %s106 = sphi 0, %s106
    %s108 = sphi 0, %s106
    %s109 = sphi 0, %s108
    %s123 = sphi 0, %s109
    %s131 = sphi 0, %s133
    %s134 = sphi 0, %s131
    %s135 = sphi 0, %s134
    %s151 = sphi 0, %s135
    %s159 = sphi 0, %s161
    %s162 = sphi 0, %s159
    %s163 = sphi 0, %s162
    %s179 = sphi 0, %s163
  $region4: #{mbconv_block.5} parent=0 // loop_header_branch
    %14 = sbr.rel (%p12) target = $region8
  $region5: #{mbconv_block.5} parent=0 // loop_body
    %s16 = ssub.s32 %s11, 1
    %s17 = ssub.s32 %s11, 2
    %s24 = sadd.s32 1, %s19
    %p25 = scmp.ge.s32.totalorder %s24, 1
    %s26 = scalar_select %p25, 0, %s24
    %s27 = sadd.s32 1, %s18
    %s28 = scalar_select %p25, %s27, %s18
    %p29 = scmp.ge.s32.totalorder %s28, 2
    %s30 = scalar_select %p29, 0, %s28
    %s31 = ssub.s32 %s18, %s30
    %s32 = ssub.s32 %s19, %s26
    %s33 = sor.u32 %s31, %s32
    %p34 = scmp.eq.s32.totalorder %s33, 0
    %s36 = sadd.s32 %s35, 1
    %s37 = scalar_select %p34, %s35, %s36
    %p40 = pneg %p34
    %p41 = scmp.eq.s32.totalorder %s11, 1
    %p42 = por %p40, %p41
    %p43 = scmp.ne.s32.totalorder %s35, %s38
    %p44 = scmp.eq.s32.totalorder %s11, 0
    %p45 = por %p43, %p44
    %p46 = scmp.ne.s32.totalorder %s35, %s38
    %p47 = scmp.eq.s32.totalorder %s16, 1
    %p48 = por %p46, %p47
    %p49 = scmp.ne.s32.totalorder %s38, %s39
    %p50 = scmp.eq.s32.totalorder %s16, 0
    %p51 = por %p49, %p50
    %p52 = scmp.ne.s32.totalorder %s38, %s39
    %p53 = scmp.eq.s32.totalorder %s17, 1
    %p54 = por %p52, %p53
    %p56 = scmp.ne.s32.totalorder %s39, %s55
    %p57 = scmp.eq.s32.totalorder %s17, 0
    %p58 = por %p56, %p57
    %s59 = ssub.s32 %s18, %s30
    %p60 = scmp.eq.s32.totalorder %s59, 0
    %s62 = sadd.s32 %s61, 1
    %s63 = scalar_select %p60, %s61, %s62
    %p66 = pneg %p60
    %p67 = scmp.eq.s32.totalorder %s11, 1
    %p68 = por %p66, %p67
    %p69 = scmp.ne.s32.totalorder %s61, %s64
    %p70 = scmp.eq.s32.totalorder %s11, 0
    %p71 = por %p69, %p70
    %p72 = scmp.ne.s32.totalorder %s61, %s64
    %p73 = scmp.eq.s32.totalorder %s16, 1
    %p74 = por %p72, %p73
    %p75 = scmp.ne.s32.totalorder %s64, %s65
    %p76 = scmp.eq.s32.totalorder %s16, 0
    %p77 = por %p75, %p76
    %p78 = scmp.ne.s32.totalorder %s64, %s65
    %p79 = scmp.eq.s32.totalorder %s17, 1
    %p80 = por %p78, %p79
    %p82 = scmp.ne.s32.totalorder %s65, %s81
    %p83 = scmp.eq.s32.totalorder %s17, 0
    %p84 = por %p82, %p83
    %s86 = sadd.s32 %s85, 1
    %p89 = scmp.eq.s32.totalorder %s11, 1
    %p90 = scmp.ne.s32.totalorder %s85, %s87
    %p91 = scmp.eq.s32.totalorder %s11, 0
    %p92 = por %p90, %p91
    %p93 = scmp.ne.s32.totalorder %s85, %s87
    %p94 = scmp.eq.s32.totalorder %s16, 1
    %p95 = por %p93, %p94
    %p96 = scmp.ne.s32.totalorder %s87, %s88
    %p97 = scmp.eq.s32.totalorder %s16, 0
    %p98 = por %p96, %p97
    %p99 = scmp.ne.s32.totalorder %s87, %s88
    %p100 = scmp.eq.s32.totalorder %s17, 1
    %p101 = por %p99, %p100
    %p103 = scmp.ne.s32.totalorder %s88, %s102
    %p104 = scmp.eq.s32.totalorder %s17, 0
    %p105 = por %p103, %p104
    %s107 = sadd.s32 %s106, 1
    %p110 = scmp.eq.s32.totalorder %s11, 1
    %p111 = scmp.ne.s32.totalorder %s106, %s108
    %p112 = scmp.eq.s32.totalorder %s11, 0
    %p113 = por %p111, %p112
    %p114 = scmp.ne.s32.totalorder %s106, %s108
    %p115 = scmp.eq.s32.totalorder %s16, 1
    %p116 = por %p114, %p115
    %p117 = scmp.ne.s32.totalorder %s108, %s109
    %p118 = scmp.eq.s32.totalorder %s16, 0
    %p119 = por %p117, %p118
    %p120 = scmp.ne.s32.totalorder %s108, %s109
    %p121 = scmp.eq.s32.totalorder %s17, 1
    %p122 = por %p120, %p121
    %p124 = scmp.ne.s32.totalorder %s109, %s123
    %p125 = scmp.eq.s32.totalorder %s17, 0
    %p126 = por %p124, %p125
    %s127 = ssub.s32 %s18, %s30
    %s128 = ssub.s32 %s19, %s26
    %s129 = sor.u32 %s127, %s128
    %p130 = scmp.eq.s32.totalorder %s129, 0
    %s132 = sadd.s32 %s131, 1
    %s133 = scalar_select %p130, %s131, %s132
    %p136 = pneg %p130
    %p137 = scmp.eq.s32.totalorder %s11, 1
    %p138 = por %p136, %p137
    %p139 = scmp.ne.s32.totalorder %s131, %s134
    %p140 = scmp.eq.s32.totalorder %s11, 0
    %p141 = por %p139, %p140
    %p142 = scmp.ne.s32.totalorder %s131, %s134
    %p143 = scmp.eq.s32.totalorder %s16, 1
    %p144 = por %p142, %p143
    %p145 = scmp.ne.s32.totalorder %s134, %s135
    %p146 = scmp.eq.s32.totalorder %s16, 0
    %p147 = por %p145, %p146
    %p148 = scmp.ne.s32.totalorder %s134, %s135
    %p149 = scmp.eq.s32.totalorder %s17, 1
    %p150 = por %p148, %p149
    %p152 = scmp.ne.s32.totalorder %s135, %s151
    %p153 = scmp.eq.s32.totalorder %s17, 0
    %p154 = por %p152, %p153
    %s155 = ssub.s32 %s18, %s30
    %s156 = ssub.s32 %s19, %s26
    %s157 = sor.u32 %s155, %s156
    %p158 = scmp.eq.s32.totalorder %s157, 0
    %s160 = sadd.s32 %s159, 1
    %s161 = scalar_select %p158, %s159, %s160
    %p164 = pneg %p158
    %p165 = scmp.eq.s32.totalorder %s11, 1
    %p166 = por %p164, %p165
    %p167 = scmp.ne.s32.totalorder %s159, %s162
    %p168 = scmp.eq.s32.totalorder %s11, 0
    %p169 = por %p167, %p168
    %p170 = scmp.ne.s32.totalorder %s159, %s162
    %p171 = scmp.eq.s32.totalorder %s16, 1
    %p172 = por %p170, %p171
    %p173 = scmp.ne.s32.totalorder %s162, %s163
    %p174 = scmp.eq.s32.totalorder %s16, 0
    %p175 = por %p173, %p174
    %p176 = scmp.ne.s32.totalorder %s162, %s163
    %p177 = scmp.eq.s32.totalorder %s17, 1
    %p178 = por %p176, %p177
    %p180 = scmp.ne.s32.totalorder %s163, %s179
    %p181 = scmp.eq.s32.totalorder %s17, 0
    %p182 = por %p180, %p181
    %p183 = scmp.le.s32.totalorder 1, %s11
    %p184 = scmp.lt.s32.totalorder %s11, 3
    %p185 = pnand %p183, %p184
    %p186 = pneg %p185
    // Predicated region
    $region9: #{mbconv_block.5} parent=5 // pred_check
      _
    $region10: #{mbconv_block.5} parent=5 // pred_check_branch
      %188 = sbr.rel (%p185) target = $region12
    $region11: #{mbconv_block.5} parent=5 // pred_region
      %s189 = ssub.s32 %s11, 1
      // Predicated region
      $region13: #{mbconv_block.5} parent=11 // pred_check
        %p190 = pneg %p98
      $region14: #{mbconv_block.5} parent=11 // pred_check_branch
        %192 = sbr.rel (%p190) target = $region16
      $region15: #{mbconv_block.5} parent=11 // pred_region
        _
      $region16: #{mbconv_block.5} parent=11 // pred_fallthru
        _
      // Predicated region
      $region17: #{mbconv_block.5} parent=11 // pred_check
        %p193 = pneg %p119
      $region18: #{mbconv_block.5} parent=11 // pred_check_branch
        %195 = sbr.rel (%p193) target = $region20
      $region19: #{mbconv_block.5} parent=11 // pred_region
        _
      $region20: #{mbconv_block.5} parent=11 // pred_fallthru
        _
    $region12: #{mbconv_block.5} parent=5 // pred_fallthru
      _
    %p196 = scmp.lt.s32.totalorder %s11, 2
    // Predicated region
    $region21: #{mbconv_block.5} parent=5 // pred_check
      %p197 = pneg %p196
    $region22: #{mbconv_block.5} parent=5 // pred_check_branch
      %199 = sbr.rel (%p197) target = $region24
    $region23: #{mbconv_block.5} parent=5 // pred_region
      // Predicated region
      $region25: #{mbconv_block.5} parent=23 // pred_check
        %p200 = pneg %p45
      $region26: #{mbconv_block.5} parent=23 // pred_check_branch
        %202 = sbr.rel (%p200) target = $region28
      $region27: #{mbconv_block.5} parent=23 // pred_region
        %s203 = smul.u32 32, %s19
        %p204 = scmp.lt.s32.totalorder %s18, 1
        %s205 = scalar_select %p204, %s18, 1
        %p206 = scmp.lt.s32.totalorder %s203, 31
        %s207 = scalar_select %p206, %s203, 31
        %s208 = smul.addr %s205, 32
        %s209 = sadd.s32 %s207, %s208
        %s210 = smul.addr %s209, 4
        %s211 = scalar_lea.vmem %s0, %s210
        %s212 = smul.u32 32, %s19
      $region28: #{mbconv_block.5} parent=23 // pred_fallthru
        _
      // Predicated region
      $region29: #{mbconv_block.5} parent=23 // pred_check
        %p213 = pneg %p71
      $region30: #{mbconv_block.5} parent=23 // pred_check_branch
        %215 = sbr.rel (%p213) target = $region32
      $region31: #{mbconv_block.5} parent=23 // pred_region
        %p216 = scmp.lt.s32.totalorder %s18, 1
        %s217 = scalar_select %p216, %s18, 1
        %s218 = scalar_lea.vmem %s1, %s217
      $region32: #{mbconv_block.5} parent=23 // pred_fallthru
        _
      // Predicated region
      $region33: #{mbconv_block.5} parent=23 // pred_check
        %p219 = pneg %p141
      $region34: #{mbconv_block.5} parent=23 // pred_check_branch
        %221 = sbr.rel (%p219) target = $region36
      $region35: #{mbconv_block.5} parent=23 // pred_region
        %s222 = smul.u32 2, %s19
        %p223 = scmp.lt.s32.totalorder %s18, 1
        %s224 = scalar_select %p223, %s18, 1
        %p225 = scmp.lt.s32.totalorder %s222, 1
        %s226 = scalar_select %p225, %s222, 1
        %s227 = smul.addr %s224, 2
        %s228 = sadd.s32 %s226, %s227
        %s229 = smul.addr %s228, 8
        %s230 = scalar_lea.vmem %s4, %s229
        %s231 = smul.u32 2, %s19
      $region36: #{mbconv_block.5} parent=23 // pred_fallthru
        _
    $region24: #{mbconv_block.5} parent=5 // pred_fallthru
      _
    %p232 = scmp.le.s32.totalorder 1, %s11
    %p233 = scmp.lt.s32.totalorder %s11, 3
    %p234 = pnand %p232, %p233
    %p235 = pneg %p234
    // Predicated region
    $region37: #{mbconv_block.5} parent=5 // pred_check
      _
    $region38: #{mbconv_block.5} parent=5 // pred_check_branch
      %237 = sbr.rel (%p234) target = $region40
    $region39: #{mbconv_block.5} parent=5 // pred_region
      %s238 = ssub.s32 %s11, 1
      %s239 = smul.u32 32, %s21
      %p240 = scmp.lt.s32.totalorder %s20, 1
      %s241 = scalar_select %p240, %s20, 1
      %p242 = scmp.lt.s32.totalorder %s239, 31
      %s243 = scalar_select %p242, %s239, 31
      %s244 = smul.addr %s241, 32
      %s245 = sadd.s32 %s243, %s244
      %s246 = smul.addr %s245, 4
      %s247 = scalar_lea.vmem %s0, %s246
      %p248 = pneg %p51
      %p249 = pneg %p48
      %p250 = scmp.lt.s32.totalorder %s20, 1
      %s251 = scalar_select %p250, %s20, 1
      %s252 = scalar_lea.vmem %s1, %s251
      %p253 = pneg %p77
      %p254 = pneg %p74
      %p255 = pneg %p98
      %p256 = pneg %p95
      %p257 = pneg %p119
      %p258 = pneg %p116
      %s259 = smul.u32 2, %s21
      %p260 = scmp.lt.s32.totalorder %s20, 1
      %s261 = scalar_select %p260, %s20, 1
      %p262 = scmp.lt.s32.totalorder %s259, 1
      %s263 = scalar_select %p262, %s259, 1
      %s264 = smul.addr %s261, 2
      %s265 = sadd.s32 %s263, %s264
      %s266 = smul.addr %s265, 8
      %s267 = scalar_lea.vmem %s4, %s266
      %p268 = pneg %p147
      %p269 = pneg %p144
      %p270 = pneg %p175
      %p271 = pneg %p172
      %s272 = smul.u32 2, %s21
      %p273 = scmp.lt.s32.totalorder %s20, 1
      %s274 = scalar_select %p273, %s20, 1
      %p275 = scmp.lt.s32.totalorder %s272, 1
      %s276 = scalar_select %p275, %s272, 1
      %s277 = smul.addr %s274, 2
      %s278 = sadd.s32 %s276, %s277
      %s279 = smul.addr %s278, 8
      %s280 = scalar_lea.vmem %s5, %s279
      %s281 = smul.u32 32, %s21
      %p282 = scmp.lt.s32.totalorder %s20, 1
      %s283 = scalar_select %p282, %s20, 1
      %p284 = scmp.lt.s32.totalorder %s281, 31
      %s285 = scalar_select %p284, %s281, 31
      %s286 = smul.addr %s283, 32
      %s287 = sadd.s32 %s285, %s286
      %s288 = smul.addr %s287, 4
      %s289 = scalar_lea.vmem %s0, %s288
      %s290 = smul.u32 32, %s21
      %p291 = scmp.lt.s32.totalorder %s20, 1
      %s292 = scalar_select %p291, %s20, 1
      %s293 = scalar_lea.vmem %s1, %s292
      %s294 = smul.u32 2, %s21
      %p295 = scmp.lt.s32.totalorder %s20, 1
      %s296 = scalar_select %p295, %s20, 1
      %p297 = scmp.lt.s32.totalorder %s294, 1
      %s298 = scalar_select %p297, %s294, 1
      %s299 = smul.addr %s296, 2
      %s300 = sadd.s32 %s298, %s299
      %s301 = smul.addr %s300, 8
      %s302 = scalar_lea.vmem %s4, %s301
      %s303 = smul.u32 2, %s21
      %s304 = smul.u32 2, %s21
      %p305 = scmp.lt.s32.totalorder %s20, 1
      %s306 = scalar_select %p305, %s20, 1
      %p307 = scmp.lt.s32.totalorder %s304, 1
      %s308 = scalar_select %p307, %s304, 1
      %s309 = smul.addr %s306, 2
      %s310 = sadd.s32 %s308, %s309
      %s311 = smul.addr %s310, 8
      %s312 = scalar_lea.vmem %s5, %s311
      %s313 = smul.u32 2, %s21
      %v315 = vld [vmem:[%s2] sm:$0xf]
      %v316 = vunpack.c.l.bf16 %v315
      %v317 = vld [vmem:[%s293] sm:$0x1]
      %v319 = vlaneseq
      %v320 = vshrl.u32 %v319, 7
      %v321 = vsub.s32 0, %v320
      %v322 = vrot.slane %v317, %v321
      %v324 = vmul.f32 %v316, %v322
      %v325 = vpack.c.bf16 %v324, %v324
      %v326 = vld [vmem:[%s289] sm:$0xf]
      %v327 = vld [vmem:[%s289 + $0x4] sm:$0xf]
      %v328 = vld [vmem:[%s289 + $0x8] sm:$0xf]
      %v329 = vld [vmem:[%s289 + $0xc] sm:$0xf]
      %v330 = vld [vmem:[%s289 + $0x10] sm:$0xf]
      %v331 = vld [vmem:[%s289 + $0x14] sm:$0xf]
      %v332 = vld [vmem:[%s289 + $0x18] sm:$0xf]
      %v333 = vld [vmem:[%s289 + $0x1c] sm:$0xf]
      %v334 = vld [vmem:[%s289 + $0x20] sm:$0xf]
      %v335 = vld [vmem:[%s289 + $0x24] sm:$0xf]
      %v336 = vld [vmem:[%s289 + $0x28] sm:$0xf]
      %v337 = vld [vmem:[%s289 + $0x2c] sm:$0xf]
      %v338 = vld [vmem:[%s289 + $0x30] sm:$0xf]
      %v339 = vld [vmem:[%s289 + $0x34] sm:$0xf]
      %v340 = vld [vmem:[%s289 + $0x38] sm:$0xf]
      %v341 = vld [vmem:[%s289 + $0x3c] sm:$0xf]
      %v342 = vld [vmem:[%s289 + $0x40] sm:$0xf]
      %v343 = vld [vmem:[%s289 + $0x44] sm:$0xf]
      %v344 = vld [vmem:[%s289 + $0x48] sm:$0xf]
      %v345 = vld [vmem:[%s289 + $0x4c] sm:$0xf]
      %v346 = vld [vmem:[%s289 + $0x50] sm:$0xf]
      %v347 = vld [vmem:[%s289 + $0x54] sm:$0xf]
      %v348 = vld [vmem:[%s289 + $0x58] sm:$0xf]
      %v349 = vld [vmem:[%s289 + $0x5c] sm:$0xf]
      %v350 = vld [vmem:[%s289 + $0x60] sm:$0xf]
      %v351 = vld [vmem:[%s289 + $0x64] sm:$0xf]
      %v352 = vld [vmem:[%s289 + $0x68] sm:$0xf]
      %v353 = vld [vmem:[%s289 + $0x6c] sm:$0xf]
      %v354 = vld [vmem:[%s289 + $0x70] sm:$0xf]
      %v355 = vld [vmem:[%s289 + $0x74] sm:$0xf]
      %v356 = vld [vmem:[%s289 + $0x78] sm:$0xf]
      %v357 = vld [vmem:[%s289 + $0x7c] sm:$0xf]
      %v358 = vld [vmem:[%s3] sm:$0xff]
      %360 = vset.pattern.permute.xlu0 0
      %361 = vperm.xlu0 %360, %v358
      %v362 = vpop.permute.xlu0 %361
      %v396 = vunpack.c.l.b16 %v326
      %v397 = vunpack.c.l.b16 %v327
      %v398 = vunpack.c.l.b16 %v328
      %v399 = vunpack.c.l.b16 %v329
      %v400 = vunpack.c.l.b16 %v330
      %v401 = vunpack.c.l.b16 %v331
      %v402 = vunpack.c.l.b16 %v332
      %v403 = vunpack.c.l.b16 %v333
      %v404 = vunpack.c.l.b16 %v334
      %v405 = vunpack.c.l.b16 %v335
      %v406 = vunpack.c.l.b16 %v336
      %v407 = vunpack.c.l.b16 %v337
      %v408 = vunpack.c.l.b16 %v338
      %v409 = vunpack.c.l.b16 %v339
      %v410 = vunpack.c.l.b16 %v340
      %v411 = vunpack.c.l.b16 %v341
      %v412 = vunpack.c.l.b16 %v342
      %v413 = vunpack.c.l.b16 %v343
      %v414 = vunpack.c.l.b16 %v344
      %v415 = vunpack.c.l.b16 %v345
      %v416 = vunpack.c.l.b16 %v346
      %v417 = vunpack.c.l.b16 %v347
      %v418 = vunpack.c.l.b16 %v348
      %v419 = vunpack.c.l.b16 %v349
      %v420 = vunpack.c.l.b16 %v350
      %v421 = vunpack.c.l.b16 %v351
      %v422 = vunpack.c.l.b16 %v352
      %v423 = vunpack.c.l.b16 %v353
      %v424 = vunpack.c.l.b16 %v354
      %v425 = vunpack.c.l.b16 %v355
      %v426 = vunpack.c.l.b16 %v356
      %v427 = vunpack.c.l.b16 %v357
      %v428 = vpack.c.b16 %v397, %v396
      %v429 = vpack.c.b16 %v399, %v398
      %v430 = vpack.c.b16 %v401, %v400
      %v431 = vpack.c.b16 %v403, %v402
      %v432 = vpack.c.b16 %v405, %v404
      %v433 = vpack.c.b16 %v407, %v406
      %v434 = vpack.c.b16 %v409, %v408
      %v435 = vpack.c.b16 %v411, %v410
      %v436 = vpack.c.b16 %v413, %v412
      %v437 = vpack.c.b16 %v415, %v414
      %v438 = vpack.c.b16 %v417, %v416
      %v439 = vpack.c.b16 %v419, %v418
      %v440 = vpack.c.b16 %v421, %v420
      %v441 = vpack.c.b16 %v423, %v422
      %v442 = vpack.c.b16 %v425, %v424
      %v443 = vpack.c.b16 %v427, %v426
      %vm444 = vcmask 261120
      %v446 = vsel %vm444, %v325, 0
      %v449 = vsel %vm444, %v428, 0
      %v452 = vsel %vm444, %v429, 0
      %v455 = vsel %vm444, %v430, 0
      %v458 = vsel %vm444, %v431, 0
      %v461 = vsel %vm444, %v432, 0
      %v464 = vsel %vm444, %v433, 0
      %v467 = vsel %vm444, %v434, 0
      %v470 = vsel %vm444, %v435, 0
      %v473 = vsel %vm444, %v436, 0
      %v476 = vsel %vm444, %v437, 0
      %v479 = vsel %vm444, %v438, 0
      %v482 = vsel %vm444, %v439, 0
      %v485 = vsel %vm444, %v440, 0
      %v488 = vsel %vm444, %v441, 0
      %v491 = vsel %vm444, %v442, 0
      %v494 = vsel %vm444, %v443, 0
      %496 = vmatprep.subr.bf16.mxu0 0
      %497 = vmatpush1.bf16.xpose.msra.mxu0 %v470
      %498 = vmatprep.subr.bf16.mxu0 0
      %499 = vmatpush1.bf16.xpose.msra.mxu0 %v467
      %500 = vmatprep.subr.bf16.mxu0 0
      %501 = vmatpush1.bf16.xpose.msra.mxu0 %v464
      %502 = vmatprep.subr.bf16.mxu0 0
      %503 = vmatpush1.bf16.xpose.msra.mxu0 %v461
      %504 = vmatprep.subr.bf16.mxu0 0
      %505 = vmatpush1.bf16.xpose.msra.mxu0 %v458
      %506 = vmatprep.subr.bf16.mxu0 0
      %507 = vmatpush1.bf16.xpose.msra.mxu0 %v455
      %508 = vmatprep.subr.bf16.mxu0 0
      %509 = vmatpush1.bf16.xpose.msra.mxu0 %v452
      %510 = vmatprep.subr.bf16.mxu0 0
      %511 = vmatpush1.bf16.xpose.msra.mxu0 %v449
      %512 = vmatprep.subr.bf16.mxu0 0
      %513 = vmatpush2.bf16.xpose.msra.mxu0 %v494
      %514 = vmatprep.subr.bf16.mxu0 0
      %515 = vmatpush2.bf16.xpose.msra.mxu0 %v491
      %516 = vmatprep.subr.bf16.mxu0 0
      %517 = vmatpush2.bf16.xpose.msra.mxu0 %v488
      %518 = vmatprep.subr.bf16.mxu0 0
      %519 = vmatpush2.bf16.xpose.msra.mxu0 %v485
      %520 = vmatprep.subr.bf16.mxu0 0
      %521 = vmatpush2.bf16.xpose.msra.mxu0 %v482
      %522 = vmatprep.subr.bf16.mxu0 0
      %523 = vmatpush2.bf16.xpose.msra.mxu0 %v479
      %524 = vmatprep.subr.bf16.mxu0 0
      %525 = vmatpush2.bf16.xpose.msra.mxu0 %v476
      %526 = vmatprep.subr.bf16.mxu0 0
      %527 = vmatpush2.bf16.xpose.msra.mxu0 %v473
      %528 = vmatprep.mubr.bf16.mxu0 0
      %529 = vmatmul.mubr.bf16.gmra.mxu0 %v446
      %v530 = vpop.f32.mrf.mxu0
      %v531 = vadd.f32 %v362, %v530
      %v532 = vpop.f32.mrf.mxu0
      %v533 = vadd.f32 %v362, %v532
      %v534 = vpop.f32.mrf.mxu0
      %v535 = vpop.f32.mrf.mxu0
      %536 = vdwg.mxu0
      %v537 = vld [vmem:[%s302] sm:$0xff]
      %v538 = vld [vmem:[%s302 + $0x8] sm:$0xff]
      %v539 = vadd.f32 %v531, %v537
      %v540 = vadd.f32 %v533, %v538
      %541 = vst [vmem:[%s312] sm:$0xff] %v539
      %542 = vst [vmem:[%s312 + $0x8] sm:$0xff] %v540
      %s543 = smul.u32 2, %s21
      %p544 = scmp.lt.s32.totalorder %s20, 1
      %s545 = scalar_select %p544, %s20, 1
      %p546 = scmp.lt.s32.totalorder %s543, 1
      %s547 = scalar_select %p546, %s543, 1
      %s548 = smul.addr %s545, 2
      %s549 = sadd.s32 %s547, %s548
      %s550 = smul.addr %s549, 8
      %s551 = scalar_lea.vmem %s5, %s550
      // Predicated region
      $region41: #{mbconv_block.5} parent=39 // pred_check
        %p552 = pneg %p172
      $region42: #{mbconv_block.5} parent=39 // pred_check_branch
        %554 = sbr.rel (%p552) target = $region44
      $region43: #{mbconv_block.5} parent=39 // pred_region
        %s555 = smul.u32 2, %s21
      $region44: #{mbconv_block.5} parent=39 // pred_fallthru
        _
    $region40: #{mbconv_block.5} parent=5 // pred_fallthru
      _
    %p556 = scmp.le.s32.totalorder 2, %s11
    // Predicated region
    $region45: #{mbconv_block.5} parent=5 // pred_check
      %p557 = pneg %p556
    $region46: #{mbconv_block.5} parent=5 // pred_check_branch
      %559 = sbr.rel (%p557) target = $region48
    $region47: #{mbconv_block.5} parent=5 // pred_region
      %s560 = ssub.s32 %s11, 2
      // Predicated region
      $region49: #{mbconv_block.5} parent=47 // pred_check
        %p561 = pneg %p178
      $region50: #{mbconv_block.5} parent=47 // pred_check_branch
        %563 = sbr.rel (%p561) target = $region52
      $region51: #{mbconv_block.5} parent=47 // pred_region
        %s564 = smul.u32 2, %s23
        %p565 = scmp.lt.s32.totalorder %s22, 1
        %s566 = scalar_select %p565, %s22, 1
        %p567 = scmp.lt.s32.totalorder %s564, 1
        %s568 = scalar_select %p567, %s564, 1
        %s569 = smul.addr %s566, 2
        %s570 = sadd.s32 %s568, %s569
        %s571 = smul.addr %s570, 8
        %s572 = scalar_lea.vmem %s5, %s571
      $region52: #{mbconv_block.5} parent=47 // pred_fallthru
        _
    $region48: #{mbconv_block.5} parent=5 // pred_fallthru
      _
  $region6: #{mbconv_block.5} parent=0 // loop_footer
    %s15 = sadd.s32 1, %s11
  $region7: #{mbconv_block.5} parent=0 // loop_footer_branch
    %10 = sbr.rel target = $region3
  $region8: #{mbconv_block.5} parent=0 // loop_exit
    _

// kernel: mbconv_block.3
$region0: #{mbconv_block.3}
  #allocation0 [shape = 'u32[]', space=smem, size = 0x4, offset = 0x4, fixed_abs, tag = 'smem constant byte address 0x4 - core index']
  #allocation1 [shape = 'u32[144,128]{1,0:T(1,128)}', space=vmem, size = 0x12000, scoped, tag = 'internal scratch']
  %s0 = inlined_call_operand.vmem [shape: f32[2,8,256], index: 0, kind: input, shape index: {}]
  %s1 = inlined_call_operand.vmem [shape: bf16[8,32], index: 1, kind: input, shape index: {}]
  %s2 = inlined_call_operand.vmem [shape: f32[1,32], index: 2, kind: input, shape index: {}]
  %s3 = inlined_call_operand.vmem [shape: bf16[2,256,32], index: 3, kind: output, shape index: {}]
  %s4 = sld [smem:[#allocation0]]
  $region45: #{mbconv_block.3} parent=0
    _
  %s6 = ssub.s32 1, %s4
  %s7 = scalar_select 0, %s6, %s4
  loop: start=0, step=1, limit=4
  $region2: #{mbconv_block.3} parent=0 // loop_pre_header
    _
  $region3: #{mbconv_block.3} parent=0 // loop_header
    %s9 = sphi 0, %s13
    %p10 = scmp.ge.s32.totalorder %s9, 4
    %s16 = sphi 0, %s28
    %s17 = sphi 0, %s24
    %s18 = sphi 0, %s16
    %s19 = sphi 0, %s17
    %s20 = sphi 0, %s18
    %s21 = sphi 0, %s19
    %s33 = sphi 0, %s35
    %s36 = sphi 0, %s33
    %s37 = sphi 0, %s36
    %s53 = sphi 0, %s37
    %s57 = sphi 0, %s57
    %s59 = sphi 0, %s57
    %s60 = sphi 0, %s59
    %s74 = sphi 0, %s60
    %s78 = sphi 0, %s78
    %s80 = sphi 0, %s78
    %s81 = sphi 0, %s80
    %s95 = sphi 0, %s81
    %s103 = sphi 0, %s105
    %s106 = sphi 0, %s103
    %s107 = sphi 0, %s106
    %s123 = sphi 0, %s107
  $region4: #{mbconv_block.3} parent=0 // loop_header_branch
    %12 = sbr.rel (%p10) target = $region8
  $region5: #{mbconv_block.3} parent=0 // loop_body
    %s14 = ssub.s32 %s9, 1
    %s15 = ssub.s32 %s9, 2
    %s22 = sadd.s32 1, %s17
    %p23 = scmp.ge.s32.totalorder %s22, 1
    %s24 = scalar_select %p23, 0, %s22
    %s25 = sadd.s32 1, %s16
    %s26 = scalar_select %p23, %s25, %s16
    %p27 = scmp.ge.s32.totalorder %s26, 2
    %s28 = scalar_select %p27, 0, %s26
    %s29 = ssub.s32 %s16, %s28
    %s30 = ssub.s32 %s17, %s24
    %s31 = sor.u32 %s29, %s30
    %p32 = scmp.eq.s32.totalorder %s31, 0
    %s34 = sadd.s32 %s33, 1
    %s35 = scalar_select %p32, %s33, %s34
    %p38 = pneg %p32
    %p39 = scmp.eq.s32.totalorder %s9, 1
    %p40 = por %p38, %p39
    %p41 = scmp.ne.s32.totalorder %s33, %s36
    %p42 = scmp.eq.s32.totalorder %s9, 0
    %p43 = por %p41, %p42
    %p44 = scmp.ne.s32.totalorder %s33, %s36
    %p45 = scmp.eq.s32.totalorder %s14, 1
    %p46 = por %p44, %p45
    %p47 = scmp.ne.s32.totalorder %s36, %s37
    %p48 = scmp.eq.s32.totalorder %s14, 0
    %p49 = por %p47, %p48
    %p50 = scmp.ne.s32.totalorder %s36, %s37
    %p51 = scmp.eq.s32.totalorder %s15, 1
    %p52 = por %p50, %p51
    %p54 = scmp.ne.s32.totalorder %s37, %s53
    %p55 = scmp.eq.s32.totalorder %s15, 0
    %p56 = por %p54, %p55
    %s58 = sadd.s32 %s57, 1
    %p61 = scmp.eq.s32.totalorder %s9, 1
    %p62 = scmp.ne.s32.totalorder %s57, %s59
    %p63 = scmp.eq.s32.totalorder %s9, 0
    %p64 = por %p62, %p63
    %p65 = scmp.ne.s32.totalorder %s57, %s59
    %p66 = scmp.eq.s32.totalorder %s14, 1
    %p67 = por %p65, %p66
    %p68 = scmp.ne.s32.totalorder %s59, %s60
    %p69 = scmp.eq.s32.totalorder %s14, 0
    %p70 = por %p68, %p69
    %p71 = scmp.ne.s32.totalorder %s59, %s60
    %p72 = scmp.eq.s32.totalorder %s15, 1
    %p73 = por %p71, %p72
    %p75 = scmp.ne.s32.totalorder %s60, %s74
    %p76 = scmp.eq.s32.totalorder %s15, 0
    %p77 = por %p75, %p76
    %s79 = sadd.s32 %s78, 1
    %p82 = scmp.eq.s32.totalorder %s9, 1
    %p83 = scmp.ne.s32.totalorder %s78, %s80
    %p84 = scmp.eq.s32.totalorder %s9, 0
    %p85 = por %p83, %p84
    %p86 = scmp.ne.s32.totalorder %s78, %s80
    %p87 = scmp.eq.s32.totalorder %s14, 1
    %p88 = por %p86, %p87
    %p89 = scmp.ne.s32.totalorder %s80, %s81
    %p90 = scmp.eq.s32.totalorder %s14, 0
    %p91 = por %p89, %p90
    %p92 = scmp.ne.s32.totalorder %s80, %s81
    %p93 = scmp.eq.s32.totalorder %s15, 1
    %p94 = por %p92, %p93
    %p96 = scmp.ne.s32.totalorder %s81, %s95
    %p97 = scmp.eq.s32.totalorder %s15, 0
    %p98 = por %p96, %p97
    %s99 = ssub.s32 %s16, %s28
    %s100 = ssub.s32 %s17, %s24
    %s101 = sor.u32 %s99, %s100
    %p102 = scmp.eq.s32.totalorder %s101, 0
    %s104 = sadd.s32 %s103, 1
    %s105 = scalar_select %p102, %s103, %s104
    %p108 = pneg %p102
    %p109 = scmp.eq.s32.totalorder %s9, 1
    %p110 = por %p108, %p109
    %p111 = scmp.ne.s32.totalorder %s103, %s106
    %p112 = scmp.eq.s32.totalorder %s9, 0
    %p113 = por %p111, %p112
    %p114 = scmp.ne.s32.totalorder %s103, %s106
    %p115 = scmp.eq.s32.totalorder %s14, 1
    %p116 = por %p114, %p115
    %p117 = scmp.ne.s32.totalorder %s106, %s107
    %p118 = scmp.eq.s32.totalorder %s14, 0
    %p119 = por %p117, %p118
    %p120 = scmp.ne.s32.totalorder %s106, %s107
    %p121 = scmp.eq.s32.totalorder %s15, 1
    %p122 = por %p120, %p121
    %p124 = scmp.ne.s32.totalorder %s107, %s123
    %p125 = scmp.eq.s32.totalorder %s15, 0
    %p126 = por %p124, %p125
    %p127 = scmp.le.s32.totalorder 1, %s9
    %p128 = scmp.lt.s32.totalorder %s9, 3
    %p129 = pnand %p127, %p128
    %p130 = pneg %p129
    // Predicated region
    $region9: #{mbconv_block.3} parent=5 // pred_check
      _
    $region10: #{mbconv_block.3} parent=5 // pred_check_branch
      %132 = sbr.rel (%p129) target = $region12
    $region11: #{mbconv_block.3} parent=5 // pred_region
      %s133 = ssub.s32 %s9, 1
      // Predicated region
      $region13: #{mbconv_block.3} parent=11 // pred_check
        %p134 = pneg %p70
      $region14: #{mbconv_block.3} parent=11 // pred_check_branch
        %136 = sbr.rel (%p134) target = $region16
      $region15: #{mbconv_block.3} parent=11 // pred_region
        _
      $region16: #{mbconv_block.3} parent=11 // pred_fallthru
        _
      // Predicated region
      $region17: #{mbconv_block.3} parent=11 // pred_check
        %p137 = pneg %p91
      $region18: #{mbconv_block.3} parent=11 // pred_check_branch
        %139 = sbr.rel (%p137) target = $region20
      $region19: #{mbconv_block.3} parent=11 // pred_region
        _
      $region20: #{mbconv_block.3} parent=11 // pred_fallthru
        _
    $region12: #{mbconv_block.3} parent=5 // pred_fallthru
      _
    %p140 = scmp.lt.s32.totalorder %s9, 2
    // Predicated region
    $region21: #{mbconv_block.3} parent=5 // pred_check
      %p141 = pneg %p140
    $region22: #{mbconv_block.3} parent=5 // pred_check_branch
      %143 = sbr.rel (%p141) target = $region24
    $region23: #{mbconv_block.3} parent=5 // pred_region
      // Predicated region
      $region25: #{mbconv_block.3} parent=23 // pred_check
        %p144 = pneg %p43
      $region26: #{mbconv_block.3} parent=23 // pred_check_branch
        %146 = sbr.rel (%p144) target = $region28
      $region27: #{mbconv_block.3} parent=23 // pred_region
        %s147 = smul.u32 2, %s17
        %p148 = scmp.lt.s32.totalorder %s16, 1
        %s149 = scalar_select %p148, %s16, 1
        %p150 = scmp.lt.s32.totalorder %s147, 1
        %s151 = scalar_select %p150, %s147, 1
        %s152 = smul.addr %s149, 2
        %s153 = sadd.s32 %s151, %s152
        %s154 = smul.addr %s153, 8
        %s155 = scalar_lea.vmem %s0, %s154
        %s156 = smul.u32 2, %s17
      $region28: #{mbconv_block.3} parent=23 // pred_fallthru
        _
    $region24: #{mbconv_block.3} parent=5 // pred_fallthru
      _
    %p157 = scmp.le.s32.totalorder 1, %s9
    %p158 = scmp.lt.s32.totalorder %s9, 3
    %p159 = pnand %p157, %p158
    %p160 = pneg %p159
    // Predicated region
    $region29: #{mbconv_block.3} parent=5 // pred_check
      _
    $region30: #{mbconv_block.3} parent=5 // pred_check_branch
      %162 = sbr.rel (%p159) target = $region32
    $region31: #{mbconv_block.3} parent=5 // pred_region
      %s163 = ssub.s32 %s9, 1
      %s164 = smul.u32 2, %s19
      %p165 = scmp.lt.s32.totalorder %s18, 1
      %s166 = scalar_select %p165, %s18, 1
      %p167 = scmp.lt.s32.totalorder %s164, 1
      %s168 = scalar_select %p167, %s164, 1
      %s169 = smul.addr %s166, 2
      %s170 = sadd.s32 %s168, %s169
      %s171 = smul.addr %s170, 8
      %s172 = scalar_lea.vmem %s0, %s171
      %p173 = pneg %p49
      %p174 = pneg %p46
      %p175 = pneg %p70
      %p176 = pneg %p67
      %p177 = pneg %p91
      %p178 = pneg %p88
      %p179 = pneg %p119
      %p180 = pneg %p116
      %s181 = smul.u32 32, %s19
      %p182 = scmp.lt.s32.totalorder %s18, 1
      %s183 = scalar_select %p182, %s18, 1
      %p184 = scmp.lt.s32.totalorder %s181, 31
      %s185 = scalar_select %p184, %s181, 31
      %s186 = smul.addr %s183, 32
      %s187 = sadd.s32 %s185, %s186
      %s188 = smul.addr %s187, 4
      %s189 = scalar_lea.vmem %s3, %s188
      %s190 = smul.u32 2, %s19
      %p191 = scmp.lt.s32.totalorder %s18, 1
      %s192 = scalar_select %p191, %s18, 1
      %p193 = scmp.lt.s32.totalorder %s190, 1
      %s194 = scalar_select %p193, %s190, 1
      %s195 = smul.addr %s192, 2
      %s196 = sadd.s32 %s194, %s195
      %s197 = smul.addr %s196, 8
      %s198 = scalar_lea.vmem %s0, %s197
      %s199 = smul.u32 2, %s19
      %s200 = smul.u32 32, %s19
      %p201 = scmp.lt.s32.totalorder %s18, 1
      %s202 = scalar_select %p201, %s18, 1
      %p203 = scmp.lt.s32.totalorder %s200, 31
      %s204 = scalar_select %p203, %s200, 31
      %s205 = smul.addr %s202, 32
      %s206 = sadd.s32 %s204, %s205
      %s207 = smul.addr %s206, 4
      %s208 = scalar_lea.vmem %s3, %s207
      %s209 = smul.u32 32, %s19
      %v211 = vld [vmem:[%s198] sm:$0xff]
      %v212 = vld [vmem:[%s198 + $0x8] sm:$0xff]
      %v213 = vpack.c.bf16 %v211, %v211
      %v214 = vpack.c.bf16 %v212, %v212
      %v215 = vld [vmem:[%s1] sm:$0xf]
      %v216 = vld [vmem:[%s2] sm:$0x1]
      %v218 = vlaneseq
      %v219 = vshrl.u32 %v218, 7
      %v220 = vsub.s32 0, %v219
      %v221 = vrot.slane %v216, %v220
      %223 = vxpose.xlu0.c.b16.start [1/8] %v213, 128
      %224 = vxpose.xlu0.c.b16.cont [2/8] 0, 128
      %225 = vxpose.xlu0.c.b16.cont [3/8] 0, 128
      %226 = vxpose.xlu0.c.b16.cont [4/8] 0, 128
      %227 = vxpose.xlu0.c.b16.cont [5/8] 0, 128
      %228 = vxpose.xlu0.c.b16.cont [6/8] 0, 128
      %229 = vxpose.xlu0.c.b16.cont [7/8] 0, 128
      %230 = vxpose.xlu0.c.b16.end [8/8] 0, 128
      %v231 = vpop.trf.xlu0
      %v232 = vpop.trf.xlu0
      %v233 = vpop.trf.xlu0
      %v234 = vpop.trf.xlu0
      %v235 = vpop.trf.xlu0
      %v236 = vpop.trf.xlu0
      %v237 = vpop.trf.xlu0
      %v238 = vpop.trf.xlu0
      %239 = vxpose.xlu0.c.b16.start [1/8] %v214, 128
      %240 = vxpose.xlu0.c.b16.cont [2/8] 0, 128
      %241 = vxpose.xlu0.c.b16.cont [3/8] 0, 128
      %242 = vxpose.xlu0.c.b16.cont [4/8] 0, 128
      %243 = vxpose.xlu0.c.b16.cont [5/8] 0, 128
      %244 = vxpose.xlu0.c.b16.cont [6/8] 0, 128
      %245 = vxpose.xlu0.c.b16.cont [7/8] 0, 128
      %246 = vxpose.xlu0.c.b16.end [8/8] 0, 128
      %v247 = vpop.trf.xlu0
      %v248 = vpop.trf.xlu0
      %v249 = vpop.trf.xlu0
      %v250 = vpop.trf.xlu0
      %v251 = vpop.trf.xlu0
      %v252 = vpop.trf.xlu0
      %v253 = vpop.trf.xlu0
      %v254 = vpop.trf.xlu0
      %vm255 = vcmask 64512
      %v257 = vsel %vm255, %v231, 0
      %v260 = vsel %vm255, %v232, 0
      %v263 = vsel %vm255, %v233, 0
      %v266 = vsel %vm255, %v234, 0
      %v269 = vsel %vm255, %v235, 0
      %v272 = vsel %vm255, %v236, 0
      %v275 = vsel %vm255, %v237, 0
      %v278 = vsel %vm255, %v238, 0
      %v281 = vsel %vm255, %v247, 0
      %v284 = vsel %vm255, %v248, 0
      %v287 = vsel %vm255, %v249, 0
      %v290 = vsel %vm255, %v250, 0
      %v293 = vsel %vm255, %v251, 0
      %v296 = vsel %vm255, %v252, 0
      %v299 = vsel %vm255, %v253, 0
      %v302 = vsel %vm255, %v254, 0
      %vm304 = vcmask 1043456
      %v306 = vsel %vm304, %v215, 0
      %308 = vmatprep.subr.bf16.mxu0 0
      %309 = vmatpush1.bf16.msra.mxu0 0
      %310 = vmatprep.subr.bf16.mxu0 0
      %311 = vmatpush1.bf16.msra.mxu0 0
      %312 = vmatprep.subr.bf16.mxu0 0
      %313 = vmatpush1.bf16.msra.mxu0 0
      %314 = vmatprep.subr.bf16.mxu0 0
      %315 = vmatpush1.bf16.msra.mxu0 0
      %316 = vmatprep.subr.bf16.mxu0 0
      %317 = vmatpush1.bf16.msra.mxu0 0
      %318 = vmatprep.subr.bf16.mxu0 0
      %319 = vmatpush1.bf16.msra.mxu0 0
      %320 = vmatprep.subr.bf16.mxu0 0
      %321 = vmatpush1.bf16.msra.mxu0 0
      %322 = vmatprep.subr.bf16.mxu0 0
      %323 = vmatpush1.bf16.msra.mxu0 %v306
      %324 = vmatprep.subr.bf16.mxu0 0
      %325 = vmatpush2.bf16.msra.mxu0 0
      %326 = vmatprep.subr.bf16.mxu0 0
      %327 = vmatpush2.bf16.msra.mxu0 0
      %328 = vmatprep.subr.bf16.mxu0 0
      %329 = vmatpush2.bf16.msra.mxu0 0
      %330 = vmatprep.subr.bf16.mxu0 0
      %331 = vmatpush2.bf16.msra.mxu0 0
      %332 = vmatprep.subr.bf16.mxu0 0
      %333 = vmatpush2.bf16.msra.mxu0 0
      %334 = vmatprep.subr.bf16.mxu0 0
      %335 = vmatpush2.bf16.msra.mxu0 0
      %336 = vmatprep.subr.bf16.mxu0 0
      %337 = vmatpush2.bf16.msra.mxu0 0
      %338 = vmatprep.subr.bf16.mxu0 0
      %339 = vmatpush2.bf16.msra.mxu0 0
      %340 = vmatprep.mubr.bf16.mxu0 0
      %341 = vmatmul.mubr.bf16.gmra.mxu0 %v257
      %v342 = vpop.f32.mrf.mxu0
      %v343 = vadd.f32 %v221, %v342
      %v344 = vpop.f32.mrf.mxu0
      %v345 = vpop.f32.mrf.mxu0
      %v346 = vadd.f32 %v221, %v345
      %v347 = vpop.f32.mrf.mxu0
      %348 = vmatprep.mubr.bf16.mxu0 0
      %349 = vmatmul.mubr.bf16.gmra.mxu0 %v260
      %v350 = vpop.f32.mrf.mxu0
      %v351 = vadd.f32 %v221, %v350
      %v352 = vpop.f32.mrf.mxu0
      %v353 = vpop.f32.mrf.mxu0
      %v354 = vadd.f32 %v221, %v353
      %v355 = vpop.f32.mrf.mxu0
      %356 = vmatprep.mubr.bf16.mxu0 0
      %357 = vmatmul.mubr.bf16.gmra.mxu0 %v263
      %v358 = vpop.f32.mrf.mxu0
      %v359 = vadd.f32 %v221, %v358
      %v360 = vpop.f32.mrf.mxu0
      %v361 = vpop.f32.mrf.mxu0
      %v362 = vadd.f32 %v221, %v361
      %v363 = vpop.f32.mrf.mxu0
      %364 = vmatprep.mubr.bf16.mxu0 0
      %365 = vmatmul.mubr.bf16.gmra.mxu0 %v266
      %v366 = vpop.f32.mrf.mxu0
      %v367 = vadd.f32 %v221, %v366
      %v368 = vpop.f32.mrf.mxu0
      %v369 = vpop.f32.mrf.mxu0
      %v370 = vadd.f32 %v221, %v369
      %v371 = vpop.f32.mrf.mxu0
      %372 = vmatprep.mubr.bf16.mxu0 0
      %373 = vmatmul.mubr.bf16.gmra.mxu0 %v269
      %v374 = vpop.f32.mrf.mxu0
      %v375 = vadd.f32 %v221, %v374
      %v376 = vpop.f32.mrf.mxu0
      %v377 = vpop.f32.mrf.mxu0
      %v378 = vadd.f32 %v221, %v377
      %v379 = vpop.f32.mrf.mxu0
      %380 = vmatprep.mubr.bf16.mxu0 0
      %381 = vmatmul.mubr.bf16.gmra.mxu0 %v272
      %v382 = vpop.f32.mrf.mxu0
      %v383 = vadd.f32 %v221, %v382
      %v384 = vpop.f32.mrf.mxu0
      %v385 = vpop.f32.mrf.mxu0
      %v386 = vadd.f32 %v221, %v385
      %v387 = vpop.f32.mrf.mxu0
      %388 = vmatprep.mubr.bf16.mxu0 0
      %389 = vmatmul.mubr.bf16.gmra.mxu0 %v275
      %v390 = vpop.f32.mrf.mxu0
      %v391 = vadd.f32 %v221, %v390
      %v392 = vpop.f32.mrf.mxu0
      %v393 = vpop.f32.mrf.mxu0
      %v394 = vadd.f32 %v221, %v393
      %v395 = vpop.f32.mrf.mxu0
      %396 = vmatprep.mubr.bf16.mxu0 0
      %397 = vmatmul.mubr.bf16.gmra.mxu0 %v278
      %v398 = vpop.f32.mrf.mxu0
      %v399 = vadd.f32 %v221, %v398
      %v400 = vpop.f32.mrf.mxu0
      %v401 = vpop.f32.mrf.mxu0
      %v402 = vadd.f32 %v221, %v401
      %v403 = vpop.f32.mrf.mxu0
      %404 = vmatprep.mubr.bf16.mxu0 0
      %405 = vmatmul.mubr.bf16.gmra.mxu0 %v281
      %v406 = vpop.f32.mrf.mxu0
      %v407 = vadd.f32 %v221, %v406
      %v408 = vpop.f32.mrf.mxu0
      %v409 = vpop.f32.mrf.mxu0
      %v410 = vadd.f32 %v221, %v409
      %v411 = vpop.f32.mrf.mxu0
      %412 = vmatprep.mubr.bf16.mxu0 0
      %413 = vmatmul.mubr.bf16.gmra.mxu0 %v284
      %v414 = vpop.f32.mrf.mxu0
      %v415 = vadd.f32 %v221, %v414
      %v416 = vpop.f32.mrf.mxu0
      %v417 = vpop.f32.mrf.mxu0
      %v418 = vadd.f32 %v221, %v417
      %v419 = vpop.f32.mrf.mxu0
      %420 = vmatprep.mubr.bf16.mxu0 0
      %421 = vmatmul.mubr.bf16.gmra.mxu0 %v287
      %v422 = vpop.f32.mrf.mxu0
      %v423 = vadd.f32 %v221, %v422
      %v424 = vpop.f32.mrf.mxu0
      %v425 = vpop.f32.mrf.mxu0
      %v426 = vadd.f32 %v221, %v425
      %v427 = vpop.f32.mrf.mxu0
      %428 = vmatprep.mubr.bf16.mxu0 0
      %429 = vmatmul.mubr.bf16.gmra.mxu0 %v290
      %v430 = vpop.f32.mrf.mxu0
      %v431 = vadd.f32 %v221, %v430
      %v432 = vpop.f32.mrf.mxu0
      %v433 = vpop.f32.mrf.mxu0
      %v434 = vadd.f32 %v221, %v433
      %v435 = vpop.f32.mrf.mxu0
      %436 = vmatprep.mubr.bf16.mxu0 0
      %437 = vmatmul.mubr.bf16.gmra.mxu0 %v293
      %v438 = vpop.f32.mrf.mxu0
      %v439 = vadd.f32 %v221, %v438
      %v440 = vpop.f32.mrf.mxu0
      %v441 = vpop.f32.mrf.mxu0
      %v442 = vadd.f32 %v221, %v441
      %v443 = vpop.f32.mrf.mxu0
      %444 = vmatprep.mubr.bf16.mxu0 0
      %445 = vmatmul.mubr.bf16.gmra.mxu0 %v296
      %v446 = vpop.f32.mrf.mxu0
      %v447 = vadd.f32 %v221, %v446
      %v448 = vpop.f32.mrf.mxu0
      %v449 = vpop.f32.mrf.mxu0
      %v450 = vadd.f32 %v221, %v449
      %v451 = vpop.f32.mrf.mxu0
      %452 = vmatprep.mubr.bf16.mxu0 0
      %453 = vmatmul.mubr.bf16.gmra.mxu0 %v299
      %v454 = vpop.f32.mrf.mxu0
      %v455 = vadd.f32 %v221, %v454
      %v456 = vpop.f32.mrf.mxu0
      %v457 = vpop.f32.mrf.mxu0
      %v458 = vadd.f32 %v221, %v457
      %v459 = vpop.f32.mrf.mxu0
      %460 = vmatprep.mubr.bf16.mxu0 0
      %461 = vmatmul.mubr.bf16.gmra.mxu0 %v302
      %v462 = vpop.f32.mrf.mxu0
      %v463 = vadd.f32 %v221, %v462
      %v464 = vpop.f32.mrf.mxu0
      %v465 = vpop.f32.mrf.mxu0
      %v466 = vadd.f32 %v221, %v465
      %v467 = vpop.f32.mrf.mxu0
      %468 = vdwg.mxu0
      %v469 = vxor.u32 %v343, 2147483648
      %v470 = vxor.u32 %v346, 2147483648
      %v471 = vxor.u32 %v351, 2147483648
      %v472 = vxor.u32 %v354, 2147483648
      %v473 = vxor.u32 %v359, 2147483648
      %v474 = vxor.u32 %v362, 2147483648
      %v475 = vxor.u32 %v367, 2147483648
      %v476 = vxor.u32 %v370, 2147483648
      %v477 = vxor.u32 %v375, 2147483648
      %v478 = vxor.u32 %v378, 2147483648
      %v479 = vxor.u32 %v383, 2147483648
      %v480 = vxor.u32 %v386, 2147483648
      %v481 = vxor.u32 %v391, 2147483648
      %v482 = vxor.u32 %v394, 2147483648
      %v483 = vxor.u32 %v399, 2147483648
      %v484 = vxor.u32 %v402, 2147483648
      %v485 = vxor.u32 %v407, 2147483648
      %v486 = vxor.u32 %v410, 2147483648
      %v487 = vxor.u32 %v415, 2147483648
      %v488 = vxor.u32 %v418, 2147483648
      %v489 = vxor.u32 %v423, 2147483648
      %v490 = vxor.u32 %v426, 2147483648
      %v491 = vxor.u32 %v431, 2147483648
      %v492 = vxor.u32 %v434, 2147483648
      %v493 = vxor.u32 %v439, 2147483648
      %v494 = vxor.u32 %v442, 2147483648
      %v495 = vxor.u32 %v447, 2147483648
      %v496 = vxor.u32 %v450, 2147483648
      %v497 = vxor.u32 %v455, 2147483648
      %v498 = vxor.u32 %v458, 2147483648
      %v499 = vxor.u32 %v463, 2147483648
      %v500 = vxor.u32 %v466, 2147483648
      %v501 = vmul.f32 %v469, 1.442695
      %v502 = vpow.pop %v501
      %v503 = vmul.f32 %v470, 1.442695
      %v504 = vpow.pop %v503
      %v505 = vmul.f32 %v471, 1.442695
      %v506 = vpow.pop %v505
      %v507 = vmul.f32 %v472, 1.442695
      %v508 = vpow.pop %v507
      %v509 = vmul.f32 %v473, 1.442695
      %v510 = vpow.pop %v509
      %v511 = vmul.f32 %v474, 1.442695
      %v512 = vpow.pop %v511
      %v513 = vmul.f32 %v475, 1.442695
      %v514 = vpow.pop %v513
      %v515 = vmul.f32 %v476, 1.442695
      %v516 = vpow.pop %v515
      %v517 = vmul.f32 %v477, 1.442695
      %v518 = vpow.pop %v517
      %v519 = vmul.f32 %v478, 1.442695
      %v520 = vpow.pop %v519
      %v521 = vmul.f32 %v479, 1.442695
      %v522 = vpow.pop %v521
      %v523 = vmul.f32 %v480, 1.442695
      %v524 = vpow.pop %v523
      %v525 = vmul.f32 %v481, 1.442695
      %v526 = vpow.pop %v525
      %v527 = vmul.f32 %v482, 1.442695
      %v528 = vpow.pop %v527
      %v529 = vmul.f32 %v483, 1.442695
      %v530 = vpow.pop %v529
      %v531 = vmul.f32 %v484, 1.442695
      %v532 = vpow.pop %v531
      %v533 = vmul.f32 %v485, 1.442695
      %v534 = vpow.pop %v533
      %v535 = vmul.f32 %v486, 1.442695
      %v536 = vpow.pop %v535
      %v537 = vmul.f32 %v487, 1.442695
      %v538 = vpow.pop %v537
      %v539 = vmul.f32 %v488, 1.442695
      %v540 = vpow.pop %v539
      %v541 = vmul.f32 %v489, 1.442695
      %v542 = vpow.pop %v541
      %v543 = vmul.f32 %v490, 1.442695
      %v544 = vpow.pop %v543
      %v545 = vmul.f32 %v491, 1.442695
      %v546 = vpow.pop %v545
      %v547 = vmul.f32 %v492, 1.442695
      %v548 = vpow.pop %v547
      %v549 = vmul.f32 %v493, 1.442695
      %v550 = vpow.pop %v549
      %v551 = vmul.f32 %v494, 1.442695
      %v552 = vpow.pop %v551
      %v553 = vmul.f32 %v495, 1.442695
      %v554 = vpow.pop %v553
      %v555 = vmul.f32 %v496, 1.442695
      %v556 = vpow.pop %v555
      %v557 = vmul.f32 %v497, 1.442695
      %v558 = vpow.pop %v557
      %v559 = vmul.f32 %v498, 1.442695
      %v560 = vpow.pop %v559
      %v561 = vmul.f32 %v499, 1.442695
      %v562 = vpow.pop %v561
      %v563 = vmul.f32 %v500, 1.442695
      %v564 = vpow.pop %v563
      %v565 = vadd.f32 %v502, 1.0
      %v566 = vadd.f32 %v504, 1.0
      %v567 = vadd.f32 %v506, 1.0
      %v568 = vadd.f32 %v508, 1.0
      %v569 = vadd.f32 %v510, 1.0
      %v570 = vadd.f32 %v512, 1.0
      %v571 = vadd.f32 %v514, 1.0
      %v572 = vadd.f32 %v516, 1.0
      %v573 = vadd.f32 %v518, 1.0
      %v574 = vadd.f32 %v520, 1.0
      %v575 = vadd.f32 %v522, 1.0
      %v576 = vadd.f32 %v524, 1.0
      %v577 = vadd.f32 %v526, 1.0
      %v578 = vadd.f32 %v528, 1.0
      %v579 = vadd.f32 %v530, 1.0
      %v580 = vadd.f32 %v532, 1.0
      %v581 = vadd.f32 %v534, 1.0
      %v582 = vadd.f32 %v536, 1.0
      %v583 = vadd.f32 %v538, 1.0
      %v584 = vadd.f32 %v540, 1.0
      %v585 = vadd.f32 %v542, 1.0
      %v586 = vadd.f32 %v544, 1.0
      %v587 = vadd.f32 %v546, 1.0
      %v588 = vadd.f32 %v548, 1.0
      %v589 = vadd.f32 %v550, 1.0
      %v590 = vadd.f32 %v552, 1.0
      %v591 = vadd.f32 %v554, 1.0
      %v592 = vadd.f32 %v556, 1.0
      %v593 = vadd.f32 %v558, 1.0
      %v594 = vadd.f32 %v560, 1.0
      %v595 = vadd.f32 %v562, 1.0
      %v596 = vadd.f32 %v564, 1.0
      %v597 = vrcp.pop %v565
      %v598 = vmul.f32 1.0, %v597
      %v599 = vrcp.pop %v566
      %v600 = vmul.f32 1.0, %v599
      %v601 = vrcp.pop %v567
      %v602 = vmul.f32 1.0, %v601
      %v603 = vrcp.pop %v568
      %v604 = vmul.f32 1.0, %v603
      %v605 = vrcp.pop %v569
      %v606 = vmul.f32 1.0, %v605
      %v607 = vrcp.pop %v570
      %v608 = vmul.f32 1.0, %v607
      %v609 = vrcp.pop %v571
      %v610 = vmul.f32 1.0, %v609
      %v611 = vrcp.pop %v572
      %v612 = vmul.f32 1.0, %v611
      %v613 = vrcp.pop %v573
      %v614 = vmul.f32 1.0, %v613
      %v615 = vrcp.pop %v574
      %v616 = vmul.f32 1.0, %v615
      %v617 = vrcp.pop %v575
      %v618 = vmul.f32 1.0, %v617
      %v619 = vrcp.pop %v576
      %v620 = vmul.f32 1.0, %v619
      %v621 = vrcp.pop %v577
      %v622 = vmul.f32 1.0, %v621
      %v623 = vrcp.pop %v578
      %v624 = vmul.f32 1.0, %v623
      %v625 = vrcp.pop %v579
      %v626 = vmul.f32 1.0, %v625
      %v627 = vrcp.pop %v580
      %v628 = vmul.f32 1.0, %v627
      %v629 = vrcp.pop %v581
      %v630 = vmul.f32 1.0, %v629
      %v631 = vrcp.pop %v582
      %v632 = vmul.f32 1.0, %v631
      %v633 = vrcp.pop %v583
      %v634 = vmul.f32 1.0, %v633
      %v635 = vrcp.pop %v584
      %v636 = vmul.f32 1.0, %v635
      %v637 = vrcp.pop %v585
      %v638 = vmul.f32 1.0, %v637
      %v639 = vrcp.pop %v586
      %v640 = vmul.f32 1.0, %v639
      %v641 = vrcp.pop %v587
      %v642 = vmul.f32 1.0, %v641
      %v643 = vrcp.pop %v588
      %v644 = vmul.f32 1.0, %v643
      %v645 = vrcp.pop %v589
      %v646 = vmul.f32 1.0, %v645
      %v647 = vrcp.pop %v590
      %v648 = vmul.f32 1.0, %v647
      %v649 = vrcp.pop %v591
      %v650 = vmul.f32 1.0, %v649
      %v651 = vrcp.pop %v592
      %v652 = vmul.f32 1.0, %v651
      %v653 = vrcp.pop %v593
      %v654 = vmul.f32 1.0, %v653
      %v655 = vrcp.pop %v594
      %v656 = vmul.f32 1.0, %v655
      %v657 = vrcp.pop %v595
      %v658 = vmul.f32 1.0, %v657
      %v659 = vrcp.pop %v596
      %v660 = vmul.f32 1.0, %v659
      %v661 = vmul.f32 %v343, %v598
      %v662 = vmul.f32 %v346, %v600
      %v663 = vmul.f32 %v351, %v602
      %v664 = vmul.f32 %v354, %v604
      %v665 = vmul.f32 %v359, %v606
      %v666 = vmul.f32 %v362, %v608
      %v667 = vmul.f32 %v367, %v610
      %v668 = vmul.f32 %v370, %v612
      %v669 = vmul.f32 %v375, %v614
      %v670 = vmul.f32 %v378, %v616
      %v671 = vmul.f32 %v383, %v618
      %v672 = vmul.f32 %v386, %v620
      %v673 = vmul.f32 %v391, %v622
      %v674 = vmul.f32 %v394, %v624
      %v675 = vmul.f32 %v399, %v626
      %v676 = vmul.f32 %v402, %v628
      %v677 = vmul.f32 %v407, %v630
      %v678 = vmul.f32 %v410, %v632
      %v679 = vmul.f32 %v415, %v634
      %v680 = vmul.f32 %v418, %v636
      %v681 = vmul.f32 %v423, %v638
      %v682 = vmul.f32 %v426, %v640
      %v683 = vmul.f32 %v431, %v642
      %v684 = vmul.f32 %v434, %v644
      %v685 = vmul.f32 %v439, %v646
      %v686 = vmul.f32 %v442, %v648
      %v687 = vmul.f32 %v447, %v650
      %v688 = vmul.f32 %v450, %v652
      %v689 = vmul.f32 %v455, %v654
      %v690 = vmul.f32 %v458, %v656
      %v691 = vmul.f32 %v463, %v658
      %v692 = vmul.f32 %v466, %v660
      %v693 = vpack.c.bf16 %v662, %v661
      %v694 = vpack.c.bf16 %v664, %v663
      %v695 = vpack.c.bf16 %v666, %v665
      %v696 = vpack.c.bf16 %v668, %v667
      %v697 = vpack.c.bf16 %v670, %v669
      %v698 = vpack.c.bf16 %v672, %v671
      %v699 = vpack.c.bf16 %v674, %v673
      %v700 = vpack.c.bf16 %v676, %v675
      %v701 = vpack.c.bf16 %v678, %v677
      %v702 = vpack.c.bf16 %v680, %v679
      %v703 = vpack.c.bf16 %v682, %v681
      %v704 = vpack.c.bf16 %v684, %v683
      %v705 = vpack.c.bf16 %v686, %v685
      %v706 = vpack.c.bf16 %v688, %v687
      %v707 = vpack.c.bf16 %v690, %v689
      %v708 = vpack.c.bf16 %v692, %v691
      %v725 = vunpack.c.l.b16 %v693
      %v726 = vunpack.c.h.b16 %v693
      %v727 = vunpack.c.l.b16 %v694
      %v728 = vunpack.c.h.b16 %v694
      %v729 = vunpack.c.l.b16 %v695
      %v730 = vunpack.c.h.b16 %v695
      %v731 = vunpack.c.l.b16 %v696
      %v732 = vunpack.c.h.b16 %v696
      %v733 = vunpack.c.l.b16 %v697
      %v734 = vunpack.c.h.b16 %v697
      %v735 = vunpack.c.l.b16 %v698
      %v736 = vunpack.c.h.b16 %v698
      %v737 = vunpack.c.l.b16 %v699
      %v738 = vunpack.c.h.b16 %v699
      %v739 = vunpack.c.l.b16 %v700
      %v740 = vunpack.c.h.b16 %v700
      %v741 = vunpack.c.l.b16 %v701
      %v742 = vunpack.c.h.b16 %v701
      %v743 = vunpack.c.l.b16 %v702
      %v744 = vunpack.c.h.b16 %v702
      %v745 = vunpack.c.l.b16 %v703
      %v746 = vunpack.c.h.b16 %v703
      %v747 = vunpack.c.l.b16 %v704
      %v748 = vunpack.c.h.b16 %v704
      %v749 = vunpack.c.l.b16 %v705
      %v750 = vunpack.c.h.b16 %v705
      %v751 = vunpack.c.l.b16 %v706
      %v752 = vunpack.c.h.b16 %v706
      %v753 = vunpack.c.l.b16 %v707
      %v754 = vunpack.c.h.b16 %v707
      %v755 = vunpack.c.l.b16 %v708
      %v756 = vunpack.c.h.b16 %v708
      %v757 = vpack.c.b16 %v725, %v725
      %v758 = vpack.c.b16 %v726, %v726
      %v759 = vpack.c.b16 %v727, %v727
      %v760 = vpack.c.b16 %v728, %v728
      %v761 = vpack.c.b16 %v729, %v729
      %v762 = vpack.c.b16 %v730, %v730
      %v763 = vpack.c.b16 %v731, %v731
      %v764 = vpack.c.b16 %v732, %v732
      %v765 = vpack.c.b16 %v733, %v733
      %v766 = vpack.c.b16 %v734, %v734
      %v767 = vpack.c.b16 %v735, %v735
      %v768 = vpack.c.b16 %v736, %v736
      %v769 = vpack.c.b16 %v737, %v737
      %v770 = vpack.c.b16 %v738, %v738
      %v771 = vpack.c.b16 %v739, %v739
      %v772 = vpack.c.b16 %v740, %v740
      %v773 = vpack.c.b16 %v741, %v741
      %v774 = vpack.c.b16 %v742, %v742
      %v775 = vpack.c.b16 %v743, %v743
      %v776 = vpack.c.b16 %v744, %v744
      %v777 = vpack.c.b16 %v745, %v745
      %v778 = vpack.c.b16 %v746, %v746
      %v779 = vpack.c.b16 %v747, %v747
      %v780 = vpack.c.b16 %v748, %v748
      %v781 = vpack.c.b16 %v749, %v749
      %v782 = vpack.c.b16 %v750, %v750
      %v783 = vpack.c.b16 %v751, %v751
      %v784 = vpack.c.b16 %v752, %v752
      %v785 = vpack.c.b16 %v753, %v753
      %v786 = vpack.c.b16 %v754, %v754
      %v787 = vpack.c.b16 %v755, %v755
      %v788 = vpack.c.b16 %v756, %v756
      %vm821 = vcmask 257024
      %822 = vst.msk [vmem:[%s208] sm:$0xf] %vm821, %v757
      %823 = vst.msk [vmem:[%s208 + $0x4] sm:$0xf] %vm821, %v758
      %824 = vst.msk [vmem:[%s208 + $0x8] sm:$0xf] %vm821, %v759
      %825 = vst.msk [vmem:[%s208 + $0xc] sm:$0xf] %vm821, %v760
      %826 = vst.msk [vmem:[%s208 + $0x10] sm:$0xf] %vm821, %v761
      %827 = vst.msk [vmem:[%s208 + $0x14] sm:$0xf] %vm821, %v762
      %828 = vst.msk [vmem:[%s208 + $0x18] sm:$0xf] %vm821, %v763
      %829 = vst.msk [vmem:[%s208 + $0x1c] sm:$0xf] %vm821, %v764
      %830 = vst.msk [vmem:[%s208 + $0x20] sm:$0xf] %vm821, %v765
      %831 = vst.msk [vmem:[%s208 + $0x24] sm:$0xf] %vm821, %v766
      %832 = vst.msk [vmem:[%s208 + $0x28] sm:$0xf] %vm821, %v767
      %833 = vst.msk [vmem:[%s208 + $0x2c] sm:$0xf] %vm821, %v768
      %834 = vst.msk [vmem:[%s208 + $0x30] sm:$0xf] %vm821, %v769
      %835 = vst.msk [vmem:[%s208 + $0x34] sm:$0xf] %vm821, %v770
      %836 = vst.msk [vmem:[%s208 + $0x38] sm:$0xf] %vm821, %v771
      %837 = vst.msk [vmem:[%s208 + $0x3c] sm:$0xf] %vm821, %v772
      %838 = vst.msk [vmem:[%s208 + $0x40] sm:$0xf] %vm821, %v773
      %839 = vst.msk [vmem:[%s208 + $0x44] sm:$0xf] %vm821, %v774
      %840 = vst.msk [vmem:[%s208 + $0x48] sm:$0xf] %vm821, %v775
      %841 = vst.msk [vmem:[%s208 + $0x4c] sm:$0xf] %vm821, %v776
      %842 = vst.msk [vmem:[%s208 + $0x50] sm:$0xf] %vm821, %v777
      %843 = vst.msk [vmem:[%s208 + $0x54] sm:$0xf] %vm821, %v778
      %844 = vst.msk [vmem:[%s208 + $0x58] sm:$0xf] %vm821, %v779
      %845 = vst.msk [vmem:[%s208 + $0x5c] sm:$0xf] %vm821, %v780
      %846 = vst.msk [vmem:[%s208 + $0x60] sm:$0xf] %vm821, %v781
      %847 = vst.msk [vmem:[%s208 + $0x64] sm:$0xf] %vm821, %v782
      %848 = vst.msk [vmem:[%s208 + $0x68] sm:$0xf] %vm821, %v783
      %849 = vst.msk [vmem:[%s208 + $0x6c] sm:$0xf] %vm821, %v784
      %850 = vst.msk [vmem:[%s208 + $0x70] sm:$0xf] %vm821, %v785
      %851 = vst.msk [vmem:[%s208 + $0x74] sm:$0xf] %vm821, %v786
      %852 = vst.msk [vmem:[%s208 + $0x78] sm:$0xf] %vm821, %v787
      %853 = vst.msk [vmem:[%s208 + $0x7c] sm:$0xf] %vm821, %v788
      %s854 = smul.u32 32, %s19
      %p855 = scmp.lt.s32.totalorder %s18, 1
      %s856 = scalar_select %p855, %s18, 1
      %p857 = scmp.lt.s32.totalorder %s854, 31
      %s858 = scalar_select %p857, %s854, 31
      %s859 = smul.addr %s856, 32
      %s860 = sadd.s32 %s858, %s859
      %s861 = smul.addr %s860, 4
      %s862 = scalar_lea.vmem %s3, %s861
      // Predicated region
      $region33: #{mbconv_block.3} parent=31 // pred_check
        %p863 = pneg %p116
      $region34: #{mbconv_block.3} parent=31 // pred_check_branch
        %865 = sbr.rel (%p863) target = $region36
      $region35: #{mbconv_block.3} parent=31 // pred_region
        %s866 = smul.u32 32, %s19
      $region36: #{mbconv_block.3} parent=31 // pred_fallthru
        _
    $region32: #{mbconv_block.3} parent=5 // pred_fallthru
      _
    %p867 = scmp.le.s32.totalorder 2, %s9
    // Predicated region
    $region37: #{mbconv_block.3} parent=5 // pred_check
      %p868 = pneg %p867
    $region38: #{mbconv_block.3} parent=5 // pred_check_branch
      %870 = sbr.rel (%p868) target = $region40
    $region39: #{mbconv_block.3} parent=5 // pred_region
      %s871 = ssub.s32 %s9, 2
      // Predicated region
      $region41: #{mbconv_block.3} parent=39 // pred_check
        %p872 = pneg %p122
      $region42: #{mbconv_block.3} parent=39 // pred_check_branch
        %874 = sbr.rel (%p872) target = $region44
      $region43: #{mbconv_block.3} parent=39 // pred_region
        %s875 = smul.u32 32, %s21
        %p876 = scmp.lt.s32.totalorder %s20, 1
        %s877 = scalar_select %p876, %s20, 1
        %p878 = scmp.lt.s32.totalorder %s875, 31
        %s879 = scalar_select %p878, %s875, 31
        %s880 = smul.addr %s877, 32
        %s881 = sadd.s32 %s879, %s880
        %s882 = smul.addr %s881, 4
        %s883 = scalar_lea.vmem %s3, %s882
      $region44: #{mbconv_block.3} parent=39 // pred_fallthru
        _
    $region40: #{mbconv_block.3} parent=5 // pred_fallthru
      _
  $region6: #{mbconv_block.3} parent=0 // loop_footer
    %s13 = sadd.s32 1, %s9
  $region7: #{mbconv_block.3} parent=0 // loop_footer_branch
    %8 = sbr.rel target = $region3
  $region8: #{mbconv_block.3} parent=0 // loop_exit
    _

// kernel: mbconv_block.4
$region0: #{mbconv_block.4}
  #allocation0 [shape = 'u32[]', space=smem, size = 0x4, offset = 0x4, fixed_abs, tag = 'smem constant byte address 0x4 - core index']
  #allocation1 [shape = 'u32[144,128]{1,0:T(1,128)}', space=vmem, size = 0x12000, scoped, tag = 'internal scratch']
  %s0 = inlined_call_operand.vmem [shape: bf16[2,16,16,32], index: 0, kind: input, shape index: {}]
  %s1 = inlined_call_operand.vmem [shape: f32[3,3,32], index: 1, kind: input, shape index: {}]
  %s2 = inlined_call_operand.vmem [shape: f32[1,32], index: 2, kind: input, shape index: {}]
  %s3 = inlined_call_operand.vmem [shape: bf16[2,16,16,32], index: 3, kind: output, shape index: {0}]
  %s4 = inlined_call_operand.vmem [shape: f32[2,1,32], index: 4, kind: output, shape index: {1}]
  %5 = xla_tuple %s3, %s4
  %s6 = sld [smem:[#allocation0]]
  $region53: #{mbconv_block.4} parent=0
    _
  %s8 = ssub.s32 1, %s6
  %s9 = scalar_select 0, %s8, %s6
  loop: start=0, step=1, limit=4
  $region2: #{mbconv_block.4} parent=0 // loop_pre_header
    _
  $region3: #{mbconv_block.4} parent=0 // loop_header
    %s11 = sphi 0, %s15
    %p12 = scmp.ge.s32.totalorder %s11, 4
    %s21 = sphi 0, %s23
    %s24 = sphi 0, %s21
    %s25 = sphi 0, %s24
    %s41 = sphi 0, %s25
    %s45 = sphi 0, %s45
    %s47 = sphi 0, %s45
    %s48 = sphi 0, %s47
    %s62 = sphi 0, %s48
    %s66 = sphi 0, %s66
    %s68 = sphi 0, %s66
    %s69 = sphi 0, %s68
    %s83 = sphi 0, %s69
    %s89 = sphi 0, %s91
    %s92 = sphi 0, %s89
    %s93 = sphi 0, %s92
    %s109 = sphi 0, %s93
    %s115 = sphi 0, %s117
    %s118 = sphi 0, %s115
    %s119 = sphi 0, %s118
    %s135 = sphi 0, %s119
  $region4: #{mbconv_block.4} parent=0 // loop_header_branch
    %14 = sbr.rel (%p12) target = $region8
  $region5: #{mbconv_block.4} parent=0 // loop_body
    %s16 = ssub.s32 %s11, 1
    %s17 = ssub.s32 %s11, 2
    %s18 = sadd.s32 %s11, 1
    %s19 = ssub.s32 %s11, %s18
    %p20 = scmp.eq.s32.totalorder %s19, 0
    %s22 = sadd.s32 %s21, 1
    %s23 = scalar_select %p20, %s21, %s22
    %p26 = pneg %p20
    %p27 = scmp.eq.s32.totalorder %s11, 1
    %p28 = por %p26, %p27
    %p29 = scmp.ne.s32.totalorder %s21, %s24
    %p30 = scmp.eq.s32.totalorder %s11, 0
    %p31 = por %p29, %p30
    %p32 = scmp.ne.s32.totalorder %s21, %s24
    %p33 = scmp.eq.s32.totalorder %s16, 1
    %p34 = por %p32, %p33
    %p35 = scmp.ne.s32.totalorder %s24, %s25
    %p36 = scmp.eq.s32.totalorder %s16, 0
    %p37 = por %p35, %p36
    %p38 = scmp.ne.s32.totalorder %s24, %s25
    %p39 = scmp.eq.s32.totalorder %s17, 1
    %p40 = por %p38, %p39
    %p42 = scmp.ne.s32.totalorder %s25, %s41
    %p43 = scmp.eq.s32.totalorder %s17, 0
    %p44 = por %p42, %p43
    %s46 = sadd.s32 %s45, 1
    %p49 = scmp.eq.s32.totalorder %s11, 1
    %p50 = scmp.ne.s32.totalorder %s45, %s47
    %p51 = scmp.eq.s32.totalorder %s11, 0
    %p52 = por %p50, %p51
    %p53 = scmp.ne.s32.totalorder %s45, %s47
    %p54 = scmp.eq.s32.totalorder %s16, 1
    %p55 = por %p53, %p54
    %p56 = scmp.ne.s32.totalorder %s47, %s48
    %p57 = scmp.eq.s32.totalorder %s16, 0
    %p58 = por %p56, %p57
    %p59 = scmp.ne.s32.totalorder %s47, %s48
    %p60 = scmp.eq.s32.totalorder %s17, 1
    %p61 = por %p59, %p60
    %p63 = scmp.ne.s32.totalorder %s48, %s62
    %p64 = scmp.eq.s32.totalorder %s17, 0
    %p65 = por %p63, %p64
    %s67 = sadd.s32 %s66, 1
    %p70 = scmp.eq.s32.totalorder %s11, 1
    %p71 = scmp.ne.s32.totalorder %s66, %s68
    %p72 = scmp.eq.s32.totalorder %s11, 0
    %p73 = por %p71, %p72
    %p74 = scmp.ne.s32.totalorder %s66, %s68
    %p75 = scmp.eq.s32.totalorder %s16, 1
    %p76 = por %p74, %p75
    %p77 = scmp.ne.s32.totalorder %s68, %s69
    %p78 = scmp.eq.s32.totalorder %s16, 0
    %p79 = por %p77, %p78
    %p80 = scmp.ne.s32.totalorder %s68, %s69
    %p81 = scmp.eq.s32.totalorder %s17, 1
    %p82 = por %p80, %p81
    %p84 = scmp.ne.s32.totalorder %s69, %s83
    %p85 = scmp.eq.s32.totalorder %s17, 0
    %p86 = por %p84, %p85
    %s87 = ssub.s32 %s11, %s18
    %p88 = scmp.eq.s32.totalorder %s87, 0
    %s90 = sadd.s32 %s89, 1
    %s91 = scalar_select %p88, %s89, %s90
    %p94 = pneg %p88
    %p95 = scmp.eq.s32.totalorder %s11, 1
    %p96 = por %p94, %p95
    %p97 = scmp.ne.s32.totalorder %s89, %s92
    %p98 = scmp.eq.s32.totalorder %s11, 0
    %p99 = por %p97, %p98
    %p100 = scmp.ne.s32.totalorder %s89, %s92
    %p101 = scmp.eq.s32.totalorder %s16, 1
    %p102 = por %p100, %p101
    %p103 = scmp.ne.s32.totalorder %s92, %s93
    %p104 = scmp.eq.s32.totalorder %s16, 0
    %p105 = por %p103, %p104
    %p106 = scmp.ne.s32.totalorder %s92, %s93
    %p107 = scmp.eq.s32.totalorder %s17, 1
    %p108 = por %p106, %p107
    %p110 = scmp.ne.s32.totalorder %s93, %s109
    %p111 = scmp.eq.s32.totalorder %s17, 0
    %p112 = por %p110, %p111
    %s113 = ssub.s32 %s11, %s18
    %p114 = scmp.eq.s32.totalorder %s113, 0
    %s116 = sadd.s32 %s115, 1
    %s117 = scalar_select %p114, %s115, %s116
    %p120 = pneg %p114
    %p121 = scmp.eq.s32.totalorder %s11, 1
    %p122 = por %p120, %p121
    %p123 = scmp.ne.s32.totalorder %s115, %s118
    %p124 = scmp.eq.s32.totalorder %s11, 0
    %p125 = por %p123, %p124
    %p126 = scmp.ne.s32.totalorder %s115, %s118
    %p127 = scmp.eq.s32.totalorder %s16, 1
    %p128 = por %p126, %p127
    %p129 = scmp.ne.s32.totalorder %s118, %s119
    %p130 = scmp.eq.s32.totalorder %s16, 0
    %p131 = por %p129, %p130
    %p132 = scmp.ne.s32.totalorder %s118, %s119
    %p133 = scmp.eq.s32.totalorder %s17, 1
    %p134 = por %p132, %p133
    %p136 = scmp.ne.s32.totalorder %s119, %s135
    %p137 = scmp.eq.s32.totalorder %s17, 0
    %p138 = por %p136, %p137
    %p139 = scmp.le.s32.totalorder 1, %s11
    %p140 = scmp.lt.s32.totalorder %s11, 3
    %p141 = pnand %p139, %p140
    %p142 = pneg %p141
    // Predicated region
    $region9: #{mbconv_block.4} parent=5 // pred_check
      _
    $region10: #{mbconv_block.4} parent=5 // pred_check_branch
      %144 = sbr.rel (%p141) target = $region12
    $region11: #{mbconv_block.4} parent=5 // pred_region
      %s145 = ssub.s32 %s11, 1
      // Predicated region
      $region13: #{mbconv_block.4} parent=11 // pred_check
        %p146 = pneg %p58
      $region14: #{mbconv_block.4} parent=11 // pred_check_branch
        %148 = sbr.rel (%p146) target = $region16
      $region15: #{mbconv_block.4} parent=11 // pred_region
        _
      $region16: #{mbconv_block.4} parent=11 // pred_fallthru
        _
      // Predicated region
      $region17: #{mbconv_block.4} parent=11 // pred_check
        %p149 = pneg %p79
      $region18: #{mbconv_block.4} parent=11 // pred_check_branch
        %151 = sbr.rel (%p149) target = $region20
      $region19: #{mbconv_block.4} parent=11 // pred_region
        _
      $region20: #{mbconv_block.4} parent=11 // pred_fallthru
        _
    $region12: #{mbconv_block.4} parent=5 // pred_fallthru
      _
    %p152 = scmp.lt.s32.totalorder %s11, 2
    // Predicated region
    $region21: #{mbconv_block.4} parent=5 // pred_check
      %p153 = pneg %p152
    $region22: #{mbconv_block.4} parent=5 // pred_check_branch
      %155 = sbr.rel (%p153) target = $region24
    $region23: #{mbconv_block.4} parent=5 // pred_region
      // Predicated region
      $region25: #{mbconv_block.4} parent=23 // pred_check
        %p156 = pneg %p31
      $region26: #{mbconv_block.4} parent=23 // pred_check_branch
        %158 = sbr.rel (%p156) target = $region28
      $region27: #{mbconv_block.4} parent=23 // pred_region
        %p159 = scmp.lt.s32.totalorder %s11, 1
        %s160 = scalar_select %p159, %s11, 1
        %s161 = smul.addr %s160, 32
        %s162 = smul.addr %s161, 4
        %s163 = scalar_lea.vmem %s0, %s162
      $region28: #{mbconv_block.4} parent=23 // pred_fallthru
        _
    $region24: #{mbconv_block.4} parent=5 // pred_fallthru
      _
    %p164 = scmp.le.s32.totalorder 1, %s11
    %p165 = scmp.lt.s32.totalorder %s11, 3
    %p166 = pnand %p164, %p165
    %p167 = pneg %p166
    // Predicated region
    $region29: #{mbconv_block.4} parent=5 // pred_check
      _
    $region30: #{mbconv_block.4} parent=5 // pred_check_branch
      %169 = sbr.rel (%p166) target = $region32
    $region31: #{mbconv_block.4} parent=5 // pred_region
      %s170 = ssub.s32 %s11, 1
      %p171 = scmp.lt.s32.totalorder %s16, 1
      %s172 = scalar_select %p171, %s16, 1
      %s173 = smul.addr %s172, 32
      %s174 = smul.addr %s173, 4
      %s175 = scalar_lea.vmem %s0, %s174
      %p176 = pneg %p37
      %p177 = pneg %p34
      %p178 = pneg %p58
      %p179 = pneg %p55
      %p180 = pneg %p79
      %p181 = pneg %p76
      %p182 = pneg %p105
      %p183 = pneg %p102
      %p184 = scmp.lt.s32.totalorder %s16, 1
      %s185 = scalar_select %p184, %s16, 1
      %s186 = smul.addr %s185, 32
      %s187 = smul.addr %s186, 4
      %s188 = scalar_lea.vmem %s3, %s187
      %p189 = pneg %p131
      %p190 = pneg %p128
      %p191 = scmp.lt.s32.totalorder %s16, 1
      %s192 = scalar_select %p191, %s16, 1
      %s193 = scalar_lea.vmem %s4, %s192
      %p194 = scmp.lt.s32.totalorder %s16, 1
      %s195 = scalar_select %p194, %s16, 1
      %s196 = smul.addr %s195, 32
      %s197 = smul.addr %s196, 4
      %s198 = scalar_lea.vmem %s0, %s197
      %p199 = scmp.lt.s32.totalorder %s16, 1
      %s200 = scalar_select %p199, %s16, 1
      %s201 = smul.addr %s200, 32
      %s202 = smul.addr %s201, 4
      %s203 = scalar_lea.vmem %s3, %s202
      %p204 = scmp.lt.s32.totalorder %s16, 1
      %s205 = scalar_select %p204, %s16, 1
      %s206 = scalar_lea.vmem %s4, %s205
      %v207 = vld [vmem:[%s198] sm:$0xf]
      %v208 = vld [vmem:[%s198 + $0x4] sm:$0xf]
      %v209 = vld [vmem:[%s198 + $0x8] sm:$0xf]
      %v210 = vld [vmem:[%s198 + $0xc] sm:$0xf]
      %v211 = vld [vmem:[%s198 + $0x10] sm:$0xf]
      %v212 = vld [vmem:[%s198 + $0x14] sm:$0xf]
      %v213 = vld [vmem:[%s198 + $0x18] sm:$0xf]
      %v214 = vld [vmem:[%s198 + $0x1c] sm:$0xf]
      %v215 = vld [vmem:[%s198 + $0x20] sm:$0xf]
      %v216 = vld [vmem:[%s198 + $0x24] sm:$0xf]
      %v217 = vld [vmem:[%s198 + $0x28] sm:$0xf]
      %v218 = vld [vmem:[%s198 + $0x2c] sm:$0xf]
      %v219 = vld [vmem:[%s198 + $0x30] sm:$0xf]
      %v220 = vld [vmem:[%s198 + $0x34] sm:$0xf]
      %v221 = vld [vmem:[%s198 + $0x38] sm:$0xf]
      %v222 = vld [vmem:[%s198 + $0x3c] sm:$0xf]
      %v223 = vld [vmem:[%s198 + $0x40] sm:$0xf]
      %v224 = vld [vmem:[%s198 + $0x44] sm:$0xf]
      %v225 = vld [vmem:[%s198 + $0x48] sm:$0xf]
      %v226 = vld [vmem:[%s198 + $0x4c] sm:$0xf]
      %v227 = vld [vmem:[%s198 + $0x50] sm:$0xf]
      %v228 = vld [vmem:[%s198 + $0x54] sm:$0xf]
      %v229 = vld [vmem:[%s198 + $0x58] sm:$0xf]
      %v230 = vld [vmem:[%s198 + $0x5c] sm:$0xf]
      %v231 = vld [vmem:[%s198 + $0x60] sm:$0xf]
      %v232 = vld [vmem:[%s198 + $0x64] sm:$0xf]
      %v233 = vld [vmem:[%s198 + $0x68] sm:$0xf]
      %v234 = vld [vmem:[%s198 + $0x6c] sm:$0xf]
      %v235 = vld [vmem:[%s198 + $0x70] sm:$0xf]
      %v236 = vld [vmem:[%s198 + $0x74] sm:$0xf]
      %v237 = vld [vmem:[%s198 + $0x78] sm:$0xf]
      %v238 = vld [vmem:[%s198 + $0x7c] sm:$0xf]
      %v239 = vunpack.c.l.bf16 %v207
      %v240 = vunpack.c.l.bf16 %v208
      %v241 = vunpack.c.l.bf16 %v209
      %v242 = vunpack.c.l.bf16 %v210
      %v243 = vunpack.c.l.bf16 %v211
      %v244 = vunpack.c.l.bf16 %v212
      %v245 = vunpack.c.l.bf16 %v213
      %v246 = vunpack.c.l.bf16 %v214
      %v247 = vunpack.c.l.bf16 %v215
      %v248 = vunpack.c.l.bf16 %v216
      %v249 = vunpack.c.l.bf16 %v217
      %v250 = vunpack.c.l.bf16 %v218
      %v251 = vunpack.c.l.bf16 %v219
      %v252 = vunpack.c.l.bf16 %v220
      %v253 = vunpack.c.l.bf16 %v221
      %v254 = vunpack.c.l.bf16 %v222
      %v255 = vunpack.c.l.bf16 %v223
      %v256 = vunpack.c.l.bf16 %v224
      %v257 = vunpack.c.l.bf16 %v225
      %v258 = vunpack.c.l.bf16 %v226
      %v259 = vunpack.c.l.bf16 %v227
      %v260 = vunpack.c.l.bf16 %v228
      %v261 = vunpack.c.l.bf16 %v229
      %v262 = vunpack.c.l.bf16 %v230
      %v263 = vunpack.c.l.bf16 %v231
      %v264 = vunpack.c.l.bf16 %v232
      %v265 = vunpack.c.l.bf16 %v233
      %v266 = vunpack.c.l.bf16 %v234
      %v267 = vunpack.c.l.bf16 %v235
      %v268 = vunpack.c.l.bf16 %v236
      %v269 = vunpack.c.l.bf16 %v237
      %v270 = vunpack.c.l.bf16 %v238
      %vm304 = vcmask 1040384
      %v305 = vrot.slane 0.0, 7
      %v306 = vsel %vm304, %v305, %v305
      %v307 = vrot.slane %v239, 7
      %v308 = vrot.slane %v240, 7
      %v309 = vsel %vm304, %v307, %v308
      %v310 = vrot.slane %v241, 7
      %v311 = vrot.slane %v242, 7
      %v312 = vsel %vm304, %v310, %v311
      %v313 = vrot.slane %v243, 7
      %v314 = vrot.slane %v244, 7
      %v315 = vsel %vm304, %v313, %v314
      %v316 = vrot.slane %v245, 7
      %v317 = vrot.slane %v246, 7
      %v318 = vsel %vm304, %v316, %v317
      %v319 = vrot.slane %v247, 7
      %v320 = vrot.slane %v248, 7
      %v321 = vsel %vm304, %v319, %v320
      %v322 = vrot.slane %v249, 7
      %v323 = vrot.slane %v250, 7
      %v324 = vsel %vm304, %v322, %v323
      %v325 = vrot.slane %v251, 7
      %v326 = vrot.slane %v252, 7
      %v327 = vsel %vm304, %v325, %v326
      %v328 = vrot.slane %v253, 7
      %v329 = vrot.slane %v254, 7
      %v330 = vsel %vm304, %v328, %v329
      %v331 = vrot.slane %v255, 7
      %v332 = vrot.slane %v256, 7
      %v333 = vsel %vm304, %v331, %v332
      %v334 = vrot.slane %v257, 7
      %v335 = vrot.slane %v258, 7
      %v336 = vsel %vm304, %v334, %v335
      %v337 = vrot.slane %v259, 7
      %v338 = vrot.slane %v260, 7
      %v339 = vsel %vm304, %v337, %v338
      %v340 = vrot.slane %v261, 7
      %v341 = vrot.slane %v262, 7
      %v342 = vsel %vm304, %v340, %v341
      %v343 = vrot.slane %v263, 7
      %v344 = vrot.slane %v264, 7
      %v345 = vsel %vm304, %v343, %v344
      %v346 = vrot.slane %v265, 7
      %v347 = vrot.slane %v266, 7
      %v348 = vsel %vm304, %v346, %v347
      %v349 = vrot.slane %v267, 7
      %v350 = vrot.slane %v268, 7
      %v351 = vsel %vm304, %v349, %v350
      %v352 = vrot.slane %v269, 7
      %v353 = vrot.slane %v270, 7
      %v354 = vsel %vm304, %v352, %v353
      %v405 = vsel %vm304, 0.0, %v305
      %v406 = vsel %vm304, 0.0, %v307
      %v407 = vsel %vm304, 0.0, %v310
      %v408 = vsel %vm304, 0.0, %v313
      %v409 = vsel %vm304, 0.0, %v316
      %v410 = vsel %vm304, 0.0, %v319
      %v411 = vsel %vm304, 0.0, %v322
      %v412 = vsel %vm304, 0.0, %v325
      %v413 = vsel %vm304, 0.0, %v328
      %v414 = vsel %vm304, 0.0, %v331
      %v415 = vsel %vm304, 0.0, %v334
      %v416 = vsel %vm304, 0.0, %v337
      %v417 = vsel %vm304, 0.0, %v340
      %v418 = vsel %vm304, 0.0, %v343
      %v419 = vsel %vm304, 0.0, %v346
      %v420 = vsel %vm304, 0.0, %v349
      %v421 = vsel %vm304, 0.0, %v352
      %v422 = vsel %vm304, %v305, 0.0
      %v423 = vsel %vm304, %v308, 0.0
      %v424 = vsel %vm304, %v311, 0.0
      %v425 = vsel %vm304, %v314, 0.0
      %v426 = vsel %vm304, %v317, 0.0
      %v427 = vsel %vm304, %v320, 0.0
      %v428 = vsel %vm304, %v323, 0.0
      %v429 = vsel %vm304, %v326, 0.0
      %v430 = vsel %vm304, %v329, 0.0
      %v431 = vsel %vm304, %v332, 0.0
      %v432 = vsel %vm304, %v335, 0.0
      %v433 = vsel %vm304, %v338, 0.0
      %v434 = vsel %vm304, %v341, 0.0
      %v435 = vsel %vm304, %v344, 0.0
      %v436 = vsel %vm304, %v347, 0.0
      %v437 = vsel %vm304, %v350, 0.0
      %v438 = vsel %vm304, %v353, 0.0
      %v439 = vld [vmem:[%s1] sm:$0x1]
      %v440 = vlaneseq
      %v441 = vshrl.u32 %v440, 7
      %v442 = vsub.s32 0, %v441
      %v443 = vrot.slane %v439, %v442
      %v444 = vmul.f32 %v405, %v443
      %v445 = vmul.f32 %v306, %v443
      %v446 = vmul.f32 %v406, %v443
      %v447 = vmul.f32 %v309, %v443
      %v448 = vmul.f32 %v407, %v443
      %v449 = vmul.f32 %v312, %v443
      %v450 = vmul.f32 %v408, %v443
      %v451 = vmul.f32 %v315, %v443
      %v452 = vmul.f32 %v409, %v443
      %v453 = vmul.f32 %v318, %v443
      %v454 = vmul.f32 %v410, %v443
      %v455 = vmul.f32 %v321, %v443
      %v456 = vmul.f32 %v411, %v443
      %v457 = vmul.f32 %v324, %v443
      %v458 = vmul.f32 %v412, %v443
      %v459 = vmul.f32 %v327, %v443
      %v460 = vmul.f32 %v413, %v443
      %v461 = vmul.f32 %v330, %v443
      %v462 = vmul.f32 %v414, %v443
      %v463 = vmul.f32 %v333, %v443
      %v464 = vmul.f32 %v415, %v443
      %v465 = vmul.f32 %v336, %v443
      %v466 = vmul.f32 %v416, %v443
      %v467 = vmul.f32 %v339, %v443
      %v468 = vmul.f32 %v417, %v443
      %v469 = vmul.f32 %v342, %v443
      %v470 = vmul.f32 %v418, %v443
      %v471 = vmul.f32 %v345, %v443
      %v472 = vmul.f32 %v419, %v443
      %v473 = vmul.f32 %v348, %v443
      %v474 = vmul.f32 %v420, %v443
      %v475 = vmul.f32 %v351, %v443
      %v476 = vadd.f32 %v444, 0.0
      %v477 = vadd.f32 %v445, 0.0
      %v478 = vadd.f32 %v446, 0.0
      %v479 = vadd.f32 %v447, 0.0
      %v480 = vadd.f32 %v448, 0.0
      %v481 = vadd.f32 %v449, 0.0
      %v482 = vadd.f32 %v450, 0.0
      %v483 = vadd.f32 %v451, 0.0
      %v484 = vadd.f32 %v452, 0.0
      %v485 = vadd.f32 %v453, 0.0
      %v486 = vadd.f32 %v454, 0.0
      %v487 = vadd.f32 %v455, 0.0
      %v488 = vadd.f32 %v456, 0.0
      %v489 = vadd.f32 %v457, 0.0
      %v490 = vadd.f32 %v458, 0.0
      %v491 = vadd.f32 %v459, 0.0
      %v492 = vadd.f32 %v460, 0.0
      %v493 = vadd.f32 %v461, 0.0
      %v494 = vadd.f32 %v462, 0.0
      %v495 = vadd.f32 %v463, 0.0
      %v496 = vadd.f32 %v464, 0.0
      %v497 = vadd.f32 %v465, 0.0
      %v498 = vadd.f32 %v466, 0.0
      %v499 = vadd.f32 %v467, 0.0
      %v500 = vadd.f32 %v468, 0.0
      %v501 = vadd.f32 %v469, 0.0
      %v502 = vadd.f32 %v470, 0.0
      %v503 = vadd.f32 %v471, 0.0
      %v504 = vadd.f32 %v472, 0.0
      %v505 = vadd.f32 %v473, 0.0
      %v506 = vadd.f32 %v474, 0.0
      %v507 = vadd.f32 %v475, 0.0
      %v508 = vld [vmem:[%s1 + $0x1] sm:$0x1]
      %v509 = vlaneseq
      %v510 = vshrl.u32 %v509, 7
      %v511 = vsub.s32 0, %v510
      %v512 = vrot.slane %v508, %v511
      %v513 = vmul.f32 %v405, %v512
      %v514 = vmul.f32 %v306, %v512
      %v515 = vmul.f32 %v422, %v512
      %v516 = vmul.f32 %v406, %v512
      %v517 = vmul.f32 %v309, %v512
      %v518 = vmul.f32 %v423, %v512
      %v519 = vmul.f32 %v407, %v512
      %v520 = vmul.f32 %v312, %v512
      %v521 = vmul.f32 %v424, %v512
      %v522 = vmul.f32 %v408, %v512
      %v523 = vmul.f32 %v315, %v512
      %v524 = vmul.f32 %v425, %v512
      %v525 = vmul.f32 %v409, %v512
      %v526 = vmul.f32 %v318, %v512
      %v527 = vmul.f32 %v426, %v512
      %v528 = vmul.f32 %v410, %v512
      %v529 = vmul.f32 %v321, %v512
      %v530 = vmul.f32 %v427, %v512
      %v531 = vmul.f32 %v411, %v512
      %v532 = vmul.f32 %v324, %v512
      %v533 = vmul.f32 %v428, %v512
      %v534 = vmul.f32 %v412, %v512
      %v535 = vmul.f32 %v327, %v512
      %v536 = vmul.f32 %v429, %v512
      %v537 = vmul.f32 %v413, %v512
      %v538 = vmul.f32 %v330, %v512
      %v539 = vmul.f32 %v430, %v512
      %v540 = vmul.f32 %v414, %v512
      %v541 = vmul.f32 %v333, %v512
      %v542 = vmul.f32 %v431, %v512
      %v543 = vmul.f32 %v415, %v512
      %v544 = vmul.f32 %v336, %v512
      %v545 = vmul.f32 %v432, %v512
      %v546 = vmul.f32 %v416, %v512
      %v547 = vmul.f32 %v339, %v512
      %v548 = vmul.f32 %v433, %v512
      %v549 = vmul.f32 %v417, %v512
      %v550 = vmul.f32 %v342, %v512
      %v551 = vmul.f32 %v434, %v512
      %v552 = vmul.f32 %v418, %v512
      %v553 = vmul.f32 %v345, %v512
      %v554 = vmul.f32 %v435, %v512
      %v555 = vmul.f32 %v419, %v512
      %v556 = vmul.f32 %v348, %v512
      %v557 = vmul.f32 %v436, %v512
      %v558 = vmul.f32 %v420, %v512
      %v559 = vmul.f32 %v351, %v512
      %v560 = vmul.f32 %v437, %v512
      %vm609 = vcmask 1046528
      %v610 = vrot.slane %v513, 1
      %v611 = vrot.slane %v514, 1
      %v612 = vsel %vm609, %v610, %v611
      %v613 = vrot.slane %v515, 1
      %v614 = vsel %vm609, %v611, %v613
      %v615 = vrot.slane %v516, 1
      %v616 = vrot.slane %v517, 1
      %v617 = vsel %vm609, %v615, %v616
      %v618 = vrot.slane %v518, 1
      %v619 = vsel %vm609, %v616, %v618
      %v620 = vrot.slane %v519, 1
      %v621 = vrot.slane %v520, 1
      %v622 = vsel %vm609, %v620, %v621
      %v623 = vrot.slane %v521, 1
      %v624 = vsel %vm609, %v621, %v623
      %v625 = vrot.slane %v522, 1
      %v626 = vrot.slane %v523, 1
      %v627 = vsel %vm609, %v625, %v626
      %v628 = vrot.slane %v524, 1
      %v629 = vsel %vm609, %v626, %v628
      %v630 = vrot.slane %v525, 1
      %v631 = vrot.slane %v526, 1
      %v632 = vsel %vm609, %v630, %v631
      %v633 = vrot.slane %v527, 1
      %v634 = vsel %vm609, %v631, %v633
      %v635 = vrot.slane %v528, 1
      %v636 = vrot.slane %v529, 1
      %v637 = vsel %vm609, %v635, %v636
      %v638 = vrot.slane %v530, 1
      %v639 = vsel %vm609, %v636, %v638
      %v640 = vrot.slane %v531, 1
      %v641 = vrot.slane %v532, 1
      %v642 = vsel %vm609, %v640, %v641
      %v643 = vrot.slane %v533, 1
      %v644 = vsel %vm609, %v641, %v643
      %v645 = vrot.slane %v534, 1
      %v646 = vrot.slane %v535, 1
      %v647 = vsel %vm609, %v645, %v646
      %v648 = vrot.slane %v536, 1
      %v649 = vsel %vm609, %v646, %v648
      %v650 = vrot.slane %v537, 1
      %v651 = vrot.slane %v538, 1
      %v652 = vsel %vm609, %v650, %v651
      %v653 = vrot.slane %v539, 1
      %v654 = vsel %vm609, %v651, %v653
      %v655 = vrot.slane %v540, 1
      %v656 = vrot.slane %v541, 1
      %v657 = vsel %vm609, %v655, %v656
      %v658 = vrot.slane %v542, 1
      %v659 = vsel %vm609, %v656, %v658
      %v660 = vrot.slane %v543, 1
      %v661 = vrot.slane %v544, 1
      %v662 = vsel %vm609, %v660, %v661
      %v663 = vrot.slane %v545, 1
      %v664 = vsel %vm609, %v661, %v663
      %v665 = vrot.slane %v546, 1
      %v666 = vrot.slane %v547, 1
      %v667 = vsel %vm609, %v665, %v666
      %v668 = vrot.slane %v548, 1
      %v669 = vsel %vm609, %v666, %v668
      %v670 = vrot.slane %v549, 1
      %v671 = vrot.slane %v550, 1
      %v672 = vsel %vm609, %v670, %v671
      %v673 = vrot.slane %v551, 1
      %v674 = vsel %vm609, %v671, %v673
      %v675 = vrot.slane %v552, 1
      %v676 = vrot.slane %v553, 1
      %v677 = vsel %vm609, %v675, %v676
      %v678 = vrot.slane %v554, 1
      %v679 = vsel %vm609, %v676, %v678
      %v680 = vrot.slane %v555, 1
      %v681 = vrot.slane %v556, 1
      %v682 = vsel %vm609, %v680, %v681
      %v683 = vrot.slane %v557, 1
      %v684 = vsel %vm609, %v681, %v683
      %v685 = vrot.slane %v558, 1
      %v686 = vrot.slane %v559, 1
      %v687 = vsel %vm609, %v685, %v686
      %v688 = vrot.slane %v560, 1
      %v689 = vsel %vm609, %v686, %v688
      %v722 = vadd.f32 %v476, %v612
      %v723 = vadd.f32 %v477, %v614
      %v724 = vadd.f32 %v478, %v617
      %v725 = vadd.f32 %v479, %v619
      %v726 = vadd.f32 %v480, %v622
      %v727 = vadd.f32 %v481, %v624
      %v728 = vadd.f32 %v482, %v627
      %v729 = vadd.f32 %v483, %v629
      %v730 = vadd.f32 %v484, %v632
      %v731 = vadd.f32 %v485, %v634
      %v732 = vadd.f32 %v486, %v637
      %v733 = vadd.f32 %v487, %v639
      %v734 = vadd.f32 %v488, %v642
      %v735 = vadd.f32 %v489, %v644
      %v736 = vadd.f32 %v490, %v647
      %v737 = vadd.f32 %v491, %v649
      %v738 = vadd.f32 %v492, %v652
      %v739 = vadd.f32 %v493, %v654
      %v740 = vadd.f32 %v494, %v657
      %v741 = vadd.f32 %v495, %v659
      %v742 = vadd.f32 %v496, %v662
      %v743 = vadd.f32 %v497, %v664
      %v744 = vadd.f32 %v498, %v667
      %v745 = vadd.f32 %v499, %v669
      %v746 = vadd.f32 %v500, %v672
      %v747 = vadd.f32 %v501, %v674
      %v748 = vadd.f32 %v502, %v677
      %v749 = vadd.f32 %v503, %v679
      %v750 = vadd.f32 %v504, %v682
      %v751 = vadd.f32 %v505, %v684
      %v752 = vadd.f32 %v506, %v687
      %v753 = vadd.f32 %v507, %v689
      %v754 = vld [vmem:[%s1 + $0x2] sm:$0x1]
      %v755 = vlaneseq
      %v756 = vshrl.u32 %v755, 7
      %v757 = vsub.s32 0, %v756
      %v758 = vrot.slane %v754, %v757
      %v759 = vmul.f32 %v405, %v758
      %v760 = vmul.f32 %v306, %v758
      %v761 = vmul.f32 %v422, %v758
      %v762 = vmul.f32 %v406, %v758
      %v763 = vmul.f32 %v309, %v758
      %v764 = vmul.f32 %v423, %v758
      %v765 = vmul.f32 %v407, %v758
      %v766 = vmul.f32 %v312, %v758
      %v767 = vmul.f32 %v424, %v758
      %v768 = vmul.f32 %v408, %v758
      %v769 = vmul.f32 %v315, %v758
      %v770 = vmul.f32 %v425, %v758
      %v771 = vmul.f32 %v409, %v758
      %v772 = vmul.f32 %v318, %v758
      %v773 = vmul.f32 %v426, %v758
      %v774 = vmul.f32 %v410, %v758
      %v775 = vmul.f32 %v321, %v758
      %v776 = vmul.f32 %v427, %v758
      %v777 = vmul.f32 %v411, %v758
      %v778 = vmul.f32 %v324, %v758
      %v779 = vmul.f32 %v428, %v758
      %v780 = vmul.f32 %v412, %v758
      %v781 = vmul.f32 %v327, %v758
      %v782 = vmul.f32 %v429, %v758
      %v783 = vmul.f32 %v413, %v758
      %v784 = vmul.f32 %v330, %v758
      %v785 = vmul.f32 %v430, %v758
      %v786 = vmul.f32 %v414, %v758
      %v787 = vmul.f32 %v333, %v758
      %v788 = vmul.f32 %v431, %v758
      %v789 = vmul.f32 %v415, %v758
      %v790 = vmul.f32 %v336, %v758
      %v791 = vmul.f32 %v432, %v758
      %v792 = vmul.f32 %v416, %v758
      %v793 = vmul.f32 %v339, %v758
      %v794 = vmul.f32 %v433, %v758
      %v795 = vmul.f32 %v417, %v758
      %v796 = vmul.f32 %v342, %v758
      %v797 = vmul.f32 %v434, %v758
      %v798 = vmul.f32 %v418, %v758
      %v799 = vmul.f32 %v345, %v758
      %v800 = vmul.f32 %v435, %v758
      %v801 = vmul.f32 %v419, %v758
      %v802 = vmul.f32 %v348, %v758
      %v803 = vmul.f32 %v436, %v758
      %v804 = vmul.f32 %v420, %v758
      %v805 = vmul.f32 %v351, %v758
      %v806 = vmul.f32 %v437, %v758
      %vm855 = vcmask 1045504
      %v856 = vrot.slane %v759, 2
      %v857 = vrot.slane %v760, 2
      %v858 = vsel %vm855, %v856, %v857
      %v859 = vrot.slane %v761, 2
      %v860 = vsel %vm855, %v857, %v859
      %v861 = vrot.slane %v762, 2
      %v862 = vrot.slane %v763, 2
      %v863 = vsel %vm855, %v861, %v862
      %v864 = vrot.slane %v764, 2
      %v865 = vsel %vm855, %v862, %v864
      %v866 = vrot.slane %v765, 2
      %v867 = vrot.slane %v766, 2
      %v868 = vsel %vm855, %v866, %v867
      %v869 = vrot.slane %v767, 2
      %v870 = vsel %vm855, %v867, %v869
      %v871 = vrot.slane %v768, 2
      %v872 = vrot.slane %v769, 2
      %v873 = vsel %vm855, %v871, %v872
      %v874 = vrot.slane %v770, 2
      %v875 = vsel %vm855, %v872, %v874
      %v876 = vrot.slane %v771, 2
      %v877 = vrot.slane %v772, 2
      %v878 = vsel %vm855, %v876, %v877
      %v879 = vrot.slane %v773, 2
      %v880 = vsel %vm855, %v877, %v879
      %v881 = vrot.slane %v774, 2
      %v882 = vrot.slane %v775, 2
      %v883 = vsel %vm855, %v881, %v882
      %v884 = vrot.slane %v776, 2
      %v885 = vsel %vm855, %v882, %v884
      %v886 = vrot.slane %v777, 2
      %v887 = vrot.slane %v778, 2
      %v888 = vsel %vm855, %v886, %v887
      %v889 = vrot.slane %v779, 2
      %v890 = vsel %vm855, %v887, %v889
      %v891 = vrot.slane %v780, 2
      %v892 = vrot.slane %v781, 2
      %v893 = vsel %vm855, %v891, %v892
      %v894 = vrot.slane %v782, 2
      %v895 = vsel %vm855, %v892, %v894
      %v896 = vrot.slane %v783, 2
      %v897 = vrot.slane %v784, 2
      %v898 = vsel %vm855, %v896, %v897
      %v899 = vrot.slane %v785, 2
      %v900 = vsel %vm855, %v897, %v899
      %v901 = vrot.slane %v786, 2
      %v902 = vrot.slane %v787, 2
      %v903 = vsel %vm855, %v901, %v902
      %v904 = vrot.slane %v788, 2
      %v905 = vsel %vm855, %v902, %v904
      %v906 = vrot.slane %v789, 2
      %v907 = vrot.slane %v790, 2
      %v908 = vsel %vm855, %v906, %v907
      %v909 = vrot.slane %v791, 2
      %v910 = vsel %vm855, %v907, %v909
      %v911 = vrot.slane %v792, 2
      %v912 = vrot.slane %v793, 2
      %v913 = vsel %vm855, %v911, %v912
      %v914 = vrot.slane %v794, 2
      %v915 = vsel %vm855, %v912, %v914
      %v916 = vrot.slane %v795, 2
      %v917 = vrot.slane %v796, 2
      %v918 = vsel %vm855, %v916, %v917
      %v919 = vrot.slane %v797, 2
      %v920 = vsel %vm855, %v917, %v919
      %v921 = vrot.slane %v798, 2
      %v922 = vrot.slane %v799, 2
      %v923 = vsel %vm855, %v921, %v922
      %v924 = vrot.slane %v800, 2
      %v925 = vsel %vm855, %v922, %v924
      %v926 = vrot.slane %v801, 2
      %v927 = vrot.slane %v802, 2
      %v928 = vsel %vm855, %v926, %v927
      %v929 = vrot.slane %v803, 2
      %v930 = vsel %vm855, %v927, %v929
      %v931 = vrot.slane %v804, 2
      %v932 = vrot.slane %v805, 2
      %v933 = vsel %vm855, %v931, %v932
      %v934 = vrot.slane %v806, 2
      %v935 = vsel %vm855, %v932, %v934
      %v968 = vadd.f32 %v722, %v858
      %v969 = vadd.f32 %v723, %v860
      %v970 = vadd.f32 %v724, %v863
      %v971 = vadd.f32 %v725, %v865
      %v972 = vadd.f32 %v726, %v868
      %v973 = vadd.f32 %v727, %v870
      %v974 = vadd.f32 %v728, %v873
      %v975 = vadd.f32 %v729, %v875
      %v976 = vadd.f32 %v730, %v878
      %v977 = vadd.f32 %v731, %v880
      %v978 = vadd.f32 %v732, %v883
      %v979 = vadd.f32 %v733, %v885
      %v980 = vadd.f32 %v734, %v888
      %v981 = vadd.f32 %v735, %v890
      %v982 = vadd.f32 %v736, %v893
      %v983 = vadd.f32 %v737, %v895
      %v984 = vadd.f32 %v738, %v898
      %v985 = vadd.f32 %v739, %v900
      %v986 = vadd.f32 %v740, %v903
      %v987 = vadd.f32 %v741, %v905
      %v988 = vadd.f32 %v742, %v908
      %v989 = vadd.f32 %v743, %v910
      %v990 = vadd.f32 %v744, %v913
      %v991 = vadd.f32 %v745, %v915
      %v992 = vadd.f32 %v746, %v918
      %v993 = vadd.f32 %v747, %v920
      %v994 = vadd.f32 %v748, %v923
      %v995 = vadd.f32 %v749, %v925
      %v996 = vadd.f32 %v750, %v928
      %v997 = vadd.f32 %v751, %v930
      %v998 = vadd.f32 %v752, %v933
      %v999 = vadd.f32 %v753, %v935
      %s1000 = scalar_lea.vmem %s1, 4
      %v1001 = vld [vmem:[%s1000] sm:$0x1]
      %v1002 = vlaneseq
      %v1003 = vshrl.u32 %v1002, 7
      %v1004 = vsub.s32 0, %v1003
      %v1005 = vrot.slane %v1001, %v1004
      %v1006 = vmul.f32 %v406, %v1005
      %v1007 = vmul.f32 %v309, %v1005
      %v1008 = vmul.f32 %v407, %v1005
      %v1009 = vmul.f32 %v312, %v1005
      %v1010 = vmul.f32 %v408, %v1005
      %v1011 = vmul.f32 %v315, %v1005
      %v1012 = vmul.f32 %v409, %v1005
      %v1013 = vmul.f32 %v318, %v1005
      %v1014 = vmul.f32 %v410, %v1005
      %v1015 = vmul.f32 %v321, %v1005
      %v1016 = vmul.f32 %v411, %v1005
      %v1017 = vmul.f32 %v324, %v1005
      %v1018 = vmul.f32 %v412, %v1005
      %v1019 = vmul.f32 %v327, %v1005
      %v1020 = vmul.f32 %v413, %v1005
      %v1021 = vmul.f32 %v330, %v1005
      %v1022 = vmul.f32 %v414, %v1005
      %v1023 = vmul.f32 %v333, %v1005
      %v1024 = vmul.f32 %v415, %v1005
      %v1025 = vmul.f32 %v336, %v1005
      %v1026 = vmul.f32 %v416, %v1005
      %v1027 = vmul.f32 %v339, %v1005
      %v1028 = vmul.f32 %v417, %v1005
      %v1029 = vmul.f32 %v342, %v1005
      %v1030 = vmul.f32 %v418, %v1005
      %v1031 = vmul.f32 %v345, %v1005
      %v1032 = vmul.f32 %v419, %v1005
      %v1033 = vmul.f32 %v348, %v1005
      %v1034 = vmul.f32 %v420, %v1005
      %v1035 = vmul.f32 %v351, %v1005
      %v1036 = vmul.f32 %v421, %v1005
      %v1037 = vmul.f32 %v354, %v1005
      %v1038 = vadd.f32 %v968, %v1006
      %v1039 = vadd.f32 %v969, %v1007
      %v1040 = vadd.f32 %v970, %v1008
      %v1041 = vadd.f32 %v971, %v1009
      %v1042 = vadd.f32 %v972, %v1010
      %v1043 = vadd.f32 %v973, %v1011
      %v1044 = vadd.f32 %v974, %v1012
      %v1045 = vadd.f32 %v975, %v1013
      %v1046 = vadd.f32 %v976, %v1014
      %v1047 = vadd.f32 %v977, %v1015
      %v1048 = vadd.f32 %v978, %v1016
      %v1049 = vadd.f32 %v979, %v1017
      %v1050 = vadd.f32 %v980, %v1018
      %v1051 = vadd.f32 %v981, %v1019
      %v1052 = vadd.f32 %v982, %v1020
      %v1053 = vadd.f32 %v983, %v1021
      %v1054 = vadd.f32 %v984, %v1022
      %v1055 = vadd.f32 %v985, %v1023
      %v1056 = vadd.f32 %v986, %v1024
      %v1057 = vadd.f32 %v987, %v1025
      %v1058 = vadd.f32 %v988, %v1026
      %v1059 = vadd.f32 %v989, %v1027
      %v1060 = vadd.f32 %v990, %v1028
      %v1061 = vadd.f32 %v991, %v1029
      %v1062 = vadd.f32 %v992, %v1030
      %v1063 = vadd.f32 %v993, %v1031
      %v1064 = vadd.f32 %v994, %v1032
      %v1065 = vadd.f32 %v995, %v1033
      %v1066 = vadd.f32 %v996, %v1034
      %v1067 = vadd.f32 %v997, %v1035
      %v1068 = vadd.f32 %v998, %v1036
      %v1069 = vadd.f32 %v999, %v1037
      %v1070 = vld [vmem:[%s1000 + $0x1] sm:$0x1]
      %v1071 = vlaneseq
      %v1072 = vshrl.u32 %v1071, 7
      %v1073 = vsub.s32 0, %v1072
      %v1074 = vrot.slane %v1070, %v1073
      %v1075 = vmul.f32 %v406, %v1074
      %v1076 = vmul.f32 %v309, %v1074
      %v1077 = vmul.f32 %v423, %v1074
      %v1078 = vmul.f32 %v407, %v1074
      %v1079 = vmul.f32 %v312, %v1074
      %v1080 = vmul.f32 %v424, %v1074
      %v1081 = vmul.f32 %v408, %v1074
      %v1082 = vmul.f32 %v315, %v1074
      %v1083 = vmul.f32 %v425, %v1074
      %v1084 = vmul.f32 %v409, %v1074
      %v1085 = vmul.f32 %v318, %v1074
      %v1086 = vmul.f32 %v426, %v1074
      %v1087 = vmul.f32 %v410, %v1074
      %v1088 = vmul.f32 %v321, %v1074
      %v1089 = vmul.f32 %v427, %v1074
      %v1090 = vmul.f32 %v411, %v1074
      %v1091 = vmul.f32 %v324, %v1074
      %v1092 = vmul.f32 %v428, %v1074
      %v1093 = vmul.f32 %v412, %v1074
      %v1094 = vmul.f32 %v327, %v1074
      %v1095 = vmul.f32 %v429, %v1074
      %v1096 = vmul.f32 %v413, %v1074
      %v1097 = vmul.f32 %v330, %v1074
      %v1098 = vmul.f32 %v430, %v1074
      %v1099 = vmul.f32 %v414, %v1074
      %v1100 = vmul.f32 %v333, %v1074
      %v1101 = vmul.f32 %v431, %v1074
      %v1102 = vmul.f32 %v415, %v1074
      %v1103 = vmul.f32 %v336, %v1074
      %v1104 = vmul.f32 %v432, %v1074
      %v1105 = vmul.f32 %v416, %v1074
      %v1106 = vmul.f32 %v339, %v1074
      %v1107 = vmul.f32 %v433, %v1074
      %v1108 = vmul.f32 %v417, %v1074
      %v1109 = vmul.f32 %v342, %v1074
      %v1110 = vmul.f32 %v434, %v1074
      %v1111 = vmul.f32 %v418, %v1074
      %v1112 = vmul.f32 %v345, %v1074
      %v1113 = vmul.f32 %v435, %v1074
      %v1114 = vmul.f32 %v419, %v1074
      %v1115 = vmul.f32 %v348, %v1074
      %v1116 = vmul.f32 %v436, %v1074
      %v1117 = vmul.f32 %v420, %v1074
      %v1118 = vmul.f32 %v351, %v1074
      %v1119 = vmul.f32 %v437, %v1074
      %v1120 = vmul.f32 %v421, %v1074
      %v1121 = vmul.f32 %v354, %v1074
      %v1122 = vmul.f32 %v438, %v1074
      %v1171 = vrot.slane %v1075, 1
      %v1172 = vrot.slane %v1076, 1
      %v1173 = vsel %vm609, %v1171, %v1172
      %v1174 = vrot.slane %v1077, 1
      %v1175 = vsel %vm609, %v1172, %v1174
      %v1176 = vrot.slane %v1078, 1
      %v1177 = vrot.slane %v1079, 1
      %v1178 = vsel %vm609, %v1176, %v1177
      %v1179 = vrot.slane %v1080, 1
      %v1180 = vsel %vm609, %v1177, %v1179
      %v1181 = vrot.slane %v1081, 1
      %v1182 = vrot.slane %v1082, 1
      %v1183 = vsel %vm609, %v1181, %v1182
      %v1184 = vrot.slane %v1083, 1
      %v1185 = vsel %vm609, %v1182, %v1184
      %v1186 = vrot.slane %v1084, 1
      %v1187 = vrot.slane %v1085, 1
      %v1188 = vsel %vm609, %v1186, %v1187
      %v1189 = vrot.slane %v1086, 1
      %v1190 = vsel %vm609, %v1187, %v1189
      %v1191 = vrot.slane %v1087, 1
      %v1192 = vrot.slane %v1088, 1
      %v1193 = vsel %vm609, %v1191, %v1192
      %v1194 = vrot.slane %v1089, 1
      %v1195 = vsel %vm609, %v1192, %v1194
      %v1196 = vrot.slane %v1090, 1
      %v1197 = vrot.slane %v1091, 1
      %v1198 = vsel %vm609, %v1196, %v1197
      %v1199 = vrot.slane %v1092, 1
      %v1200 = vsel %vm609, %v1197, %v1199
      %v1201 = vrot.slane %v1093, 1
      %v1202 = vrot.slane %v1094, 1
      %v1203 = vsel %vm609, %v1201, %v1202
      %v1204 = vrot.slane %v1095, 1
      %v1205 = vsel %vm609, %v1202, %v1204
      %v1206 = vrot.slane %v1096, 1
      %v1207 = vrot.slane %v1097, 1
      %v1208 = vsel %vm609, %v1206, %v1207
      %v1209 = vrot.slane %v1098, 1
      %v1210 = vsel %vm609, %v1207, %v1209
      %v1211 = vrot.slane %v1099, 1
      %v1212 = vrot.slane %v1100, 1
      %v1213 = vsel %vm609, %v1211, %v1212
      %v1214 = vrot.slane %v1101, 1
      %v1215 = vsel %vm609, %v1212, %v1214
      %v1216 = vrot.slane %v1102, 1
      %v1217 = vrot.slane %v1103, 1
      %v1218 = vsel %vm609, %v1216, %v1217
      %v1219 = vrot.slane %v1104, 1
      %v1220 = vsel %vm609, %v1217, %v1219
      %v1221 = vrot.slane %v1105, 1
      %v1222 = vrot.slane %v1106, 1
      %v1223 = vsel %vm609, %v1221, %v1222
      %v1224 = vrot.slane %v1107, 1
      %v1225 = vsel %vm609, %v1222, %v1224
      %v1226 = vrot.slane %v1108, 1
      %v1227 = vrot.slane %v1109, 1
      %v1228 = vsel %vm609, %v1226, %v1227
      %v1229 = vrot.slane %v1110, 1
      %v1230 = vsel %vm609, %v1227, %v1229
      %v1231 = vrot.slane %v1111, 1
      %v1232 = vrot.slane %v1112, 1
      %v1233 = vsel %vm609, %v1231, %v1232
      %v1234 = vrot.slane %v1113, 1
      %v1235 = vsel %vm609, %v1232, %v1234
      %v1236 = vrot.slane %v1114, 1
      %v1237 = vrot.slane %v1115, 1
      %v1238 = vsel %vm609, %v1236, %v1237
      %v1239 = vrot.slane %v1116, 1
      %v1240 = vsel %vm609, %v1237, %v1239
      %v1241 = vrot.slane %v1117, 1
      %v1242 = vrot.slane %v1118, 1
      %v1243 = vsel %vm609, %v1241, %v1242
      %v1244 = vrot.slane %v1119, 1
      %v1245 = vsel %vm609, %v1242, %v1244
      %v1246 = vrot.slane %v1120, 1
      %v1247 = vrot.slane %v1121, 1
      %v1248 = vsel %vm609, %v1246, %v1247
      %v1249 = vrot.slane %v1122, 1
      %v1250 = vsel %vm609, %v1247, %v1249
      %v1283 = vadd.f32 %v1038, %v1173
      %v1284 = vadd.f32 %v1039, %v1175
      %v1285 = vadd.f32 %v1040, %v1178
      %v1286 = vadd.f32 %v1041, %v1180
      %v1287 = vadd.f32 %v1042, %v1183
      %v1288 = vadd.f32 %v1043, %v1185
      %v1289 = vadd.f32 %v1044, %v1188
      %v1290 = vadd.f32 %v1045, %v1190
      %v1291 = vadd.f32 %v1046, %v1193
      %v1292 = vadd.f32 %v1047, %v1195
      %v1293 = vadd.f32 %v1048, %v1198
      %v1294 = vadd.f32 %v1049, %v1200
      %v1295 = vadd.f32 %v1050, %v1203
      %v1296 = vadd.f32 %v1051, %v1205
      %v1297 = vadd.f32 %v1052, %v1208
      %v1298 = vadd.f32 %v1053, %v1210
      %v1299 = vadd.f32 %v1054, %v1213
      %v1300 = vadd.f32 %v1055, %v1215
      %v1301 = vadd.f32 %v1056, %v1218
      %v1302 = vadd.f32 %v1057, %v1220
      %v1303 = vadd.f32 %v1058, %v1223
      %v1304 = vadd.f32 %v1059, %v1225
      %v1305 = vadd.f32 %v1060, %v1228
      %v1306 = vadd.f32 %v1061, %v1230
      %v1307 = vadd.f32 %v1062, %v1233
      %v1308 = vadd.f32 %v1063, %v1235
      %v1309 = vadd.f32 %v1064, %v1238
      %v1310 = vadd.f32 %v1065, %v1240
      %v1311 = vadd.f32 %v1066, %v1243
      %v1312 = vadd.f32 %v1067, %v1245
      %v1313 = vadd.f32 %v1068, %v1248
      %v1314 = vadd.f32 %v1069, %v1250
      %v1315 = vld [vmem:[%s1000 + $0x2] sm:$0x1]
      %v1316 = vlaneseq
      %v1317 = vshrl.u32 %v1316, 7
      %v1318 = vsub.s32 0, %v1317
      %v1319 = vrot.slane %v1315, %v1318
      %v1320 = vmul.f32 %v406, %v1319
      %v1321 = vmul.f32 %v309, %v1319
      %v1322 = vmul.f32 %v423, %v1319
      %v1323 = vmul.f32 %v407, %v1319
      %v1324 = vmul.f32 %v312, %v1319
      %v1325 = vmul.f32 %v424, %v1319
      %v1326 = vmul.f32 %v408, %v1319
      %v1327 = vmul.f32 %v315, %v1319
      %v1328 = vmul.f32 %v425, %v1319
      %v1329 = vmul.f32 %v409, %v1319
      %v1330 = vmul.f32 %v318, %v1319
      %v1331 = vmul.f32 %v426, %v1319
      %v1332 = vmul.f32 %v410, %v1319
      %v1333 = vmul.f32 %v321, %v1319
      %v1334 = vmul.f32 %v427, %v1319
      %v1335 = vmul.f32 %v411, %v1319
      %v1336 = vmul.f32 %v324, %v1319
      %v1337 = vmul.f32 %v428, %v1319
      %v1338 = vmul.f32 %v412, %v1319
      %v1339 = vmul.f32 %v327, %v1319
      %v1340 = vmul.f32 %v429, %v1319
      %v1341 = vmul.f32 %v413, %v1319
      %v1342 = vmul.f32 %v330, %v1319
      %v1343 = vmul.f32 %v430, %v1319
      %v1344 = vmul.f32 %v414, %v1319
      %v1345 = vmul.f32 %v333, %v1319
      %v1346 = vmul.f32 %v431, %v1319
      %v1347 = vmul.f32 %v415, %v1319
      %v1348 = vmul.f32 %v336, %v1319
      %v1349 = vmul.f32 %v432, %v1319
      %v1350 = vmul.f32 %v416, %v1319
      %v1351 = vmul.f32 %v339, %v1319
      %v1352 = vmul.f32 %v433, %v1319
      %v1353 = vmul.f32 %v417, %v1319
      %v1354 = vmul.f32 %v342, %v1319
      %v1355 = vmul.f32 %v434, %v1319
      %v1356 = vmul.f32 %v418, %v1319
      %v1357 = vmul.f32 %v345, %v1319
      %v1358 = vmul.f32 %v435, %v1319
      %v1359 = vmul.f32 %v419, %v1319
      %v1360 = vmul.f32 %v348, %v1319
      %v1361 = vmul.f32 %v436, %v1319
      %v1362 = vmul.f32 %v420, %v1319
      %v1363 = vmul.f32 %v351, %v1319
      %v1364 = vmul.f32 %v437, %v1319
      %v1365 = vmul.f32 %v421, %v1319
      %v1366 = vmul.f32 %v354, %v1319
      %v1367 = vmul.f32 %v438, %v1319
      %v1416 = vrot.slane %v1320, 2
      %v1417 = vrot.slane %v1321, 2
      %v1418 = vsel %vm855, %v1416, %v1417
      %v1419 = vrot.slane %v1322, 2
      %v1420 = vsel %vm855, %v1417, %v1419
      %v1421 = vrot.slane %v1323, 2
      %v1422 = vrot.slane %v1324, 2
      %v1423 = vsel %vm855, %v1421, %v1422
      %v1424 = vrot.slane %v1325, 2
      %v1425 = vsel %vm855, %v1422, %v1424
      %v1426 = vrot.slane %v1326, 2
      %v1427 = vrot.slane %v1327, 2
      %v1428 = vsel %vm855, %v1426, %v1427
      %v1429 = vrot.slane %v1328, 2
      %v1430 = vsel %vm855, %v1427, %v1429
      %v1431 = vrot.slane %v1329, 2
      %v1432 = vrot.slane %v1330, 2
      %v1433 = vsel %vm855, %v1431, %v1432
      %v1434 = vrot.slane %v1331, 2
      %v1435 = vsel %vm855, %v1432, %v1434
      %v1436 = vrot.slane %v1332, 2
      %v1437 = vrot.slane %v1333, 2
      %v1438 = vsel %vm855, %v1436, %v1437
      %v1439 = vrot.slane %v1334, 2
      %v1440 = vsel %vm855, %v1437, %v1439
      %v1441 = vrot.slane %v1335, 2
      %v1442 = vrot.slane %v1336, 2
      %v1443 = vsel %vm855, %v1441, %v1442
      %v1444 = vrot.slane %v1337, 2
      %v1445 = vsel %vm855, %v1442, %v1444
      %v1446 = vrot.slane %v1338, 2
      %v1447 = vrot.slane %v1339, 2
      %v1448 = vsel %vm855, %v1446, %v1447
      %v1449 = vrot.slane %v1340, 2
      %v1450 = vsel %vm855, %v1447, %v1449
      %v1451 = vrot.slane %v1341, 2
      %v1452 = vrot.slane %v1342, 2
      %v1453 = vsel %vm855, %v1451, %v1452
      %v1454 = vrot.slane %v1343, 2
      %v1455 = vsel %vm855, %v1452, %v1454
      %v1456 = vrot.slane %v1344, 2
      %v1457 = vrot.slane %v1345, 2
      %v1458 = vsel %vm855, %v1456, %v1457
      %v1459 = vrot.slane %v1346, 2
      %v1460 = vsel %vm855, %v1457, %v1459
      %v1461 = vrot.slane %v1347, 2
      %v1462 = vrot.slane %v1348, 2
      %v1463 = vsel %vm855, %v1461, %v1462
      %v1464 = vrot.slane %v1349, 2
      %v1465 = vsel %vm855, %v1462, %v1464
      %v1466 = vrot.slane %v1350, 2
      %v1467 = vrot.slane %v1351, 2
      %v1468 = vsel %vm855, %v1466, %v1467
      %v1469 = vrot.slane %v1352, 2
      %v1470 = vsel %vm855, %v1467, %v1469
      %v1471 = vrot.slane %v1353, 2
      %v1472 = vrot.slane %v1354, 2
      %v1473 = vsel %vm855, %v1471, %v1472
      %v1474 = vrot.slane %v1355, 2
      %v1475 = vsel %vm855, %v1472, %v1474
      %v1476 = vrot.slane %v1356, 2
      %v1477 = vrot.slane %v1357, 2
      %v1478 = vsel %vm855, %v1476, %v1477
      %v1479 = vrot.slane %v1358, 2
      %v1480 = vsel %vm855, %v1477, %v1479
      %v1481 = vrot.slane %v1359, 2
      %v1482 = vrot.slane %v1360, 2
      %v1483 = vsel %vm855, %v1481, %v1482
      %v1484 = vrot.slane %v1361, 2
      %v1485 = vsel %vm855, %v1482, %v1484
      %v1486 = vrot.slane %v1362, 2
      %v1487 = vrot.slane %v1363, 2
      %v1488 = vsel %vm855, %v1486, %v1487
      %v1489 = vrot.slane %v1364, 2
      %v1490 = vsel %vm855, %v1487, %v1489
      %v1491 = vrot.slane %v1365, 2
      %v1492 = vrot.slane %v1366, 2
      %v1493 = vsel %vm855, %v1491, %v1492
      %v1494 = vrot.slane %v1367, 2
      %v1495 = vsel %vm855, %v1492, %v1494
      %v1528 = vadd.f32 %v1283, %v1418
      %v1529 = vadd.f32 %v1284, %v1420
      %v1530 = vadd.f32 %v1285, %v1423
      %v1531 = vadd.f32 %v1286, %v1425
      %v1532 = vadd.f32 %v1287, %v1428
      %v1533 = vadd.f32 %v1288, %v1430
      %v1534 = vadd.f32 %v1289, %v1433
      %v1535 = vadd.f32 %v1290, %v1435
      %v1536 = vadd.f32 %v1291, %v1438
      %v1537 = vadd.f32 %v1292, %v1440
      %v1538 = vadd.f32 %v1293, %v1443
      %v1539 = vadd.f32 %v1294, %v1445
      %v1540 = vadd.f32 %v1295, %v1448
      %v1541 = vadd.f32 %v1296, %v1450
      %v1542 = vadd.f32 %v1297, %v1453
      %v1543 = vadd.f32 %v1298, %v1455
      %v1544 = vadd.f32 %v1299, %v1458
      %v1545 = vadd.f32 %v1300, %v1460
      %v1546 = vadd.f32 %v1301, %v1463
      %v1547 = vadd.f32 %v1302, %v1465
      %v1548 = vadd.f32 %v1303, %v1468
      %v1549 = vadd.f32 %v1304, %v1470
      %v1550 = vadd.f32 %v1305, %v1473
      %v1551 = vadd.f32 %v1306, %v1475
      %v1552 = vadd.f32 %v1307, %v1478
      %v1553 = vadd.f32 %v1308, %v1480
      %v1554 = vadd.f32 %v1309, %v1483
      %v1555 = vadd.f32 %v1310, %v1485
      %v1556 = vadd.f32 %v1311, %v1488
      %v1557 = vadd.f32 %v1312, %v1490
      %v1558 = vadd.f32 %v1313, %v1493
      %v1559 = vadd.f32 %v1314, %v1495
      %s1560 = scalar_lea.vmem %s1, 8
      %v1561 = vld [vmem:[%s1560] sm:$0x1]
      %v1562 = vlaneseq
      %v1563 = vshrl.u32 %v1562, 7
      %v1564 = vsub.s32 0, %v1563
      %v1565 = vrot.slane %v1561, %v1564
      %v1566 = vmul.f32 %v407, %v1565
      %v1567 = vmul.f32 %v312, %v1565
      %v1568 = vmul.f32 %v408, %v1565
      %v1569 = vmul.f32 %v315, %v1565
      %v1570 = vmul.f32 %v409, %v1565
      %v1571 = vmul.f32 %v318, %v1565
      %v1572 = vmul.f32 %v410, %v1565
      %v1573 = vmul.f32 %v321, %v1565
      %v1574 = vmul.f32 %v411, %v1565
      %v1575 = vmul.f32 %v324, %v1565
      %v1576 = vmul.f32 %v412, %v1565
      %v1577 = vmul.f32 %v327, %v1565
      %v1578 = vmul.f32 %v413, %v1565
      %v1579 = vmul.f32 %v330, %v1565
      %v1580 = vmul.f32 %v414, %v1565
      %v1581 = vmul.f32 %v333, %v1565
      %v1582 = vmul.f32 %v415, %v1565
      %v1583 = vmul.f32 %v336, %v1565
      %v1584 = vmul.f32 %v416, %v1565
      %v1585 = vmul.f32 %v339, %v1565
      %v1586 = vmul.f32 %v417, %v1565
      %v1587 = vmul.f32 %v342, %v1565
      %v1588 = vmul.f32 %v418, %v1565
      %v1589 = vmul.f32 %v345, %v1565
      %v1590 = vmul.f32 %v419, %v1565
      %v1591 = vmul.f32 %v348, %v1565
      %v1592 = vmul.f32 %v420, %v1565
      %v1593 = vmul.f32 %v351, %v1565
      %v1594 = vmul.f32 %v421, %v1565
      %v1595 = vmul.f32 %v354, %v1565
      %v1596 = vmul.f32 %v405, %v1565
      %v1597 = vmul.f32 %v306, %v1565
      %v1598 = vadd.f32 %v1528, %v1566
      %v1599 = vadd.f32 %v1529, %v1567
      %v1600 = vadd.f32 %v1530, %v1568
      %v1601 = vadd.f32 %v1531, %v1569
      %v1602 = vadd.f32 %v1532, %v1570
      %v1603 = vadd.f32 %v1533, %v1571
      %v1604 = vadd.f32 %v1534, %v1572
      %v1605 = vadd.f32 %v1535, %v1573
      %v1606 = vadd.f32 %v1536, %v1574
      %v1607 = vadd.f32 %v1537, %v1575
      %v1608 = vadd.f32 %v1538, %v1576
      %v1609 = vadd.f32 %v1539, %v1577
      %v1610 = vadd.f32 %v1540, %v1578
      %v1611 = vadd.f32 %v1541, %v1579
      %v1612 = vadd.f32 %v1542, %v1580
      %v1613 = vadd.f32 %v1543, %v1581
      %v1614 = vadd.f32 %v1544, %v1582
      %v1615 = vadd.f32 %v1545, %v1583
      %v1616 = vadd.f32 %v1546, %v1584
      %v1617 = vadd.f32 %v1547, %v1585
      %v1618 = vadd.f32 %v1548, %v1586
      %v1619 = vadd.f32 %v1549, %v1587
      %v1620 = vadd.f32 %v1550, %v1588
      %v1621 = vadd.f32 %v1551, %v1589
      %v1622 = vadd.f32 %v1552, %v1590
      %v1623 = vadd.f32 %v1553, %v1591
      %v1624 = vadd.f32 %v1554, %v1592
      %v1625 = vadd.f32 %v1555, %v1593
      %v1626 = vadd.f32 %v1556, %v1594
      %v1627 = vadd.f32 %v1557, %v1595
      %v1628 = vadd.f32 %v1558, %v1596
      %v1629 = vadd.f32 %v1559, %v1597
      %v1630 = vld [vmem:[%s1560 + $0x1] sm:$0x1]
      %v1631 = vlaneseq
      %v1632 = vshrl.u32 %v1631, 7
      %v1633 = vsub.s32 0, %v1632
      %v1634 = vrot.slane %v1630, %v1633
      %v1635 = vmul.f32 %v407, %v1634
      %v1636 = vmul.f32 %v312, %v1634
      %v1637 = vmul.f32 %v424, %v1634
      %v1638 = vmul.f32 %v408, %v1634
      %v1639 = vmul.f32 %v315, %v1634
      %v1640 = vmul.f32 %v425, %v1634
      %v1641 = vmul.f32 %v409, %v1634
      %v1642 = vmul.f32 %v318, %v1634
      %v1643 = vmul.f32 %v426, %v1634
      %v1644 = vmul.f32 %v410, %v1634
      %v1645 = vmul.f32 %v321, %v1634
      %v1646 = vmul.f32 %v427, %v1634
      %v1647 = vmul.f32 %v411, %v1634
      %v1648 = vmul.f32 %v324, %v1634
      %v1649 = vmul.f32 %v428, %v1634
      %v1650 = vmul.f32 %v412, %v1634
      %v1651 = vmul.f32 %v327, %v1634
      %v1652 = vmul.f32 %v429, %v1634
      %v1653 = vmul.f32 %v413, %v1634
      %v1654 = vmul.f32 %v330, %v1634
      %v1655 = vmul.f32 %v430, %v1634
      %v1656 = vmul.f32 %v414, %v1634
      %v1657 = vmul.f32 %v333, %v1634
      %v1658 = vmul.f32 %v431, %v1634
      %v1659 = vmul.f32 %v415, %v1634
      %v1660 = vmul.f32 %v336, %v1634
      %v1661 = vmul.f32 %v432, %v1634
      %v1662 = vmul.f32 %v416, %v1634
      %v1663 = vmul.f32 %v339, %v1634
      %v1664 = vmul.f32 %v433, %v1634
      %v1665 = vmul.f32 %v417, %v1634
      %v1666 = vmul.f32 %v342, %v1634
      %v1667 = vmul.f32 %v434, %v1634
      %v1668 = vmul.f32 %v418, %v1634
      %v1669 = vmul.f32 %v345, %v1634
      %v1670 = vmul.f32 %v435, %v1634
      %v1671 = vmul.f32 %v419, %v1634
      %v1672 = vmul.f32 %v348, %v1634
      %v1673 = vmul.f32 %v436, %v1634
      %v1674 = vmul.f32 %v420, %v1634
      %v1675 = vmul.f32 %v351, %v1634
      %v1676 = vmul.f32 %v437, %v1634
      %v1677 = vmul.f32 %v421, %v1634
      %v1678 = vmul.f32 %v354, %v1634
      %v1679 = vmul.f32 %v438, %v1634
      %v1680 = vmul.f32 %v405, %v1634
      %v1681 = vmul.f32 %v306, %v1634
      %v1682 = vmul.f32 %v422, %v1634
      %v1731 = vrot.slane %v1635, 1
      %v1732 = vrot.slane %v1636, 1
      %v1733 = vsel %vm609, %v1731, %v1732
      %v1734 = vrot.slane %v1637, 1
      %v1735 = vsel %vm609, %v1732, %v1734
      %v1736 = vrot.slane %v1638, 1
      %v1737 = vrot.slane %v1639, 1
      %v1738 = vsel %vm609, %v1736, %v1737
      %v1739 = vrot.slane %v1640, 1
      %v1740 = vsel %vm609, %v1737, %v1739
      %v1741 = vrot.slane %v1641, 1
      %v1742 = vrot.slane %v1642, 1
      %v1743 = vsel %vm609, %v1741, %v1742
      %v1744 = vrot.slane %v1643, 1
      %v1745 = vsel %vm609, %v1742, %v1744
      %v1746 = vrot.slane %v1644, 1
      %v1747 = vrot.slane %v1645, 1
      %v1748 = vsel %vm609, %v1746, %v1747
      %v1749 = vrot.slane %v1646, 1
      %v1750 = vsel %vm609, %v1747, %v1749
      %v1751 = vrot.slane %v1647, 1
      %v1752 = vrot.slane %v1648, 1
      %v1753 = vsel %vm609, %v1751, %v1752
      %v1754 = vrot.slane %v1649, 1
      %v1755 = vsel %vm609, %v1752, %v1754
      %v1756 = vrot.slane %v1650, 1
      %v1757 = vrot.slane %v1651, 1
      %v1758 = vsel %vm609, %v1756, %v1757
      %v1759 = vrot.slane %v1652, 1
      %v1760 = vsel %vm609, %v1757, %v1759
      %v1761 = vrot.slane %v1653, 1
      %v1762 = vrot.slane %v1654, 1
      %v1763 = vsel %vm609, %v1761, %v1762
      %v1764 = vrot.slane %v1655, 1
      %v1765 = vsel %vm609, %v1762, %v1764
      %v1766 = vrot.slane %v1656, 1
      %v1767 = vrot.slane %v1657, 1
      %v1768 = vsel %vm609, %v1766, %v1767
      %v1769 = vrot.slane %v1658, 1
      %v1770 = vsel %vm609, %v1767, %v1769
      %v1771 = vrot.slane %v1659, 1
      %v1772 = vrot.slane %v1660, 1
      %v1773 = vsel %vm609, %v1771, %v1772
      %v1774 = vrot.slane %v1661, 1
      %v1775 = vsel %vm609, %v1772, %v1774
      %v1776 = vrot.slane %v1662, 1
      %v1777 = vrot.slane %v1663, 1
      %v1778 = vsel %vm609, %v1776, %v1777
      %v1779 = vrot.slane %v1664, 1
      %v1780 = vsel %vm609, %v1777, %v1779
      %v1781 = vrot.slane %v1665, 1
      %v1782 = vrot.slane %v1666, 1
      %v1783 = vsel %vm609, %v1781, %v1782
      %v1784 = vrot.slane %v1667, 1
      %v1785 = vsel %vm609, %v1782, %v1784
      %v1786 = vrot.slane %v1668, 1
      %v1787 = vrot.slane %v1669, 1
      %v1788 = vsel %vm609, %v1786, %v1787
      %v1789 = vrot.slane %v1670, 1
      %v1790 = vsel %vm609, %v1787, %v1789
      %v1791 = vrot.slane %v1671, 1
      %v1792 = vrot.slane %v1672, 1
      %v1793 = vsel %vm609, %v1791, %v1792
      %v1794 = vrot.slane %v1673, 1
      %v1795 = vsel %vm609, %v1792, %v1794
      %v1796 = vrot.slane %v1674, 1
      %v1797 = vrot.slane %v1675, 1
      %v1798 = vsel %vm609, %v1796, %v1797
      %v1799 = vrot.slane %v1676, 1
      %v1800 = vsel %vm609, %v1797, %v1799
      %v1801 = vrot.slane %v1677, 1
      %v1802 = vrot.slane %v1678, 1
      %v1803 = vsel %vm609, %v1801, %v1802
      %v1804 = vrot.slane %v1679, 1
      %v1805 = vsel %vm609, %v1802, %v1804
      %v1806 = vrot.slane %v1680, 1
      %v1807 = vrot.slane %v1681, 1
      %v1808 = vsel %vm609, %v1806, %v1807
      %v1809 = vrot.slane %v1682, 1
      %v1810 = vsel %vm609, %v1807, %v1809
      %v1843 = vadd.f32 %v1598, %v1733
      %v1844 = vadd.f32 %v1599, %v1735
      %v1845 = vadd.f32 %v1600, %v1738
      %v1846 = vadd.f32 %v1601, %v1740
      %v1847 = vadd.f32 %v1602, %v1743
      %v1848 = vadd.f32 %v1603, %v1745
      %v1849 = vadd.f32 %v1604, %v1748
      %v1850 = vadd.f32 %v1605, %v1750
      %v1851 = vadd.f32 %v1606, %v1753
      %v1852 = vadd.f32 %v1607, %v1755
      %v1853 = vadd.f32 %v1608, %v1758
      %v1854 = vadd.f32 %v1609, %v1760
      %v1855 = vadd.f32 %v1610, %v1763
      %v1856 = vadd.f32 %v1611, %v1765
      %v1857 = vadd.f32 %v1612, %v1768
      %v1858 = vadd.f32 %v1613, %v1770
      %v1859 = vadd.f32 %v1614, %v1773
      %v1860 = vadd.f32 %v1615, %v1775
      %v1861 = vadd.f32 %v1616, %v1778
      %v1862 = vadd.f32 %v1617, %v1780
      %v1863 = vadd.f32 %v1618, %v1783
      %v1864 = vadd.f32 %v1619, %v1785
      %v1865 = vadd.f32 %v1620, %v1788
      %v1866 = vadd.f32 %v1621, %v1790
      %v1867 = vadd.f32 %v1622, %v1793
      %v1868 = vadd.f32 %v1623, %v1795
      %v1869 = vadd.f32 %v1624, %v1798
      %v1870 = vadd.f32 %v1625, %v1800
      %v1871 = vadd.f32 %v1626, %v1803
      %v1872 = vadd.f32 %v1627, %v1805
      %v1873 = vadd.f32 %v1628, %v1808
      %v1874 = vadd.f32 %v1629, %v1810
      %v1875 = vld [vmem:[%s1560 + $0x2] sm:$0x1]
      %v1876 = vlaneseq
      %v1877 = vshrl.u32 %v1876, 7
      %v1878 = vsub.s32 0, %v1877
      %v1879 = vrot.slane %v1875, %v1878
      %v1880 = vmul.f32 %v407, %v1879
      %v1881 = vmul.f32 %v312, %v1879
      %v1882 = vmul.f32 %v424, %v1879
      %v1883 = vmul.f32 %v408, %v1879
      %v1884 = vmul.f32 %v315, %v1879
      %v1885 = vmul.f32 %v425, %v1879
      %v1886 = vmul.f32 %v409, %v1879
      %v1887 = vmul.f32 %v318, %v1879
      %v1888 = vmul.f32 %v426, %v1879
      %v1889 = vmul.f32 %v410, %v1879
      %v1890 = vmul.f32 %v321, %v1879
      %v1891 = vmul.f32 %v427, %v1879
      %v1892 = vmul.f32 %v411, %v1879
      %v1893 = vmul.f32 %v324, %v1879
      %v1894 = vmul.f32 %v428, %v1879
      %v1895 = vmul.f32 %v412, %v1879
      %v1896 = vmul.f32 %v327, %v1879
      %v1897 = vmul.f32 %v429, %v1879
      %v1898 = vmul.f32 %v413, %v1879
      %v1899 = vmul.f32 %v330, %v1879
      %v1900 = vmul.f32 %v430, %v1879
      %v1901 = vmul.f32 %v414, %v1879
      %v1902 = vmul.f32 %v333, %v1879
      %v1903 = vmul.f32 %v431, %v1879
      %v1904 = vmul.f32 %v415, %v1879
      %v1905 = vmul.f32 %v336, %v1879
      %v1906 = vmul.f32 %v432, %v1879
      %v1907 = vmul.f32 %v416, %v1879
      %v1908 = vmul.f32 %v339, %v1879
      %v1909 = vmul.f32 %v433, %v1879
      %v1910 = vmul.f32 %v417, %v1879
      %v1911 = vmul.f32 %v342, %v1879
      %v1912 = vmul.f32 %v434, %v1879
      %v1913 = vmul.f32 %v418, %v1879
      %v1914 = vmul.f32 %v345, %v1879
      %v1915 = vmul.f32 %v435, %v1879
      %v1916 = vmul.f32 %v419, %v1879
      %v1917 = vmul.f32 %v348, %v1879
      %v1918 = vmul.f32 %v436, %v1879
      %v1919 = vmul.f32 %v420, %v1879
      %v1920 = vmul.f32 %v351, %v1879
      %v1921 = vmul.f32 %v437, %v1879
      %v1922 = vmul.f32 %v421, %v1879
      %v1923 = vmul.f32 %v354, %v1879
      %v1924 = vmul.f32 %v438, %v1879
      %v1925 = vmul.f32 %v405, %v1879
      %v1926 = vmul.f32 %v306, %v1879
      %v1927 = vmul.f32 %v422, %v1879
      %v1976 = vrot.slane %v1880, 2
      %v1977 = vrot.slane %v1881, 2
      %v1978 = vsel %vm855, %v1976, %v1977
      %v1979 = vrot.slane %v1882, 2
      %v1980 = vsel %vm855, %v1977, %v1979
      %v1981 = vrot.slane %v1883, 2
      %v1982 = vrot.slane %v1884, 2
      %v1983 = vsel %vm855, %v1981, %v1982
      %v1984 = vrot.slane %v1885, 2
      %v1985 = vsel %vm855, %v1982, %v1984
      %v1986 = vrot.slane %v1886, 2
      %v1987 = vrot.slane %v1887, 2
      %v1988 = vsel %vm855, %v1986, %v1987
      %v1989 = vrot.slane %v1888, 2
      %v1990 = vsel %vm855, %v1987, %v1989
      %v1991 = vrot.slane %v1889, 2
      %v1992 = vrot.slane %v1890, 2
      %v1993 = vsel %vm855, %v1991, %v1992
      %v1994 = vrot.slane %v1891, 2
      %v1995 = vsel %vm855, %v1992, %v1994
      %v1996 = vrot.slane %v1892, 2
      %v1997 = vrot.slane %v1893, 2
      %v1998 = vsel %vm855, %v1996, %v1997
      %v1999 = vrot.slane %v1894, 2
      %v2000 = vsel %vm855, %v1997, %v1999
      %v2001 = vrot.slane %v1895, 2
      %v2002 = vrot.slane %v1896, 2
      %v2003 = vsel %vm855, %v2001, %v2002
      %v2004 = vrot.slane %v1897, 2
      %v2005 = vsel %vm855, %v2002, %v2004
      %v2006 = vrot.slane %v1898, 2
      %v2007 = vrot.slane %v1899, 2
      %v2008 = vsel %vm855, %v2006, %v2007
      %v2009 = vrot.slane %v1900, 2
      %v2010 = vsel %vm855, %v2007, %v2009
      %v2011 = vrot.slane %v1901, 2
      %v2012 = vrot.slane %v1902, 2
      %v2013 = vsel %vm855, %v2011, %v2012
      %v2014 = vrot.slane %v1903, 2
      %v2015 = vsel %vm855, %v2012, %v2014
      %v2016 = vrot.slane %v1904, 2
      %v2017 = vrot.slane %v1905, 2
      %v2018 = vsel %vm855, %v2016, %v2017
      %v2019 = vrot.slane %v1906, 2
      %v2020 = vsel %vm855, %v2017, %v2019
      %v2021 = vrot.slane %v1907, 2
      %v2022 = vrot.slane %v1908, 2
      %v2023 = vsel %vm855, %v2021, %v2022
      %v2024 = vrot.slane %v1909, 2
      %v2025 = vsel %vm855, %v2022, %v2024
      %v2026 = vrot.slane %v1910, 2
      %v2027 = vrot.slane %v1911, 2
      %v2028 = vsel %vm855, %v2026, %v2027
      %v2029 = vrot.slane %v1912, 2
      %v2030 = vsel %vm855, %v2027, %v2029
      %v2031 = vrot.slane %v1913, 2
      %v2032 = vrot.slane %v1914, 2
      %v2033 = vsel %vm855, %v2031, %v2032
      %v2034 = vrot.slane %v1915, 2
      %v2035 = vsel %vm855, %v2032, %v2034
      %v2036 = vrot.slane %v1916, 2
      %v2037 = vrot.slane %v1917, 2
      %v2038 = vsel %vm855, %v2036, %v2037
      %v2039 = vrot.slane %v1918, 2
      %v2040 = vsel %vm855, %v2037, %v2039
      %v2041 = vrot.slane %v1919, 2
      %v2042 = vrot.slane %v1920, 2
      %v2043 = vsel %vm855, %v2041, %v2042
      %v2044 = vrot.slane %v1921, 2
      %v2045 = vsel %vm855, %v2042, %v2044
      %v2046 = vrot.slane %v1922, 2
      %v2047 = vrot.slane %v1923, 2
      %v2048 = vsel %vm855, %v2046, %v2047
      %v2049 = vrot.slane %v1924, 2
      %v2050 = vsel %vm855, %v2047, %v2049
      %v2051 = vrot.slane %v1925, 2
      %v2052 = vrot.slane %v1926, 2
      %v2053 = vsel %vm855, %v2051, %v2052
      %v2054 = vrot.slane %v1927, 2
      %v2055 = vsel %vm855, %v2052, %v2054
      %v2088 = vadd.f32 %v1843, %v1978
      %v2089 = vadd.f32 %v1844, %v1980
      %v2090 = vadd.f32 %v1845, %v1983
      %v2091 = vadd.f32 %v1846, %v1985
      %v2092 = vadd.f32 %v1847, %v1988
      %v2093 = vadd.f32 %v1848, %v1990
      %v2094 = vadd.f32 %v1849, %v1993
      %v2095 = vadd.f32 %v1850, %v1995
      %v2096 = vadd.f32 %v1851, %v1998
      %v2097 = vadd.f32 %v1852, %v2000
      %v2098 = vadd.f32 %v1853, %v2003
      %v2099 = vadd.f32 %v1854, %v2005
      %v2100 = vadd.f32 %v1855, %v2008
      %v2101 = vadd.f32 %v1856, %v2010
      %v2102 = vadd.f32 %v1857, %v2013
      %v2103 = vadd.f32 %v1858, %v2015
      %v2104 = vadd.f32 %v1859, %v2018
      %v2105 = vadd.f32 %v1860, %v2020
      %v2106 = vadd.f32 %v1861, %v2023
      %v2107 = vadd.f32 %v1862, %v2025
      %v2108 = vadd.f32 %v1863, %v2028
      %v2109 = vadd.f32 %v1864, %v2030
      %v2110 = vadd.f32 %v1865, %v2033
      %v2111 = vadd.f32 %v1866, %v2035
      %v2112 = vadd.f32 %v1867, %v2038
      %v2113 = vadd.f32 %v1868, %v2040
      %v2114 = vadd.f32 %v1869, %v2043
      %v2115 = vadd.f32 %v1870, %v2045
      %v2116 = vadd.f32 %v1871, %v2048
      %v2117 = vadd.f32 %v1872, %v2050
      %v2118 = vadd.f32 %v1873, %v2053
      %v2119 = vadd.f32 %v1874, %v2055
      %v2120 = vld [vmem:[%s2] sm:$0x1]
      %v2122 = vlaneseq
      %v2123 = vshrl.u32 %v2122, 7
      %v2124 = vsub.s32 0, %v2123
      %v2125 = vrot.slane %v2120, %v2124
      %v2127 = vadd.f32 %v2088, %v2125
      %v2128 = vadd.f32 %v2089, %v2125
      %v2129 = vadd.f32 %v2090, %v2125
      %v2130 = vadd.f32 %v2091, %v2125
      %v2131 = vadd.f32 %v2092, %v2125
      %v2132 = vadd.f32 %v2093, %v2125
      %v2133 = vadd.f32 %v2094, %v2125
      %v2134 = vadd.f32 %v2095, %v2125
      %v2135 = vadd.f32 %v2096, %v2125
      %v2136 = vadd.f32 %v2097, %v2125
      %v2137 = vadd.f32 %v2098, %v2125
      %v2138 = vadd.f32 %v2099, %v2125
      %v2139 = vadd.f32 %v2100, %v2125
      %v2140 = vadd.f32 %v2101, %v2125
      %v2141 = vadd.f32 %v2102, %v2125
      %v2142 = vadd.f32 %v2103, %v2125
      %v2143 = vadd.f32 %v2104, %v2125
      %v2144 = vadd.f32 %v2105, %v2125
      %v2145 = vadd.f32 %v2106, %v2125
      %v2146 = vadd.f32 %v2107, %v2125
      %v2147 = vadd.f32 %v2108, %v2125
      %v2148 = vadd.f32 %v2109, %v2125
      %v2149 = vadd.f32 %v2110, %v2125
      %v2150 = vadd.f32 %v2111, %v2125
      %v2151 = vadd.f32 %v2112, %v2125
      %v2152 = vadd.f32 %v2113, %v2125
      %v2153 = vadd.f32 %v2114, %v2125
      %v2154 = vadd.f32 %v2115, %v2125
      %v2155 = vadd.f32 %v2116, %v2125
      %v2156 = vadd.f32 %v2117, %v2125
      %v2157 = vadd.f32 %v2118, %v2125
      %v2158 = vadd.f32 %v2119, %v2125
      %v2159 = vxor.u32 %v2127, 2147483648
      %v2160 = vxor.u32 %v2128, 2147483648
      %v2161 = vxor.u32 %v2129, 2147483648
      %v2162 = vxor.u32 %v2130, 2147483648
      %v2163 = vxor.u32 %v2131, 2147483648
      %v2164 = vxor.u32 %v2132, 2147483648
      %v2165 = vxor.u32 %v2133, 2147483648
      %v2166 = vxor.u32 %v2134, 2147483648
      %v2167 = vxor.u32 %v2135, 2147483648
      %v2168 = vxor.u32 %v2136, 2147483648
      %v2169 = vxor.u32 %v2137, 2147483648
      %v2170 = vxor.u32 %v2138, 2147483648
      %v2171 = vxor.u32 %v2139, 2147483648
      %v2172 = vxor.u32 %v2140, 2147483648
      %v2173 = vxor.u32 %v2141, 2147483648
      %v2174 = vxor.u32 %v2142, 2147483648
      %v2175 = vxor.u32 %v2143, 2147483648
      %v2176 = vxor.u32 %v2144, 2147483648
      %v2177 = vxor.u32 %v2145, 2147483648
      %v2178 = vxor.u32 %v2146, 2147483648
      %v2179 = vxor.u32 %v2147, 2147483648
      %v2180 = vxor.u32 %v2148, 2147483648
      %v2181 = vxor.u32 %v2149, 2147483648
      %v2182 = vxor.u32 %v2150, 2147483648
      %v2183 = vxor.u32 %v2151, 2147483648
      %v2184 = vxor.u32 %v2152, 2147483648
      %v2185 = vxor.u32 %v2153, 2147483648
      %v2186 = vxor.u32 %v2154, 2147483648
      %v2187 = vxor.u32 %v2155, 2147483648
      %v2188 = vxor.u32 %v2156, 2147483648
      %v2189 = vxor.u32 %v2157, 2147483648
      %v2190 = vxor.u32 %v2158, 2147483648
      %v2191 = vmul.f32 %v2159, 1.442695
      %v2192 = vpow.pop %v2191
      %v2193 = vmul.f32 %v2160, 1.442695
      %v2194 = vpow.pop %v2193
      %v2195 = vmul.f32 %v2161, 1.442695
      %v2196 = vpow.pop %v2195
      %v2197 = vmul.f32 %v2162, 1.442695
      %v2198 = vpow.pop %v2197
      %v2199 = vmul.f32 %v2163, 1.442695
      %v2200 = vpow.pop %v2199
      %v2201 = vmul.f32 %v2164, 1.442695
      %v2202 = vpow.pop %v2201
      %v2203 = vmul.f32 %v2165, 1.442695
      %v2204 = vpow.pop %v2203
      %v2205 = vmul.f32 %v2166, 1.442695
      %v2206 = vpow.pop %v2205
      %v2207 = vmul.f32 %v2167, 1.442695
      %v2208 = vpow.pop %v2207
      %v2209 = vmul.f32 %v2168, 1.442695
      %v2210 = vpow.pop %v2209
      %v2211 = vmul.f32 %v2169, 1.442695
      %v2212 = vpow.pop %v2211
      %v2213 = vmul.f32 %v2170, 1.442695
      %v2214 = vpow.pop %v2213
      %v2215 = vmul.f32 %v2171, 1.442695
      %v2216 = vpow.pop %v2215
      %v2217 = vmul.f32 %v2172, 1.442695
      %v2218 = vpow.pop %v2217
      %v2219 = vmul.f32 %v2173, 1.442695
      %v2220 = vpow.pop %v2219
      %v2221 = vmul.f32 %v2174, 1.442695
      %v2222 = vpow.pop %v2221
      %v2223 = vmul.f32 %v2175, 1.442695
      %v2224 = vpow.pop %v2223
      %v2225 = vmul.f32 %v2176, 1.442695
      %v2226 = vpow.pop %v2225
      %v2227 = vmul.f32 %v2177, 1.442695
      %v2228 = vpow.pop %v2227
      %v2229 = vmul.f32 %v2178, 1.442695
      %v2230 = vpow.pop %v2229
      %v2231 = vmul.f32 %v2179, 1.442695
      %v2232 = vpow.pop %v2231
      %v2233 = vmul.f32 %v2180, 1.442695
      %v2234 = vpow.pop %v2233
      %v2235 = vmul.f32 %v2181, 1.442695
      %v2236 = vpow.pop %v2235
      %v2237 = vmul.f32 %v2182, 1.442695
      %v2238 = vpow.pop %v2237
      %v2239 = vmul.f32 %v2183, 1.442695
      %v2240 = vpow.pop %v2239
      %v2241 = vmul.f32 %v2184, 1.442695
      %v2242 = vpow.pop %v2241
      %v2243 = vmul.f32 %v2185, 1.442695
      %v2244 = vpow.pop %v2243
      %v2245 = vmul.f32 %v2186, 1.442695
      %v2246 = vpow.pop %v2245
      %v2247 = vmul.f32 %v2187, 1.442695
      %v2248 = vpow.pop %v2247
      %v2249 = vmul.f32 %v2188, 1.442695
      %v2250 = vpow.pop %v2249
      %v2251 = vmul.f32 %v2189, 1.442695
      %v2252 = vpow.pop %v2251
      %v2253 = vmul.f32 %v2190, 1.442695
      %v2254 = vpow.pop %v2253
      %v2255 = vadd.f32 %v2192, 1.0
      %v2256 = vadd.f32 %v2194, 1.0
      %v2257 = vadd.f32 %v2196, 1.0
      %v2258 = vadd.f32 %v2198, 1.0
      %v2259 = vadd.f32 %v2200, 1.0
      %v2260 = vadd.f32 %v2202, 1.0
      %v2261 = vadd.f32 %v2204, 1.0
      %v2262 = vadd.f32 %v2206, 1.0
      %v2263 = vadd.f32 %v2208, 1.0
      %v2264 = vadd.f32 %v2210, 1.0
      %v2265 = vadd.f32 %v2212, 1.0
      %v2266 = vadd.f32 %v2214, 1.0
      %v2267 = vadd.f32 %v2216, 1.0
      %v2268 = vadd.f32 %v2218, 1.0
      %v2269 = vadd.f32 %v2220, 1.0
      %v2270 = vadd.f32 %v2222, 1.0
      %v2271 = vadd.f32 %v2224, 1.0
      %v2272 = vadd.f32 %v2226, 1.0
      %v2273 = vadd.f32 %v2228, 1.0
      %v2274 = vadd.f32 %v2230, 1.0
      %v2275 = vadd.f32 %v2232, 1.0
      %v2276 = vadd.f32 %v2234, 1.0
      %v2277 = vadd.f32 %v2236, 1.0
      %v2278 = vadd.f32 %v2238, 1.0
      %v2279 = vadd.f32 %v2240, 1.0
      %v2280 = vadd.f32 %v2242, 1.0
      %v2281 = vadd.f32 %v2244, 1.0
      %v2282 = vadd.f32 %v2246, 1.0
      %v2283 = vadd.f32 %v2248, 1.0
      %v2284 = vadd.f32 %v2250, 1.0
      %v2285 = vadd.f32 %v2252, 1.0
      %v2286 = vadd.f32 %v2254, 1.0
      %v2287 = vrcp.pop %v2255
      %v2288 = vmul.f32 1.0, %v2287
      %v2289 = vrcp.pop %v2256
      %v2290 = vmul.f32 1.0, %v2289
      %v2291 = vrcp.pop %v2257
      %v2292 = vmul.f32 1.0, %v2291
      %v2293 = vrcp.pop %v2258
      %v2294 = vmul.f32 1.0, %v2293
      %v2295 = vrcp.pop %v2259
      %v2296 = vmul.f32 1.0, %v2295
      %v2297 = vrcp.pop %v2260
      %v2298 = vmul.f32 1.0, %v2297
      %v2299 = vrcp.pop %v2261
      %v2300 = vmul.f32 1.0, %v2299
      %v2301 = vrcp.pop %v2262
      %v2302 = vmul.f32 1.0, %v2301
      %v2303 = vrcp.pop %v2263
      %v2304 = vmul.f32 1.0, %v2303
      %v2305 = vrcp.pop %v2264
      %v2306 = vmul.f32 1.0, %v2305
      %v2307 = vrcp.pop %v2265
      %v2308 = vmul.f32 1.0, %v2307
      %v2309 = vrcp.pop %v2266
      %v2310 = vmul.f32 1.0, %v2309
      %v2311 = vrcp.pop %v2267
      %v2312 = vmul.f32 1.0, %v2311
      %v2313 = vrcp.pop %v2268
      %v2314 = vmul.f32 1.0, %v2313
      %v2315 = vrcp.pop %v2269
      %v2316 = vmul.f32 1.0, %v2315
      %v2317 = vrcp.pop %v2270
      %v2318 = vmul.f32 1.0, %v2317
      %v2319 = vrcp.pop %v2271
      %v2320 = vmul.f32 1.0, %v2319
      %v2321 = vrcp.pop %v2272
      %v2322 = vmul.f32 1.0, %v2321
      %v2323 = vrcp.pop %v2273
      %v2324 = vmul.f32 1.0, %v2323
      %v2325 = vrcp.pop %v2274
      %v2326 = vmul.f32 1.0, %v2325
      %v2327 = vrcp.pop %v2275
      %v2328 = vmul.f32 1.0, %v2327
      %v2329 = vrcp.pop %v2276
      %v2330 = vmul.f32 1.0, %v2329
      %v2331 = vrcp.pop %v2277
      %v2332 = vmul.f32 1.0, %v2331
      %v2333 = vrcp.pop %v2278
      %v2334 = vmul.f32 1.0, %v2333
      %v2335 = vrcp.pop %v2279
      %v2336 = vmul.f32 1.0, %v2335
      %v2337 = vrcp.pop %v2280
      %v2338 = vmul.f32 1.0, %v2337
      %v2339 = vrcp.pop %v2281
      %v2340 = vmul.f32 1.0, %v2339
      %v2341 = vrcp.pop %v2282
      %v2342 = vmul.f32 1.0, %v2341
      %v2343 = vrcp.pop %v2283
      %v2344 = vmul.f32 1.0, %v2343
      %v2345 = vrcp.pop %v2284
      %v2346 = vmul.f32 1.0, %v2345
      %v2347 = vrcp.pop %v2285
      %v2348 = vmul.f32 1.0, %v2347
      %v2349 = vrcp.pop %v2286
      %v2350 = vmul.f32 1.0, %v2349
      %v2351 = vmul.f32 %v2127, %v2288
      %v2352 = vmul.f32 %v2128, %v2290
      %v2353 = vmul.f32 %v2129, %v2292
      %v2354 = vmul.f32 %v2130, %v2294
      %v2355 = vmul.f32 %v2131, %v2296
      %v2356 = vmul.f32 %v2132, %v2298
      %v2357 = vmul.f32 %v2133, %v2300
      %v2358 = vmul.f32 %v2134, %v2302
      %v2359 = vmul.f32 %v2135, %v2304
      %v2360 = vmul.f32 %v2136, %v2306
      %v2361 = vmul.f32 %v2137, %v2308
      %v2362 = vmul.f32 %v2138, %v2310
      %v2363 = vmul.f32 %v2139, %v2312
      %v2364 = vmul.f32 %v2140, %v2314
      %v2365 = vmul.f32 %v2141, %v2316
      %v2366 = vmul.f32 %v2142, %v2318
      %v2367 = vmul.f32 %v2143, %v2320
      %v2368 = vmul.f32 %v2144, %v2322
      %v2369 = vmul.f32 %v2145, %v2324
      %v2370 = vmul.f32 %v2146, %v2326
      %v2371 = vmul.f32 %v2147, %v2328
      %v2372 = vmul.f32 %v2148, %v2330
      %v2373 = vmul.f32 %v2149, %v2332
      %v2374 = vmul.f32 %v2150, %v2334
      %v2375 = vmul.f32 %v2151, %v2336
      %v2376 = vmul.f32 %v2152, %v2338
      %v2377 = vmul.f32 %v2153, %v2340
      %v2378 = vmul.f32 %v2154, %v2342
      %v2379 = vmul.f32 %v2155, %v2344
      %v2380 = vmul.f32 %v2156, %v2346
      %v2381 = vmul.f32 %v2157, %v2348
      %v2382 = vmul.f32 %v2158, %v2350
      %v2383 = vpack.c.bf16 %v2352, %v2351
      %v2384 = vpack.c.bf16 %v2354, %v2353
      %v2385 = vpack.c.bf16 %v2356, %v2355
      %v2386 = vpack.c.bf16 %v2358, %v2357
      %v2387 = vpack.c.bf16 %v2360, %v2359
      %v2388 = vpack.c.bf16 %v2362, %v2361
      %v2389 = vpack.c.bf16 %v2364, %v2363
      %v2390 = vpack.c.bf16 %v2366, %v2365
      %v2391 = vpack.c.bf16 %v2368, %v2367
      %v2392 = vpack.c.bf16 %v2370, %v2369
      %v2393 = vpack.c.bf16 %v2372, %v2371
      %v2394 = vpack.c.bf16 %v2374, %v2373
      %v2395 = vpack.c.bf16 %v2376, %v2375
      %v2396 = vpack.c.bf16 %v2378, %v2377
      %v2397 = vpack.c.bf16 %v2380, %v2379
      %v2398 = vpack.c.bf16 %v2382, %v2381
      %v2415 = vunpack.c.l.b16 %v2383
      %v2416 = vunpack.c.h.b16 %v2383
      %v2417 = vunpack.c.l.b16 %v2384
      %v2418 = vunpack.c.h.b16 %v2384
      %v2419 = vunpack.c.l.b16 %v2385
      %v2420 = vunpack.c.h.b16 %v2385
      %v2421 = vunpack.c.l.b16 %v2386
      %v2422 = vunpack.c.h.b16 %v2386
      %v2423 = vunpack.c.l.b16 %v2387
      %v2424 = vunpack.c.h.b16 %v2387
      %v2425 = vunpack.c.l.b16 %v2388
      %v2426 = vunpack.c.h.b16 %v2388
      %v2427 = vunpack.c.l.b16 %v2389
      %v2428 = vunpack.c.h.b16 %v2389
      %v2429 = vunpack.c.l.b16 %v2390
      %v2430 = vunpack.c.h.b16 %v2390
      %v2431 = vunpack.c.l.b16 %v2391
      %v2432 = vunpack.c.h.b16 %v2391
      %v2433 = vunpack.c.l.b16 %v2392
      %v2434 = vunpack.c.h.b16 %v2392
      %v2435 = vunpack.c.l.b16 %v2393
      %v2436 = vunpack.c.h.b16 %v2393
      %v2437 = vunpack.c.l.b16 %v2394
      %v2438 = vunpack.c.h.b16 %v2394
      %v2439 = vunpack.c.l.b16 %v2395
      %v2440 = vunpack.c.h.b16 %v2395
      %v2441 = vunpack.c.l.b16 %v2396
      %v2442 = vunpack.c.h.b16 %v2396
      %v2443 = vunpack.c.l.b16 %v2397
      %v2444 = vunpack.c.h.b16 %v2397
      %v2445 = vunpack.c.l.b16 %v2398
      %v2446 = vunpack.c.h.b16 %v2398
      %v2447 = vpack.c.b16 %v2415, %v2415
      %v2448 = vpack.c.b16 %v2416, %v2416
      %v2449 = vpack.c.b16 %v2417, %v2417
      %v2450 = vpack.c.b16 %v2418, %v2418
      %v2451 = vpack.c.b16 %v2419, %v2419
      %v2452 = vpack.c.b16 %v2420, %v2420
      %v2453 = vpack.c.b16 %v2421, %v2421
      %v2454 = vpack.c.b16 %v2422, %v2422
      %v2455 = vpack.c.b16 %v2423, %v2423
      %v2456 = vpack.c.b16 %v2424, %v2424
      %v2457 = vpack.c.b16 %v2425, %v2425
      %v2458 = vpack.c.b16 %v2426, %v2426
      %v2459 = vpack.c.b16 %v2427, %v2427
      %v2460 = vpack.c.b16 %v2428, %v2428
      %v2461 = vpack.c.b16 %v2429, %v2429
      %v2462 = vpack.c.b16 %v2430, %v2430
      %v2463 = vpack.c.b16 %v2431, %v2431
      %v2464 = vpack.c.b16 %v2432, %v2432
      %v2465 = vpack.c.b16 %v2433, %v2433
      %v2466 = vpack.c.b16 %v2434, %v2434
      %v2467 = vpack.c.b16 %v2435, %v2435
      %v2468 = vpack.c.b16 %v2436, %v2436
      %v2469 = vpack.c.b16 %v2437, %v2437
      %v2470 = vpack.c.b16 %v2438, %v2438
      %v2471 = vpack.c.b16 %v2439, %v2439
      %v2472 = vpack.c.b16 %v2440, %v2440
      %v2473 = vpack.c.b16 %v2441, %v2441
      %v2474 = vpack.c.b16 %v2442, %v2442
      %v2475 = vpack.c.b16 %v2443, %v2443
      %v2476 = vpack.c.b16 %v2444, %v2444
      %v2477 = vpack.c.b16 %v2445, %v2445
      %v2478 = vpack.c.b16 %v2446, %v2446
      %vm2511 = vcmask 257024
      %2512 = vst.msk [vmem:[%s203] sm:$0xf] %vm2511, %v2447
      %2513 = vst.msk [vmem:[%s203 + $0x4] sm:$0xf] %vm2511, %v2448
      %2514 = vst.msk [vmem:[%s203 + $0x8] sm:$0xf] %vm2511, %v2449
      %2515 = vst.msk [vmem:[%s203 + $0xc] sm:$0xf] %vm2511, %v2450
      %2516 = vst.msk [vmem:[%s203 + $0x10] sm:$0xf] %vm2511, %v2451
      %2517 = vst.msk [vmem:[%s203 + $0x14] sm:$0xf] %vm2511, %v2452
      %2518 = vst.msk [vmem:[%s203 + $0x18] sm:$0xf] %vm2511, %v2453
      %2519 = vst.msk [vmem:[%s203 + $0x1c] sm:$0xf] %vm2511, %v2454
      %2520 = vst.msk [vmem:[%s203 + $0x20] sm:$0xf] %vm2511, %v2455
      %2521 = vst.msk [vmem:[%s203 + $0x24] sm:$0xf] %vm2511, %v2456
      %2522 = vst.msk [vmem:[%s203 + $0x28] sm:$0xf] %vm2511, %v2457
      %2523 = vst.msk [vmem:[%s203 + $0x2c] sm:$0xf] %vm2511, %v2458
      %2524 = vst.msk [vmem:[%s203 + $0x30] sm:$0xf] %vm2511, %v2459
      %2525 = vst.msk [vmem:[%s203 + $0x34] sm:$0xf] %vm2511, %v2460
      %2526 = vst.msk [vmem:[%s203 + $0x38] sm:$0xf] %vm2511, %v2461
      %2527 = vst.msk [vmem:[%s203 + $0x3c] sm:$0xf] %vm2511, %v2462
      %2528 = vst.msk [vmem:[%s203 + $0x40] sm:$0xf] %vm2511, %v2463
      %2529 = vst.msk [vmem:[%s203 + $0x44] sm:$0xf] %vm2511, %v2464
      %2530 = vst.msk [vmem:[%s203 + $0x48] sm:$0xf] %vm2511, %v2465
      %2531 = vst.msk [vmem:[%s203 + $0x4c] sm:$0xf] %vm2511, %v2466
      %2532 = vst.msk [vmem:[%s203 + $0x50] sm:$0xf] %vm2511, %v2467
      %2533 = vst.msk [vmem:[%s203 + $0x54] sm:$0xf] %vm2511, %v2468
      %2534 = vst.msk [vmem:[%s203 + $0x58] sm:$0xf] %vm2511, %v2469
      %2535 = vst.msk [vmem:[%s203 + $0x5c] sm:$0xf] %vm2511, %v2470
      %2536 = vst.msk [vmem:[%s203 + $0x60] sm:$0xf] %vm2511, %v2471
      %2537 = vst.msk [vmem:[%s203 + $0x64] sm:$0xf] %vm2511, %v2472
      %2538 = vst.msk [vmem:[%s203 + $0x68] sm:$0xf] %vm2511, %v2473
      %2539 = vst.msk [vmem:[%s203 + $0x6c] sm:$0xf] %vm2511, %v2474
      %2540 = vst.msk [vmem:[%s203 + $0x70] sm:$0xf] %vm2511, %v2475
      %2541 = vst.msk [vmem:[%s203 + $0x74] sm:$0xf] %vm2511, %v2476
      %2542 = vst.msk [vmem:[%s203 + $0x78] sm:$0xf] %vm2511, %v2477
      %2543 = vst.msk [vmem:[%s203 + $0x7c] sm:$0xf] %vm2511, %v2478
      %vm2544 = vcmask 261120
      %v2545 = vsel %vm2544, %v2351, 0.0
      %v2546 = vsel %vm2544, %v2353, 0.0
      %v2547 = vadd.f32 %v2545, %v2546
      %v2548 = vsel %vm2544, %v2355, 0.0
      %v2549 = vadd.f32 %v2547, %v2548
      %v2550 = vsel %vm2544, %v2357, 0.0
      %v2551 = vadd.f32 %v2549, %v2550
      %v2552 = vsel %vm2544, %v2359, 0.0
      %v2553 = vadd.f32 %v2551, %v2552
      %v2554 = vsel %vm2544, %v2361, 0.0
      %v2555 = vadd.f32 %v2553, %v2554
      %v2556 = vsel %vm2544, %v2363, 0.0
      %v2557 = vadd.f32 %v2555, %v2556
      %v2558 = vsel %vm2544, %v2365, 0.0
      %v2559 = vadd.f32 %v2557, %v2558
      %v2560 = vsel %vm2544, %v2367, 0.0
      %v2561 = vadd.f32 %v2559, %v2560
      %v2562 = vsel %vm2544, %v2369, 0.0
      %v2563 = vadd.f32 %v2561, %v2562
      %v2564 = vsel %vm2544, %v2371, 0.0
      %v2565 = vadd.f32 %v2563, %v2564
      %v2566 = vsel %vm2544, %v2373, 0.0
      %v2567 = vadd.f32 %v2565, %v2566
      %v2568 = vsel %vm2544, %v2375, 0.0
      %v2569 = vadd.f32 %v2567, %v2568
      %v2570 = vsel %vm2544, %v2377, 0.0
      %v2571 = vadd.f32 %v2569, %v2570
      %v2572 = vsel %vm2544, %v2379, 0.0
      %v2573 = vadd.f32 %v2571, %v2572
      %v2574 = vsel %vm2544, %v2381, 0.0
      %v2575 = vadd.f32 %v2573, %v2574
      %v2576 = vsel %vm2544, %v2352, 0.0
      %v2577 = vsel %vm2544, %v2354, 0.0
      %v2578 = vadd.f32 %v2576, %v2577
      %v2579 = vsel %vm2544, %v2356, 0.0
      %v2580 = vadd.f32 %v2578, %v2579
      %v2581 = vsel %vm2544, %v2358, 0.0
      %v2582 = vadd.f32 %v2580, %v2581
      %v2583 = vsel %vm2544, %v2360, 0.0
      %v2584 = vadd.f32 %v2582, %v2583
      %v2585 = vsel %vm2544, %v2362, 0.0
      %v2586 = vadd.f32 %v2584, %v2585
      %v2587 = vsel %vm2544, %v2364, 0.0
      %v2588 = vadd.f32 %v2586, %v2587
      %v2589 = vsel %vm2544, %v2366, 0.0
      %v2590 = vadd.f32 %v2588, %v2589
      %v2591 = vsel %vm2544, %v2368, 0.0
      %v2592 = vadd.f32 %v2590, %v2591
      %v2593 = vsel %vm2544, %v2370, 0.0
      %v2594 = vadd.f32 %v2592, %v2593
      %v2595 = vsel %vm2544, %v2372, 0.0
      %v2596 = vadd.f32 %v2594, %v2595
      %v2597 = vsel %vm2544, %v2374, 0.0
      %v2598 = vadd.f32 %v2596, %v2597
      %v2599 = vsel %vm2544, %v2376, 0.0
      %v2600 = vadd.f32 %v2598, %v2599
      %v2601 = vsel %vm2544, %v2378, 0.0
      %v2602 = vadd.f32 %v2600, %v2601
      %v2603 = vsel %vm2544, %v2380, 0.0
      %v2604 = vadd.f32 %v2602, %v2603
      %v2605 = vsel %vm2544, %v2382, 0.0
      %v2606 = vadd.f32 %v2604, %v2605
      %v2607 = vsel %vm2544, %v2575, 0.0
      %v2608 = vsel %vm2544, %v2606, 0.0
      %v2609 = vadd.f32 %v2607, %v2608
      %v2610 = vrot.slane %v2609, 4
      %v2611 = vadd.f32 %v2609, %v2610
      %v2612 = vrot.slane %v2611, 2
      %v2613 = vadd.f32 %v2611, %v2612
      %v2614 = vrot.slane %v2613, 1
      %v2615 = vadd.f32 %v2613, %v2614
      %v2616 = vmul.f32 %v2615, 0.00390625
      %vm2617 = vcmask 253952
      %2618 = vst.msk [vmem:[%s206] sm:$0x1] %vm2617, %v2616
      %p2619 = scmp.lt.s32.totalorder %s16, 1
      %s2620 = scalar_select %p2619, %s16, 1
      %s2621 = smul.addr %s2620, 32
      %s2622 = smul.addr %s2621, 4
      %s2623 = scalar_lea.vmem %s3, %s2622
      %p2624 = scmp.lt.s32.totalorder %s16, 1
      %s2625 = scalar_select %p2624, %s16, 1
      %s2626 = scalar_lea.vmem %s4, %s2625
      // Predicated region
      $region33: #{mbconv_block.4} parent=31 // pred_check
        %p2627 = pneg %p102
      $region34: #{mbconv_block.4} parent=31 // pred_check_branch
        %2629 = sbr.rel (%p2627) target = $region36
      $region35: #{mbconv_block.4} parent=31 // pred_region
        _
      $region36: #{mbconv_block.4} parent=31 // pred_fallthru
        _
      // Predicated region
      $region37: #{mbconv_block.4} parent=31 // pred_check
        %p2630 = pneg %p128
      $region38: #{mbconv_block.4} parent=31 // pred_check_branch
        %2632 = sbr.rel (%p2630) target = $region40
      $region39: #{mbconv_block.4} parent=31 // pred_region
        _
      $region40: #{mbconv_block.4} parent=31 // pred_fallthru
        _
    $region32: #{mbconv_block.4} parent=5 // pred_fallthru
      _
    %p2633 = scmp.le.s32.totalorder 2, %s11
    // Predicated region
    $region41: #{mbconv_block.4} parent=5 // pred_check
      %p2634 = pneg %p2633
    $region42: #{mbconv_block.4} parent=5 // pred_check_branch
      %2636 = sbr.rel (%p2634) target = $region44
    $region43: #{mbconv_block.4} parent=5 // pred_region
      %s2637 = ssub.s32 %s11, 2
      // Predicated region
      $region45: #{mbconv_block.4} parent=43 // pred_check
        %p2638 = pneg %p108
      $region46: #{mbconv_block.4} parent=43 // pred_check_branch
        %2640 = sbr.rel (%p2638) target = $region48
      $region47: #{mbconv_block.4} parent=43 // pred_region
        %p2641 = scmp.lt.s32.totalorder %s17, 1
        %s2642 = scalar_select %p2641, %s17, 1
        %s2643 = smul.addr %s2642, 32
        %s2644 = smul.addr %s2643, 4
        %s2645 = scalar_lea.vmem %s3, %s2644
      $region48: #{mbconv_block.4} parent=43 // pred_fallthru
        _
      // Predicated region
      $region49: #{mbconv_block.4} parent=43 // pred_check
        %p2646 = pneg %p134
      $region50: #{mbconv_block.4} parent=43 // pred_check_branch
        %2648 = sbr.rel (%p2646) target = $region52
      $region51: #{mbconv_block.4} parent=43 // pred_region
        %p2649 = scmp.lt.s32.totalorder %s17, 1
        %s2650 = scalar_select %p2649, %s17, 1
        %s2651 = scalar_lea.vmem %s4, %s2650
      $region52: #{mbconv_block.4} parent=43 // pred_fallthru
        _
    $region44: #{mbconv_block.4} parent=5 // pred_fallthru
      _
  $region6: #{mbconv_block.4} parent=0 // loop_footer
    %s15 = sadd.s32 1, %s11
  $region7: #{mbconv_block.4} parent=0 // loop_footer_branch
    %10 = sbr.rel target = $region3
  $region8: #{mbconv_block.4} parent=0 // loop_exit
    _

</llo_original>
